<compile_context>
chip_gen: v6e
topology: v6e:2x2x1
jax: 0.10.0
libtpu: 0.0.40
codegen_flags: <defaults>
</compile_context>

<pallas_src>
import jax
import jax.numpy as jnp
from jax.experimental import pallas as pl
from jax.experimental.pallas import tpu as pltpu

# ----------------------------- model config (small) -------------------------
BATCH = 2
CHANNELS = 3
IMAGE = 32
PATCH = 8
NUM_PATCHES = (IMAGE // PATCH) ** 2          # 16
SEQ = NUM_PATCHES + 1                        # 17 (CLS + patches)
SEQ_PAD = 24                                 # padded to a multiple of 8
HIDDEN = 32
NUM_HEADS = 4
HEAD_DIM = HIDDEN // NUM_HEADS               # 8
INTERMEDIATE = 64
NUM_LAYERS = 2
PROJ_DIM = 16
LN_EPS = 1e-5
PATCH_DIM = CHANNELS * PATCH * PATCH         # 192
ATTN_SCALE = float(HEAD_DIM) ** -0.5
NEG_INF = -1e30


# ------------------------------- fused kernel --------------------------------
def _layernorm(x, g, b):
    mean = jnp.mean(x, axis=-1, keepdims=True)
    var = jnp.mean((x - mean) ** 2, axis=-1, keepdims=True)
    return (x - mean) * jax.lax.rsqrt(var + LN_EPS) * g + b


def _clip_fwd_kernel(patches_ref, emb_ref, patch_w_ref, norms_ref, proj_w_ref,
                     ln_ref, qkv_w_ref, qkv_b_ref, ow_ref, ob_ref,
                     fc1w_ref, fc1b_ref, fc2w_ref, fc2b_ref,
                     out_ref, buf_ref):
    f32 = jnp.float32

    # ---- patch-embed conv (stride == kernel, no bias) as a matmul ----
    patches = patches_ref[0]                                          # (NP, CPP)
    pe = jnp.dot(patches, patch_w_ref[...], preferred_element_type=f32)  # (NP, H)

    # rows: [patch_0..patch_15 | CLS | zero-pad x7]; emb already holds the
    # matching (permuted) positional embeddings (+class emb at row NP).
    buf_ref[0:NUM_PATCHES, :] = emb_ref[0:NUM_PATCHES, :] + pe
    buf_ref[NUM_PATCHES:SEQ_PAD, :] = emb_ref[NUM_PATCHES:SEQ_PAD, :]
    x = buf_ref[...]                                                  # (SP, H)

    # pre-layernorm
    nrm = norms_ref[...]                                              # (4, H)
    x = _layernorm(x, nrm[0:1, :], nrm[1:2, :])

    # additive key mask: padded key columns get -inf before softmax
    kidx = jax.lax.broadcasted_iota(jnp.int32, (SEQ_PAD, SEQ_PAD), 1)
    attn_bias = jnp.where(kidx < SEQ, 0.0, NEG_INF).astype(f32)

    for l in range(NUM_LAYERS):
        lnp = ln_ref[l]                                               # (4, H)

        # --- self-attention block: fused LN + QKV matmul + MHA + o-proj ---
        res = x
        xn = _layernorm(x, lnp[0:1, :], lnp[1:2, :])
        qkv = jnp.dot(xn, qkv_w_ref[l], preferred_element_type=f32) + qkv_b_ref[l]
        for h in range(NUM_HEADS):
            q = qkv[:, h * HEAD_DIM:(h + 1) * HEAD_DIM]
            k = qkv[:, HIDDEN + h * HEAD_DIM:HIDDEN + (h + 1) * HEAD_DIM]
            v = qkv[:, 2 * HIDDEN + h * HEAD_DIM:2 * HIDDEN + (h + 1) * HEAD_DIM]
            s = jax.lax.dot_general(q, k, (((1,), (1,)), ((), ())),
                                    preferred_element_type=f32) * ATTN_SCALE
            s = s + attn_bias
            s = s - jnp.max(s, axis=-1, keepdims=True)
            p = jnp.exp(s)
            p = p * pl.reciprocal(jnp.sum(p, axis=-1, keepdims=True), approx=True)
            buf_ref[:, h * HEAD_DIM:(h + 1) * HEAD_DIM] = jnp.dot(
                p, v, preferred_element_type=f32)
        attn = jnp.dot(buf_ref[...], ow_ref[l],
                       preferred_element_type=f32) + ob_ref[l]
        x = res + attn

        # --- MLP block: fused LN + FC1 + quick_gelu + FC2 + residual ---
        res = x
        xn = _layernorm(x, lnp[2:3, :], lnp[3:4, :])
        h1 = jnp.dot(xn, fc1w_ref[l], preferred_element_type=f32) + fc1b_ref[l]
        h1 = h1 * jax.nn.sigmoid(1.702 * h1)                 # quick_gelu
        h2 = jnp.dot(h1, fc2w_ref[l], preferred_element_type=f32) + fc2b_ref[l]
        x = res + h2

    # pooled CLS token (row NP in our permuted layout) -> post-LN -> projection
    pooled = x[NUM_PATCHES:NUM_PATCHES + 1, :]                        # (1, H)
    pooled = _layernorm(pooled, nrm[2:3, :], nrm[3:4, :])
    out_ref[0] = jnp.dot(pooled, proj_w_ref[...], preferred_element_type=f32)


# ------------------------------- model forward --------------------------------
def clip_image_features(pixel_values, params):
    """pixel_values: (B, C, H, W) NCHW float32 -> (B, PROJ_DIM) image features."""
    B, C, H, W = pixel_values.shape
    nh, nw = H // PATCH, W // PATCH

    # extract non-overlapping patches, flattened in (C, ph, pw) order to match
    # the flattened PyTorch conv weight layout.
    patches = (pixel_values
               .reshape(B, C, nh, PATCH, nw, PATCH)
               .transpose(0, 2, 4, 1, 3, 5)              # (B, nh, nw, C, ph, pw)
               .reshape(B, nh * nw, C * PATCH * PATCH))  # (B, NP, CPP)

    # additive embedding table, rows permuted [pos_1..pos_16 | class+pos_0 | 0-pad]
    cls_row = (params['class_emb'] + params['pos_emb'][0])[None, :]
    emb = jnp.concatenate(
        [params['pos_emb'][1:], cls_row,
         jnp.zeros((SEQ_PAD - SEQ, HIDDEN), jnp.float32)], axis=0)   # (SP, H)

    weights = [
        params['patch_w'],                  # (CPP, H)
        params['norms'],                    # (4, H): pre_g, pre_b, post_g, post_b
        params['proj_w'],                   # (H, PROJ)
        params['ln'],                       # (L, 4, H): ln1_g, ln1_b, ln2_g, ln2_b
        params['qkv_w'], params['qkv_b'],   # (L, H, 3H), (L, 1, 3H)
        params['o_w'], params['o_b'],       # (L, H, H),  (L, 1, H)
        params['fc1_w'], params['fc1_b'],   # (L, H, I),  (L, 1, I)
        params['fc2_w'], params['fc2_b'],   # (L, I, H),  (L, 1, H)
    ]

    in_specs = [
        pl.BlockSpec((1, NUM_PATCHES, PATCH_DIM), lambda b: (b, 0, 0)),
        pl.BlockSpec((SEQ_PAD, HIDDEN), lambda b: (0, 0)),
    ]
    for w in weights:
        zeros = (0,) * w.ndim
        in_specs.append(pl.BlockSpec(w.shape, lambda b, _z=zeros: _z))

    feats = pl.pallas_call(
        _clip_fwd_kernel,
        out_shape=jax.ShapeDtypeStruct((B, 1, PROJ_DIM), jnp.float32),
        grid_spec=pltpu.PrefetchScalarGridSpec(
            num_scalar_prefetch=0,
            grid=(B,),
            in_specs=in_specs,
            out_specs=pl.BlockSpec((1, 1, PROJ_DIM), lambda b: (b, 0, 0)),
            scratch_shapes=[pltpu.VMEM((SEQ_PAD, HIDDEN), jnp.float32)]),
        compiler_params=pltpu.CompilerParams(
            dimension_semantics=("parallel",)),
    )(patches, emb, *weights)
    return feats.reshape(B, PROJ_DIM)


# ------------------------------ parameter init --------------------------------
def init_params(key):
    ks = iter(jax.random.split(key, 32))

    def normal(shape, scale=0.02):
        return scale * jax.random.normal(next(ks), shape, dtype=jnp.float32)

    ones = jnp.ones((HIDDEN,), jnp.float32)
    zeros = jnp.zeros((HIDDEN,), jnp.float32)
    ln_unit = jnp.stack([ones, zeros, ones, zeros])          # (4, H)

    params = {
        # Conv2d(C, HIDDEN, kernel=PATCH, stride=PATCH, bias=False); weight
        # (HIDDEN, C, p, p) flattened & transposed to (C*p*p, HIDDEN).
        'patch_w': normal((PATCH_DIM, HIDDEN)),
        'class_emb': normal((HIDDEN,)),
        'pos_emb': normal((SEQ, HIDDEN)),
        'norms': ln_unit,                                    # pre-LN / post-LN
        # visual_projection: Linear(HIDDEN, PROJ_DIM, bias=False)
        'proj_w': normal((HIDDEN, PROJ_DIM)),
        # per-layer parameters, stacked along a leading layer dim
        'ln': jnp.broadcast_to(ln_unit[None], (NUM_LAYERS, 4, HIDDEN)),
        # fused QKV: [q_w | k_w | v_w] along the output dim
        'qkv_w': normal((NUM_LAYERS, HIDDEN, 3 * HIDDEN)),
        'qkv_b': jnp.zeros((NUM_LAYERS, 1, 3 * HIDDEN), jnp.float32),
        'o_w': normal((NUM_LAYERS, HIDDEN, HIDDEN)),
        'o_b': jnp.zeros((NUM_LAYERS, 1, HIDDEN), jnp.float32),
        'fc1_w': normal((NUM_LAYERS, HIDDEN, INTERMEDIATE)),
        'fc1_b': jnp.zeros((NUM_LAYERS, 1, INTERMEDIATE), jnp.float32),
        'fc2_w': normal((NUM_LAYERS, INTERMEDIATE, HIDDEN)),
        'fc2_b': jnp.zeros((NUM_LAYERS, 1, HIDDEN), jnp.float32),
    }
    return params


# TODO(synk): freeze_layers() only toggles requires_grad (training-time concern);
# it has no effect on the forward pass and is not represented here.

if __name__ == "__main__":
    key = jax.random.PRNGKey(0)
    pkey, xkey = jax.random.split(key)
    params = init_params(pkey)
    x = jax.random.normal(xkey, (BATCH, CHANNELS, IMAGE, IMAGE), dtype=jnp.float32)

    feats = jax.jit(clip_image_features)(x, params)
    feats = jax.block_until_ready(feats)

    assert feats.shape == (BATCH, PROJ_DIM), feats.shape
    assert bool(jnp.all(jnp.isfinite(feats)))
    print("KERNEL_OK")
</pallas_src>

<mosaic_0001>
module attributes {stable_mosaic.version = 11 : i64} {
  func.func @_clip_fwd_kernel(%arg0: i32, %arg1: memref<1x16x192xf32, #tpu.memory_space<vmem>>, %arg2: memref<24x32xf32, #tpu.memory_space<vmem>>, %arg3: memref<192x32xf32, #tpu.memory_space<vmem>>, %arg4: memref<4x32xf32, #tpu.memory_space<vmem>>, %arg5: memref<32x16xf32, #tpu.memory_space<vmem>>, %arg6: memref<2x4x32xf32, #tpu.memory_space<vmem>>, %arg7: memref<2x32x96xf32, #tpu.memory_space<vmem>>, %arg8: memref<2x1x96xf32, #tpu.memory_space<vmem>>, %arg9: memref<2x32x32xf32, #tpu.memory_space<vmem>>, %arg10: memref<2x1x32xf32, #tpu.memory_space<vmem>>, %arg11: memref<2x32x64xf32, #tpu.memory_space<vmem>>, %arg12: memref<2x1x64xf32, #tpu.memory_space<vmem>>, %arg13: memref<2x64x32xf32, #tpu.memory_space<vmem>>, %arg14: memref<2x1x32xf32, #tpu.memory_space<vmem>>, %arg15: memref<1x1x16xf32, #tpu.memory_space<vmem>>, %arg16: memref<24x32xf32, #tpu.memory_space<vmem>>) attributes {dimension_semantics = [#tpu.dimension_semantics<parallel>], iteration_bounds = array<i64: 2>, scalar_prefetch = 0 : i64, scratch_operands = 1 : i64, tpu.core_type = #tpu.core_type<tc>, window_params = [{transform_indices = @transform_0, window_bounds = array<i64: 1, 16, 192>}, {pipeline_mode = #tpu.pipeline_mode<synchronous>, transform_indices = @transform_1, window_bounds = array<i64: 24, 32>}, {pipeline_mode = #tpu.pipeline_mode<synchronous>, transform_indices = @transform_2, window_bounds = array<i64: 192, 32>}, {pipeline_mode = #tpu.pipeline_mode<synchronous>, transform_indices = @transform_3, window_bounds = array<i64: 4, 32>}, {pipeline_mode = #tpu.pipeline_mode<synchronous>, transform_indices = @transform_4, window_bounds = array<i64: 32, 16>}, {pipeline_mode = #tpu.pipeline_mode<synchronous>, transform_indices = @transform_5, window_bounds = array<i64: 2, 4, 32>}, {pipeline_mode = #tpu.pipeline_mode<synchronous>, transform_indices = @transform_6, window_bounds = array<i64: 2, 32, 96>}, {pipeline_mode = #tpu.pipeline_mode<synchronous>, transform_indices = @transform_7, window_bounds = array<i64: 2, 1, 96>}, {pipeline_mode = #tpu.pipeline_mode<synchronous>, transform_indices = @transform_8, window_bounds = array<i64: 2, 32, 32>}, {pipeline_mode = #tpu.pipeline_mode<synchronous>, transform_indices = @transform_9, window_bounds = array<i64: 2, 1, 32>}, {pipeline_mode = #tpu.pipeline_mode<synchronous>, transform_indices = @transform_10, window_bounds = array<i64: 2, 32, 64>}, {pipeline_mode = #tpu.pipeline_mode<synchronous>, transform_indices = @transform_11, window_bounds = array<i64: 2, 1, 64>}, {pipeline_mode = #tpu.pipeline_mode<synchronous>, transform_indices = @transform_12, window_bounds = array<i64: 2, 64, 32>}, {pipeline_mode = #tpu.pipeline_mode<synchronous>, transform_indices = @transform_13, window_bounds = array<i64: 2, 1, 32>}, {transform_indices = @transform_14, window_bounds = array<i64: 1, 1, 16>}]} {
    %c0 = arith.constant 0 : index
    %c0_0 = arith.constant 0 : index
    %c0_1 = arith.constant 0 : index
    %0 = vector.load %arg1[%c0, %c0_0, %c0_1] : memref<1x16x192xf32, #tpu.memory_space<vmem>>, vector<1x16x192xf32>
    %1 = vector.shape_cast %0 : vector<1x16x192xf32> to vector<16x192xf32>
    %c0_2 = arith.constant 0 : index
    %c0_3 = arith.constant 0 : index
    %2 = vector.load %arg3[%c0_2, %c0_3] : memref<192x32xf32, #tpu.memory_space<vmem>>, vector<192x32xf32>
    %cst = arith.constant dense<0.000000e+00> : vector<16x32xf32>
    %3 = tpu.matmul %1, %2, %cst {dimension_numbers = #tpu.dot_dimension_numbers<[1], [0], [0], [1], [0, 0, 1, 1], [], []>} : vector<16x192xf32>, vector<192x32xf32>, vector<16x32xf32> -> vector<16x32xf32>
    %c0_4 = arith.constant 0 : index
    %c0_5 = arith.constant 0 : index
    %4 = vector.load %arg2[%c0_4, %c0_5] : memref<24x32xf32, #tpu.memory_space<vmem>>, vector<16x32xf32>
    %5 = arith.addf %4, %3 : vector<16x32xf32>
    %c0_6 = arith.constant 0 : index
    %c0_7 = arith.constant 0 : index
    %6 = vector.load %arg16[%c0_6, %c0_7] : memref<24x32xf32, #tpu.memory_space<vmem>>, vector<16x32xf32>
    tpu.vector_store %arg16[%c0_6, %c0_7], %5 {strides = array<i32>} : memref<24x32xf32, #tpu.memory_space<vmem>>, vector<16x32xf32>,
    %c16 = arith.constant 16 : index
    %c0_8 = arith.constant 0 : index
    %7 = vector.load %arg2[%c16, %c0_8] : memref<24x32xf32, #tpu.memory_space<vmem>>, vector<8x32xf32>
    %c16_9 = arith.constant 16 : index
    %c0_10 = arith.constant 0 : index
    %8 = vector.load %arg16[%c16_9, %c0_10] : memref<24x32xf32, #tpu.memory_space<vmem>>, vector<8x32xf32>
    tpu.vector_store %arg16[%c16_9, %c0_10], %7 {strides = array<i32>} : memref<24x32xf32, #tpu.memory_space<vmem>>, vector<8x32xf32>,
    %c0_11 = arith.constant 0 : index
    %c0_12 = arith.constant 0 : index
    %9 = vector.load %arg16[%c0_11, %c0_12] : memref<24x32xf32, #tpu.memory_space<vmem>>, vector<24x32xf32>
    %c0_13 = arith.constant 0 : index
    %c0_14 = arith.constant 0 : index
    %10 = vector.load %arg4[%c0_13, %c0_14] : memref<4x32xf32, #tpu.memory_space<vmem>>, vector<4x32xf32>
    %11 = vector.extract_strided_slice %10 {offsets = [0, 0], sizes = [1, 32], strides = [1, 1]} : vector<4x32xf32> to vector<1x32xf32>
    %12 = vector.extract_strided_slice %10 {offsets = [1, 0], sizes = [1, 32], strides = [1, 1]} : vector<4x32xf32> to vector<1x32xf32>
    %cst_15 = arith.constant dense<0.000000e+00> : vector<24xf32>
    %13 = vector.multi_reduction <add>, %9, %cst_15 [1] : vector<24x32xf32> to vector<24xf32>
    %14 = vector.shape_cast %13 : vector<24xf32> to vector<24x1xf32>
    %cst_16 = arith.constant 3.200000e+01 : f32
    %15 = vector.broadcast %cst_16 : f32 to vector<24x1xf32>
    %16 = arith.divf %14, %15 : vector<24x1xf32>
    %17 = vector.broadcast %16 : vector<24x1xf32> to vector<24x32xf32>
    %18 = arith.subf %9, %17 : vector<24x32xf32>
    %19 = arith.mulf %18, %18 : vector<24x32xf32>
    %cst_17 = arith.constant dense<0.000000e+00> : vector<24xf32>
    %20 = vector.multi_reduction <add>, %19, %cst_17 [1] : vector<24x32xf32> to vector<24xf32>
    %21 = vector.shape_cast %20 : vector<24xf32> to vector<24x1xf32>
    %cst_18 = arith.constant 3.200000e+01 : f32
    %22 = vector.broadcast %cst_18 : f32 to vector<24x1xf32>
    %23 = arith.divf %21, %22 : vector<24x1xf32>
    %24 = vector.broadcast %16 : vector<24x1xf32> to vector<24x32xf32>
    %25 = arith.subf %9, %24 : vector<24x32xf32>
    %cst_19 = arith.constant 9.99999974E-6 : f32
    %26 = vector.broadcast %cst_19 : f32 to vector<24x1xf32>
    %27 = arith.addf %23, %26 : vector<24x1xf32>
    %28 = math.rsqrt %27 : vector<24x1xf32>
    %29 = vector.broadcast %28 : vector<24x1xf32> to vector<24x32xf32>
    %30 = arith.mulf %25, %29 : vector<24x32xf32>
    %31 = vector.broadcast %11 : vector<1x32xf32> to vector<24x32xf32>
    %32 = arith.mulf %30, %31 : vector<24x32xf32>
    %33 = vector.broadcast %12 : vector<1x32xf32> to vector<24x32xf32>
    %34 = arith.addf %32, %33 : vector<24x32xf32>
    %35 = tpu.iota {dimensions = array<i32: 1>} : vector<24x24xi32>
    %c17_i32 = arith.constant 17 : i32
    %36 = vector.broadcast %c17_i32 : i32 to vector<24x24xi32>
    %37 = arith.cmpi slt, %35, %36 : vector<24x24xi32>
    %cst_20 = arith.constant 0.000000e+00 : f32
    %cst_21 = arith.constant -1.000000e+30 : f32
    %38 = vector.broadcast %cst_20 : f32 to vector<24x24xf32>
    %39 = vector.broadcast %cst_21 : f32 to vector<24x24xf32>
    %40 = arith.select %37, %38, %39 : vector<24x24xi1>, vector<24x24xf32>
    %c0_22 = arith.constant 0 : index
    %c0_23 = arith.constant 0 : index
    %c0_24 = arith.constant 0 : index
    %41 = vector.load %arg6[%c0_22, %c0_23, %c0_24] : memref<2x4x32xf32, #tpu.memory_space<vmem>>, vector<1x4x32xf32>
    %42 = vector.shape_cast %41 : vector<1x4x32xf32> to vector<4x32xf32>
    %43 = vector.extract_strided_slice %42 {offsets = [0, 0], sizes = [1, 32], strides = [1, 1]} : vector<4x32xf32> to vector<1x32xf32>
    %44 = vector.extract_strided_slice %42 {offsets = [1, 0], sizes = [1, 32], strides = [1, 1]} : vector<4x32xf32> to vector<1x32xf32>
    %cst_25 = arith.constant dense<0.000000e+00> : vector<24xf32>
    %45 = vector.multi_reduction <add>, %34, %cst_25 [1] : vector<24x32xf32> to vector<24xf32>
    %46 = vector.shape_cast %45 : vector<24xf32> to vector<24x1xf32>
    %cst_26 = arith.constant 3.200000e+01 : f32
    %47 = vector.broadcast %cst_26 : f32 to vector<24x1xf32>
    %48 = arith.divf %46, %47 : vector<24x1xf32>
    %49 = vector.broadcast %48 : vector<24x1xf32> to vector<24x32xf32>
    %50 = arith.subf %34, %49 : vector<24x32xf32>
    %51 = arith.mulf %50, %50 : vector<24x32xf32>
    %cst_27 = arith.constant dense<0.000000e+00> : vector<24xf32>
    %52 = vector.multi_reduction <add>, %51, %cst_27 [1] : vector<24x32xf32> to vector<24xf32>
    %53 = vector.shape_cast %52 : vector<24xf32> to vector<24x1xf32>
    %cst_28 = arith.constant 3.200000e+01 : f32
    %54 = vector.broadcast %cst_28 : f32 to vector<24x1xf32>
    %55 = arith.divf %53, %54 : vector<24x1xf32>
    %56 = vector.broadcast %48 : vector<24x1xf32> to vector<24x32xf32>
    %57 = arith.subf %34, %56 : vector<24x32xf32>
    %cst_29 = arith.constant 9.99999974E-6 : f32
    %58 = vector.broadcast %cst_29 : f32 to vector<24x1xf32>
    %59 = arith.addf %55, %58 : vector<24x1xf32>
    %60 = math.rsqrt %59 : vector<24x1xf32>
    %61 = vector.broadcast %60 : vector<24x1xf32> to vector<24x32xf32>
    %62 = arith.mulf %57, %61 : vector<24x32xf32>
    %63 = vector.broadcast %43 : vector<1x32xf32> to vector<24x32xf32>
    %64 = arith.mulf %62, %63 : vector<24x32xf32>
    %65 = vector.broadcast %44 : vector<1x32xf32> to vector<24x32xf32>
    %66 = arith.addf %64, %65 : vector<24x32xf32>
    %c0_30 = arith.constant 0 : index
    %c0_31 = arith.constant 0 : index
    %c0_32 = arith.constant 0 : index
    %67 = vector.load %arg7[%c0_30, %c0_31, %c0_32] : memref<2x32x96xf32, #tpu.memory_space<vmem>>, vector<1x32x96xf32>
    %68 = vector.shape_cast %67 : vector<1x32x96xf32> to vector<32x96xf32>
    %cst_33 = arith.constant dense<0.000000e+00> : vector<24x96xf32>
    %69 = tpu.matmul %66, %68, %cst_33 {dimension_numbers = #tpu.dot_dimension_numbers<[1], [0], [0], [1], [0, 0, 1, 1], [], []>} : vector<24x32xf32>, vector<32x96xf32>, vector<24x96xf32> -> vector<24x96xf32>
    %c0_34 = arith.constant 0 : index
    %c0_35 = arith.constant 0 : index
    %c0_36 = arith.constant 0 : index
    %70 = vector.load %arg8[%c0_34, %c0_35, %c0_36] : memref<2x1x96xf32, #tpu.memory_space<vmem>>, vector<1x1x96xf32>
    %71 = vector.shape_cast %70 : vector<1x1x96xf32> to vector<1x96xf32>
    %72 = vector.broadcast %71 : vector<1x96xf32> to vector<24x96xf32>
    %73 = arith.addf %69, %72 : vector<24x96xf32>
    %74 = vector.extract_strided_slice %73 {offsets = [0, 0], sizes = [24, 8], strides = [1, 1]} : vector<24x96xf32> to vector<24x8xf32>
    %75 = vector.extract_strided_slice %73 {offsets = [0, 32], sizes = [24, 8], strides = [1, 1]} : vector<24x96xf32> to vector<24x8xf32>
    %76 = vector.extract_strided_slice %73 {offsets = [0, 64], sizes = [24, 8], strides = [1, 1]} : vector<24x96xf32> to vector<24x8xf32>
    %cst_37 = arith.constant dense<0.000000e+00> : vector<24x24xf32>
    %77 = tpu.matmul %74, %75, %cst_37 {dimension_numbers = #tpu.dot_dimension_numbers<[1], [1], [0], [0], [0, 0, 1, 0], [], []>} : vector<24x8xf32>, vector<24x8xf32>, vector<24x24xf32> -> vector<24x24xf32>
    %cst_38 = arith.constant 0.353553385 : f32
    %78 = vector.broadcast %cst_38 : f32 to vector<24x24xf32>
    %79 = arith.mulf %77, %78 : vector<24x24xf32>
    %80 = arith.addf %79, %40 : vector<24x24xf32>
    %cst_39 = arith.constant dense<0xFF800000> : vector<24xf32>
    %81 = vector.multi_reduction <maximumf>, %80, %cst_39 [1] : vector<24x24xf32> to vector<24xf32>
    %82 = vector.shape_cast %81 : vector<24xf32> to vector<24x1xf32>
    %83 = vector.broadcast %82 : vector<24x1xf32> to vector<24x24xf32>
    %84 = arith.subf %80, %83 : vector<24x24xf32>
    %85 = math.exp %84 : vector<24x24xf32>
    %cst_40 = arith.constant dense<0.000000e+00> : vector<24xf32>
    %86 = vector.multi_reduction <add>, %85, %cst_40 [1] : vector<24x24xf32> to vector<24xf32>
    %87 = vector.shape_cast %86 : vector<24xf32> to vector<24x1xf32>
    %88 = tpu.reciprocal %87 {approx = true} : vector<24x1xf32> -> vector<24x1xf32>
    %89 = vector.broadcast %88 : vector<24x1xf32> to vector<24x24xf32>
    %90 = arith.mulf %85, %89 : vector<24x24xf32>
    %cst_41 = arith.constant dense<0.000000e+00> : vector<24x8xf32>
    %91 = tpu.matmul %90, %76, %cst_41 {dimension_numbers = #tpu.dot_dimension_numbers<[1], [0], [0], [1], [0, 0, 1, 1], [], []>} : vector<24x24xf32>, vector<24x8xf32>, vector<24x8xf32> -> vector<24x8xf32>
    %c0_42 = arith.constant 0 : index
    %c0_43 = arith.constant 0 : index
    %92 = vector.load %arg16[%c0_42, %c0_43] : memref<24x32xf32, #tpu.memory_space<vmem>>, vector<24x8xf32>
    tpu.vector_store %arg16[%c0_42, %c0_43], %91 {strides = array<i32>} : memref<24x32xf32, #tpu.memory_space<vmem>>, vector<24x8xf32>,
    %93 = vector.extract_strided_slice %73 {offsets = [0, 8], sizes = [24, 8], strides = [1, 1]} : vector<24x96xf32> to vector<24x8xf32>
    %94 = vector.extract_strided_slice %73 {offsets = [0, 40], sizes = [24, 8], strides = [1, 1]} : vector<24x96xf32> to vector<24x8xf32>
    %95 = vector.extract_strided_slice %73 {offsets = [0, 72], sizes = [24, 8], strides = [1, 1]} : vector<24x96xf32> to vector<24x8xf32>
    %cst_44 = arith.constant dense<0.000000e+00> : vector<24x24xf32>
    %96 = tpu.matmul %93, %94, %cst_44 {dimension_numbers = #tpu.dot_dimension_numbers<[1], [1], [0], [0], [0, 0, 1, 0], [], []>} : vector<24x8xf32>, vector<24x8xf32>, vector<24x24xf32> -> vector<24x24xf32>
    %cst_45 = arith.constant 0.353553385 : f32
    %97 = vector.broadcast %cst_45 : f32 to vector<24x24xf32>
    %98 = arith.mulf %96, %97 : vector<24x24xf32>
    %99 = arith.addf %98, %40 : vector<24x24xf32>
    %cst_46 = arith.constant dense<0xFF800000> : vector<24xf32>
    %100 = vector.multi_reduction <maximumf>, %99, %cst_46 [1] : vector<24x24xf32> to vector<24xf32>
    %101 = vector.shape_cast %100 : vector<24xf32> to vector<24x1xf32>
    %102 = vector.broadcast %101 : vector<24x1xf32> to vector<24x24xf32>
    %103 = arith.subf %99, %102 : vector<24x24xf32>
    %104 = math.exp %103 : vector<24x24xf32>
    %cst_47 = arith.constant dense<0.000000e+00> : vector<24xf32>
    %105 = vector.multi_reduction <add>, %104, %cst_47 [1] : vector<24x24xf32> to vector<24xf32>
    %106 = vector.shape_cast %105 : vector<24xf32> to vector<24x1xf32>
    %107 = tpu.reciprocal %106 {approx = true} : vector<24x1xf32> -> vector<24x1xf32>
    %108 = vector.broadcast %107 : vector<24x1xf32> to vector<24x24xf32>
    %109 = arith.mulf %104, %108 : vector<24x24xf32>
    %cst_48 = arith.constant dense<0.000000e+00> : vector<24x8xf32>
    %110 = tpu.matmul %109, %95, %cst_48 {dimension_numbers = #tpu.dot_dimension_numbers<[1], [0], [0], [1], [0, 0, 1, 1], [], []>} : vector<24x24xf32>, vector<24x8xf32>, vector<24x8xf32> -> vector<24x8xf32>
    %c0_49 = arith.constant 0 : index
    %c8 = arith.constant 8 : index
    %111 = vector.load %arg16[%c0_49, %c8] : memref<24x32xf32, #tpu.memory_space<vmem>>, vector<24x8xf32>
    tpu.vector_store %arg16[%c0_49, %c8], %110 {strides = array<i32>} : memref<24x32xf32, #tpu.memory_space<vmem>>, vector<24x8xf32>,
    %112 = vector.extract_strided_slice %73 {offsets = [0, 16], sizes = [24, 8], strides = [1, 1]} : vector<24x96xf32> to vector<24x8xf32>
    %113 = vector.extract_strided_slice %73 {offsets = [0, 48], sizes = [24, 8], strides = [1, 1]} : vector<24x96xf32> to vector<24x8xf32>
    %114 = vector.extract_strided_slice %73 {offsets = [0, 80], sizes = [24, 8], strides = [1, 1]} : vector<24x96xf32> to vector<24x8xf32>
    %cst_50 = arith.constant dense<0.000000e+00> : vector<24x24xf32>
    %115 = tpu.matmul %112, %113, %cst_50 {dimension_numbers = #tpu.dot_dimension_numbers<[1], [1], [0], [0], [0, 0, 1, 0], [], []>} : vector<24x8xf32>, vector<24x8xf32>, vector<24x24xf32> -> vector<24x24xf32>
    %cst_51 = arith.constant 0.353553385 : f32
    %116 = vector.broadcast %cst_51 : f32 to vector<24x24xf32>
    %117 = arith.mulf %115, %116 : vector<24x24xf32>
    %118 = arith.addf %117, %40 : vector<24x24xf32>
    %cst_52 = arith.constant dense<0xFF800000> : vector<24xf32>
    %119 = vector.multi_reduction <maximumf>, %118, %cst_52 [1] : vector<24x24xf32> to vector<24xf32>
    %120 = vector.shape_cast %119 : vector<24xf32> to vector<24x1xf32>
    %121 = vector.broadcast %120 : vector<24x1xf32> to vector<24x24xf32>
    %122 = arith.subf %118, %121 : vector<24x24xf32>
    %123 = math.exp %122 : vector<24x24xf32>
    %cst_53 = arith.constant dense<0.000000e+00> : vector<24xf32>
    %124 = vector.multi_reduction <add>, %123, %cst_53 [1] : vector<24x24xf32> to vector<24xf32>
    %125 = vector.shape_cast %124 : vector<24xf32> to vector<24x1xf32>
    %126 = tpu.reciprocal %125 {approx = true} : vector<24x1xf32> -> vector<24x1xf32>
    %127 = vector.broadcast %126 : vector<24x1xf32> to vector<24x24xf32>
    %128 = arith.mulf %123, %127 : vector<24x24xf32>
    %cst_54 = arith.constant dense<0.000000e+00> : vector<24x8xf32>
    %129 = tpu.matmul %128, %114, %cst_54 {dimension_numbers = #tpu.dot_dimension_numbers<[1], [0], [0], [1], [0, 0, 1, 1], [], []>} : vector<24x24xf32>, vector<24x8xf32>, vector<24x8xf32> -> vector<24x8xf32>
    %c0_55 = arith.constant 0 : index
    %c16_56 = arith.constant 16 : index
    %130 = vector.load %arg16[%c0_55, %c16_56] : memref<24x32xf32, #tpu.memory_space<vmem>>, vector<24x8xf32>
    tpu.vector_store %arg16[%c0_55, %c16_56], %129 {strides = array<i32>} : memref<24x32xf32, #tpu.memory_space<vmem>>, vector<24x8xf32>,
    %131 = vector.extract_strided_slice %73 {offsets = [0, 24], sizes = [24, 8], strides = [1, 1]} : vector<24x96xf32> to vector<24x8xf32>
    %132 = vector.extract_strided_slice %73 {offsets = [0, 56], sizes = [24, 8], strides = [1, 1]} : vector<24x96xf32> to vector<24x8xf32>
    %133 = vector.extract_strided_slice %73 {offsets = [0, 88], sizes = [24, 8], strides = [1, 1]} : vector<24x96xf32> to vector<24x8xf32>
    %cst_57 = arith.constant dense<0.000000e+00> : vector<24x24xf32>
    %134 = tpu.matmul %131, %132, %cst_57 {dimension_numbers = #tpu.dot_dimension_numbers<[1], [1], [0], [0], [0, 0, 1, 0], [], []>} : vector<24x8xf32>, vector<24x8xf32>, vector<24x24xf32> -> vector<24x24xf32>
    %cst_58 = arith.constant 0.353553385 : f32
    %135 = vector.broadcast %cst_58 : f32 to vector<24x24xf32>
    %136 = arith.mulf %134, %135 : vector<24x24xf32>
    %137 = arith.addf %136, %40 : vector<24x24xf32>
    %cst_59 = arith.constant dense<0xFF800000> : vector<24xf32>
    %138 = vector.multi_reduction <maximumf>, %137, %cst_59 [1] : vector<24x24xf32> to vector<24xf32>
    %139 = vector.shape_cast %138 : vector<24xf32> to vector<24x1xf32>
    %140 = vector.broadcast %139 : vector<24x1xf32> to vector<24x24xf32>
    %141 = arith.subf %137, %140 : vector<24x24xf32>
    %142 = math.exp %141 : vector<24x24xf32>
    %cst_60 = arith.constant dense<0.000000e+00> : vector<24xf32>
    %143 = vector.multi_reduction <add>, %142, %cst_60 [1] : vector<24x24xf32> to vector<24xf32>
    %144 = vector.shape_cast %143 : vector<24xf32> to vector<24x1xf32>
    %145 = tpu.reciprocal %144 {approx = true} : vector<24x1xf32> -> vector<24x1xf32>
    %146 = vector.broadcast %145 : vector<24x1xf32> to vector<24x24xf32>
    %147 = arith.mulf %142, %146 : vector<24x24xf32>
    %cst_61 = arith.constant dense<0.000000e+00> : vector<24x8xf32>
    %148 = tpu.matmul %147, %133, %cst_61 {dimension_numbers = #tpu.dot_dimension_numbers<[1], [0], [0], [1], [0, 0, 1, 1], [], []>} : vector<24x24xf32>, vector<24x8xf32>, vector<24x8xf32> -> vector<24x8xf32>
    %c0_62 = arith.constant 0 : index
    %c24 = arith.constant 24 : index
    %149 = vector.load %arg16[%c0_62, %c24] : memref<24x32xf32, #tpu.memory_space<vmem>>, vector<24x8xf32>
    tpu.vector_store %arg16[%c0_62, %c24], %148 {strides = array<i32>} : memref<24x32xf32, #tpu.memory_space<vmem>>, vector<24x8xf32>,
    %c0_63 = arith.constant 0 : index
    %c0_64 = arith.constant 0 : index
    %150 = vector.load %arg16[%c0_63, %c0_64] : memref<24x32xf32, #tpu.memory_space<vmem>>, vector<24x32xf32>
    %c0_65 = arith.constant 0 : index
    %c0_66 = arith.constant 0 : index
    %c0_67 = arith.constant 0 : index
    %151 = vector.load %arg9[%c0_65, %c0_66, %c0_67] : memref<2x32x32xf32, #tpu.memory_space<vmem>>, vector<1x32x32xf32>
    %152 = vector.shape_cast %151 : vector<1x32x32xf32> to vector<32x32xf32>
    %cst_68 = arith.constant dense<0.000000e+00> : vector<24x32xf32>
    %153 = tpu.matmul %150, %152, %cst_68 {dimension_numbers = #tpu.dot_dimension_numbers<[1], [0], [0], [1], [0, 0, 1, 1], [], []>} : vector<24x32xf32>, vector<32x32xf32>, vector<24x32xf32> -> vector<24x32xf32>
    %c0_69 = arith.constant 0 : index
    %c0_70 = arith.constant 0 : index
    %c0_71 = arith.constant 0 : index
    %154 = vector.load %arg10[%c0_69, %c0_70, %c0_71] : memref<2x1x32xf32, #tpu.memory_space<vmem>>, vector<1x1x32xf32>
    %155 = vector.shape_cast %154 : vector<1x1x32xf32> to vector<1x32xf32>
    %156 = vector.broadcast %155 : vector<1x32xf32> to vector<24x32xf32>
    %157 = arith.addf %153, %156 : vector<24x32xf32>
    %158 = arith.addf %34, %157 : vector<24x32xf32>
    %159 = vector.extract_strided_slice %42 {offsets = [2, 0], sizes = [1, 32], strides = [1, 1]} : vector<4x32xf32> to vector<1x32xf32>
    %160 = vector.extract_strided_slice %42 {offsets = [3, 0], sizes = [1, 32], strides = [1, 1]} : vector<4x32xf32> to vector<1x32xf32>
    %cst_72 = arith.constant dense<0.000000e+00> : vector<24xf32>
    %161 = vector.multi_reduction <add>, %158, %cst_72 [1] : vector<24x32xf32> to vector<24xf32>
    %162 = vector.shape_cast %161 : vector<24xf32> to vector<24x1xf32>
    %cst_73 = arith.constant 3.200000e+01 : f32
    %163 = vector.broadcast %cst_73 : f32 to vector<24x1xf32>
    %164 = arith.divf %162, %163 : vector<24x1xf32>
    %165 = vector.broadcast %164 : vector<24x1xf32> to vector<24x32xf32>
    %166 = arith.subf %158, %165 : vector<24x32xf32>
    %167 = arith.mulf %166, %166 : vector<24x32xf32>
    %cst_74 = arith.constant dense<0.000000e+00> : vector<24xf32>
    %168 = vector.multi_reduction <add>, %167, %cst_74 [1] : vector<24x32xf32> to vector<24xf32>
    %169 = vector.shape_cast %168 : vector<24xf32> to vector<24x1xf32>
    %cst_75 = arith.constant 3.200000e+01 : f32
    %170 = vector.broadcast %cst_75 : f32 to vector<24x1xf32>
    %171 = arith.divf %169, %170 : vector<24x1xf32>
    %172 = vector.broadcast %164 : vector<24x1xf32> to vector<24x32xf32>
    %173 = arith.subf %158, %172 : vector<24x32xf32>
    %cst_76 = arith.constant 9.99999974E-6 : f32
    %174 = vector.broadcast %cst_76 : f32 to vector<24x1xf32>
    %175 = arith.addf %171, %174 : vector<24x1xf32>
    %176 = math.rsqrt %175 : vector<24x1xf32>
    %177 = vector.broadcast %176 : vector<24x1xf32> to vector<24x32xf32>
    %178 = arith.mulf %173, %177 : vector<24x32xf32>
    %179 = vector.broadcast %159 : vector<1x32xf32> to vector<24x32xf32>
    %180 = arith.mulf %178, %179 : vector<24x32xf32>
    %181 = vector.broadcast %160 : vector<1x32xf32> to vector<24x32xf32>
    %182 = arith.addf %180, %181 : vector<24x32xf32>
    %c0_77 = arith.constant 0 : index
    %c0_78 = arith.constant 0 : index
    %c0_79 = arith.constant 0 : index
    %183 = vector.load %arg11[%c0_77, %c0_78, %c0_79] : memref<2x32x64xf32, #tpu.memory_space<vmem>>, vector<1x32x64xf32>
    %184 = vector.shape_cast %183 : vector<1x32x64xf32> to vector<32x64xf32>
    %cst_80 = arith.constant dense<0.000000e+00> : vector<24x64xf32>
    %185 = tpu.matmul %182, %184, %cst_80 {dimension_numbers = #tpu.dot_dimension_numbers<[1], [0], [0], [1], [0, 0, 1, 1], [], []>} : vector<24x32xf32>, vector<32x64xf32>, vector<24x64xf32> -> vector<24x64xf32>
    %c0_81 = arith.constant 0 : index
    %c0_82 = arith.constant 0 : index
    %c0_83 = arith.constant 0 : index
    %186 = vector.load %arg12[%c0_81, %c0_82, %c0_83] : memref<2x1x64xf32, #tpu.memory_space<vmem>>, vector<1x1x64xf32>
    %187 = vector.shape_cast %186 : vector<1x1x64xf32> to vector<1x64xf32>
    %188 = vector.broadcast %187 : vector<1x64xf32> to vector<24x64xf32>
    %189 = arith.addf %185, %188 : vector<24x64xf32>
    %cst_84 = arith.constant 1.702000e+00 : f32
    %190 = vector.broadcast %cst_84 : f32 to vector<24x64xf32>
    %191 = arith.mulf %190, %189 : vector<24x64xf32>
    %192 = arith.negf %191 : vector<24x64xf32>
    %193 = math.exp %192 : vector<24x64xf32>
    %cst_85 = arith.constant 1.000000e+00 : f32
    %194 = vector.broadcast %cst_85 : f32 to vector<24x64xf32>
    %195 = arith.addf %194, %193 : vector<24x64xf32>
    %196 = arith.divf %194, %195 : vector<24x64xf32>
    %197 = arith.mulf %189, %196 : vector<24x64xf32>
    %c0_86 = arith.constant 0 : index
    %c0_87 = arith.constant 0 : index
    %c0_88 = arith.constant 0 : index
    %198 = vector.load %arg13[%c0_86, %c0_87, %c0_88] : memref<2x64x32xf32, #tpu.memory_space<vmem>>, vector<1x64x32xf32>
    %199 = vector.shape_cast %198 : vector<1x64x32xf32> to vector<64x32xf32>
    %cst_89 = arith.constant dense<0.000000e+00> : vector<24x32xf32>
    %200 = tpu.matmul %197, %199, %cst_89 {dimension_numbers = #tpu.dot_dimension_numbers<[1], [0], [0], [1], [0, 0, 1, 1], [], []>} : vector<24x64xf32>, vector<64x32xf32>, vector<24x32xf32> -> vector<24x32xf32>
    %c0_90 = arith.constant 0 : index
    %c0_91 = arith.constant 0 : index
    %c0_92 = arith.constant 0 : index
    %201 = vector.load %arg14[%c0_90, %c0_91, %c0_92] : memref<2x1x32xf32, #tpu.memory_space<vmem>>, vector<1x1x32xf32>
    %202 = vector.shape_cast %201 : vector<1x1x32xf32> to vector<1x32xf32>
    %203 = vector.broadcast %202 : vector<1x32xf32> to vector<24x32xf32>
    %204 = arith.addf %200, %203 : vector<24x32xf32>
    %205 = arith.addf %158, %204 : vector<24x32xf32>
    %c1 = arith.constant 1 : index
    %c0_93 = arith.constant 0 : index
    %c0_94 = arith.constant 0 : index
    %206 = vector.load %arg6[%c1, %c0_93, %c0_94] : memref<2x4x32xf32, #tpu.memory_space<vmem>>, vector<1x4x32xf32>
    %207 = vector.shape_cast %206 : vector<1x4x32xf32> to vector<4x32xf32>
    %208 = vector.extract_strided_slice %207 {offsets = [0, 0], sizes = [1, 32], strides = [1, 1]} : vector<4x32xf32> to vector<1x32xf32>
    %209 = vector.extract_strided_slice %207 {offsets = [1, 0], sizes = [1, 32], strides = [1, 1]} : vector<4x32xf32> to vector<1x32xf32>
    %cst_95 = arith.constant dense<0.000000e+00> : vector<24xf32>
    %210 = vector.multi_reduction <add>, %205, %cst_95 [1] : vector<24x32xf32> to vector<24xf32>
    %211 = vector.shape_cast %210 : vector<24xf32> to vector<24x1xf32>
    %cst_96 = arith.constant 3.200000e+01 : f32
    %212 = vector.broadcast %cst_96 : f32 to vector<24x1xf32>
    %213 = arith.divf %211, %212 : vector<24x1xf32>
    %214 = vector.broadcast %213 : vector<24x1xf32> to vector<24x32xf32>
    %215 = arith.subf %205, %214 : vector<24x32xf32>
    %216 = arith.mulf %215, %215 : vector<24x32xf32>
    %cst_97 = arith.constant dense<0.000000e+00> : vector<24xf32>
    %217 = vector.multi_reduction <add>, %216, %cst_97 [1] : vector<24x32xf32> to vector<24xf32>
    %218 = vector.shape_cast %217 : vector<24xf32> to vector<24x1xf32>
    %cst_98 = arith.constant 3.200000e+01 : f32
    %219 = vector.broadcast %cst_98 : f32 to vector<24x1xf32>
    %220 = arith.divf %218, %219 : vector<24x1xf32>
    %221 = vector.broadcast %213 : vector<24x1xf32> to vector<24x32xf32>
    %222 = arith.subf %205, %221 : vector<24x32xf32>
    %cst_99 = arith.constant 9.99999974E-6 : f32
    %223 = vector.broadcast %cst_99 : f32 to vector<24x1xf32>
    %224 = arith.addf %220, %223 : vector<24x1xf32>
    %225 = math.rsqrt %224 : vector<24x1xf32>
    %226 = vector.broadcast %225 : vector<24x1xf32> to vector<24x32xf32>
    %227 = arith.mulf %222, %226 : vector<24x32xf32>
    %228 = vector.broadcast %208 : vector<1x32xf32> to vector<24x32xf32>
    %229 = arith.mulf %227, %228 : vector<24x32xf32>
    %230 = vector.broadcast %209 : vector<1x32xf32> to vector<24x32xf32>
    %231 = arith.addf %229, %230 : vector<24x32xf32>
    %c1_100 = arith.constant 1 : index
    %c0_101 = arith.constant 0 : index
    %c0_102 = arith.constant 0 : index
    %232 = vector.load %arg7[%c1_100, %c0_101, %c0_102] : memref<2x32x96xf32, #tpu.memory_space<vmem>>, vector<1x32x96xf32>
    %233 = vector.shape_cast %232 : vector<1x32x96xf32> to vector<32x96xf32>
    %cst_103 = arith.constant dense<0.000000e+00> : vector<24x96xf32>
    %234 = tpu.matmul %231, %233, %cst_103 {dimension_numbers = #tpu.dot_dimension_numbers<[1], [0], [0], [1], [0, 0, 1, 1], [], []>} : vector<24x32xf32>, vector<32x96xf32>, vector<24x96xf32> -> vector<24x96xf32>
    %c1_104 = arith.constant 1 : index
    %c0_105 = arith.constant 0 : index
    %c0_106 = arith.constant 0 : index
    %235 = vector.load %arg8[%c1_104, %c0_105, %c0_106] : memref<2x1x96xf32, #tpu.memory_space<vmem>>, vector<1x1x96xf32>
    %236 = vector.shape_cast %235 : vector<1x1x96xf32> to vector<1x96xf32>
    %237 = vector.broadcast %236 : vector<1x96xf32> to vector<24x96xf32>
    %238 = arith.addf %234, %237 : vector<24x96xf32>
    %239 = vector.extract_strided_slice %238 {offsets = [0, 0], sizes = [24, 8], strides = [1, 1]} : vector<24x96xf32> to vector<24x8xf32>
    %240 = vector.extract_strided_slice %238 {offsets = [0, 32], sizes = [24, 8], strides = [1, 1]} : vector<24x96xf32> to vector<24x8xf32>
    %241 = vector.extract_strided_slice %238 {offsets = [0, 64], sizes = [24, 8], strides = [1, 1]} : vector<24x96xf32> to vector<24x8xf32>
    %cst_107 = arith.constant dense<0.000000e+00> : vector<24x24xf32>
    %242 = tpu.matmul %239, %240, %cst_107 {dimension_numbers = #tpu.dot_dimension_numbers<[1], [1], [0], [0], [0, 0, 1, 0], [], []>} : vector<24x8xf32>, vector<24x8xf32>, vector<24x24xf32> -> vector<24x24xf32>
    %cst_108 = arith.constant 0.353553385 : f32
    %243 = vector.broadcast %cst_108 : f32 to vector<24x24xf32>
    %244 = arith.mulf %242, %243 : vector<24x24xf32>
    %245 = arith.addf %244, %40 : vector<24x24xf32>
    %cst_109 = arith.constant dense<0xFF800000> : vector<24xf32>
    %246 = vector.multi_reduction <maximumf>, %245, %cst_109 [1] : vector<24x24xf32> to vector<24xf32>
    %247 = vector.shape_cast %246 : vector<24xf32> to vector<24x1xf32>
    %248 = vector.broadcast %247 : vector<24x1xf32> to vector<24x24xf32>
    %249 = arith.subf %245, %248 : vector<24x24xf32>
    %250 = math.exp %249 : vector<24x24xf32>
    %cst_110 = arith.constant dense<0.000000e+00> : vector<24xf32>
    %251 = vector.multi_reduction <add>, %250, %cst_110 [1] : vector<24x24xf32> to vector<24xf32>
    %252 = vector.shape_cast %251 : vector<24xf32> to vector<24x1xf32>
    %253 = tpu.reciprocal %252 {approx = true} : vector<24x1xf32> -> vector<24x1xf32>
    %254 = vector.broadcast %253 : vector<24x1xf32> to vector<24x24xf32>
    %255 = arith.mulf %250, %254 : vector<24x24xf32>
    %cst_111 = arith.constant dense<0.000000e+00> : vector<24x8xf32>
    %256 = tpu.matmul %255, %241, %cst_111 {dimension_numbers = #tpu.dot_dimension_numbers<[1], [0], [0], [1], [0, 0, 1, 1], [], []>} : vector<24x24xf32>, vector<24x8xf32>, vector<24x8xf32> -> vector<24x8xf32>
    %c0_112 = arith.constant 0 : index
    %c0_113 = arith.constant 0 : index
    %257 = vector.load %arg16[%c0_112, %c0_113] : memref<24x32xf32, #tpu.memory_space<vmem>>, vector<24x8xf32>
    tpu.vector_store %arg16[%c0_112, %c0_113], %256 {strides = array<i32>} : memref<24x32xf32, #tpu.memory_space<vmem>>, vector<24x8xf32>,
    %258 = vector.extract_strided_slice %238 {offsets = [0, 8], sizes = [24, 8], strides = [1, 1]} : vector<24x96xf32> to vector<24x8xf32>
    %259 = vector.extract_strided_slice %238 {offsets = [0, 40], sizes = [24, 8], strides = [1, 1]} : vector<24x96xf32> to vector<24x8xf32>
    %260 = vector.extract_strided_slice %238 {offsets = [0, 72], sizes = [24, 8], strides = [1, 1]} : vector<24x96xf32> to vector<24x8xf32>
    %cst_114 = arith.constant dense<0.000000e+00> : vector<24x24xf32>
    %261 = tpu.matmul %258, %259, %cst_114 {dimension_numbers = #tpu.dot_dimension_numbers<[1], [1], [0], [0], [0, 0, 1, 0], [], []>} : vector<24x8xf32>, vector<24x8xf32>, vector<24x24xf32> -> vector<24x24xf32>
    %cst_115 = arith.constant 0.353553385 : f32
    %262 = vector.broadcast %cst_115 : f32 to vector<24x24xf32>
    %263 = arith.mulf %261, %262 : vector<24x24xf32>
    %264 = arith.addf %263, %40 : vector<24x24xf32>
    %cst_116 = arith.constant dense<0xFF800000> : vector<24xf32>
    %265 = vector.multi_reduction <maximumf>, %264, %cst_116 [1] : vector<24x24xf32> to vector<24xf32>
    %266 = vector.shape_cast %265 : vector<24xf32> to vector<24x1xf32>
    %267 = vector.broadcast %266 : vector<24x1xf32> to vector<24x24xf32>
    %268 = arith.subf %264, %267 : vector<24x24xf32>
    %269 = math.exp %268 : vector<24x24xf32>
    %cst_117 = arith.constant dense<0.000000e+00> : vector<24xf32>
    %270 = vector.multi_reduction <add>, %269, %cst_117 [1] : vector<24x24xf32> to vector<24xf32>
    %271 = vector.shape_cast %270 : vector<24xf32> to vector<24x1xf32>
    %272 = tpu.reciprocal %271 {approx = true} : vector<24x1xf32> -> vector<24x1xf32>
    %273 = vector.broadcast %272 : vector<24x1xf32> to vector<24x24xf32>
    %274 = arith.mulf %269, %273 : vector<24x24xf32>
    %cst_118 = arith.constant dense<0.000000e+00> : vector<24x8xf32>
    %275 = tpu.matmul %274, %260, %cst_118 {dimension_numbers = #tpu.dot_dimension_numbers<[1], [0], [0], [1], [0, 0, 1, 1], [], []>} : vector<24x24xf32>, vector<24x8xf32>, vector<24x8xf32> -> vector<24x8xf32>
    %c0_119 = arith.constant 0 : index
    %c8_120 = arith.constant 8 : index
    %276 = vector.load %arg16[%c0_119, %c8_120] : memref<24x32xf32, #tpu.memory_space<vmem>>, vector<24x8xf32>
    tpu.vector_store %arg16[%c0_119, %c8_120], %275 {strides = array<i32>} : memref<24x32xf32, #tpu.memory_space<vmem>>, vector<24x8xf32>,
    %277 = vector.extract_strided_slice %238 {offsets = [0, 16], sizes = [24, 8], strides = [1, 1]} : vector<24x96xf32> to vector<24x8xf32>
    %278 = vector.extract_strided_slice %238 {offsets = [0, 48], sizes = [24, 8], strides = [1, 1]} : vector<24x96xf32> to vector<24x8xf32>
    %279 = vector.extract_strided_slice %238 {offsets = [0, 80], sizes = [24, 8], strides = [1, 1]} : vector<24x96xf32> to vector<24x8xf32>
    %cst_121 = arith.constant dense<0.000000e+00> : vector<24x24xf32>
    %280 = tpu.matmul %277, %278, %cst_121 {dimension_numbers = #tpu.dot_dimension_numbers<[1], [1], [0], [0], [0, 0, 1, 0], [], []>} : vector<24x8xf32>, vector<24x8xf32>, vector<24x24xf32> -> vector<24x24xf32>
    %cst_122 = arith.constant 0.353553385 : f32
    %281 = vector.broadcast %cst_122 : f32 to vector<24x24xf32>
    %282 = arith.mulf %280, %281 : vector<24x24xf32>
    %283 = arith.addf %282, %40 : vector<24x24xf32>
    %cst_123 = arith.constant dense<0xFF800000> : vector<24xf32>
    %284 = vector.multi_reduction <maximumf>, %283, %cst_123 [1] : vector<24x24xf32> to vector<24xf32>
    %285 = vector.shape_cast %284 : vector<24xf32> to vector<24x1xf32>
    %286 = vector.broadcast %285 : vector<24x1xf32> to vector<24x24xf32>
    %287 = arith.subf %283, %286 : vector<24x24xf32>
    %288 = math.exp %287 : vector<24x24xf32>
    %cst_124 = arith.constant dense<0.000000e+00> : vector<24xf32>
    %289 = vector.multi_reduction <add>, %288, %cst_124 [1] : vector<24x24xf32> to vector<24xf32>
    %290 = vector.shape_cast %289 : vector<24xf32> to vector<24x1xf32>
    %291 = tpu.reciprocal %290 {approx = true} : vector<24x1xf32> -> vector<24x1xf32>
    %292 = vector.broadcast %291 : vector<24x1xf32> to vector<24x24xf32>
    %293 = arith.mulf %288, %292 : vector<24x24xf32>
    %cst_125 = arith.constant dense<0.000000e+00> : vector<24x8xf32>
    %294 = tpu.matmul %293, %279, %cst_125 {dimension_numbers = #tpu.dot_dimension_numbers<[1], [0], [0], [1], [0, 0, 1, 1], [], []>} : vector<24x24xf32>, vector<24x8xf32>, vector<24x8xf32> -> vector<24x8xf32>
    %c0_126 = arith.constant 0 : index
    %c16_127 = arith.constant 16 : index
    %295 = vector.load %arg16[%c0_126, %c16_127] : memref<24x32xf32, #tpu.memory_space<vmem>>, vector<24x8xf32>
    tpu.vector_store %arg16[%c0_126, %c16_127], %294 {strides = array<i32>} : memref<24x32xf32, #tpu.memory_space<vmem>>, vector<24x8xf32>,
    %296 = vector.extract_strided_slice %238 {offsets = [0, 24], sizes = [24, 8], strides = [1, 1]} : vector<24x96xf32> to vector<24x8xf32>
    %297 = vector.extract_strided_slice %238 {offsets = [0, 56], sizes = [24, 8], strides = [1, 1]} : vector<24x96xf32> to vector<24x8xf32>
    %298 = vector.extract_strided_slice %238 {offsets = [0, 88], sizes = [24, 8], strides = [1, 1]} : vector<24x96xf32> to vector<24x8xf32>
    %cst_128 = arith.constant dense<0.000000e+00> : vector<24x24xf32>
    %299 = tpu.matmul %296, %297, %cst_128 {dimension_numbers = #tpu.dot_dimension_numbers<[1], [1], [0], [0], [0, 0, 1, 0], [], []>} : vector<24x8xf32>, vector<24x8xf32>, vector<24x24xf32> -> vector<24x24xf32>
    %cst_129 = arith.constant 0.353553385 : f32
    %300 = vector.broadcast %cst_129 : f32 to vector<24x24xf32>
    %301 = arith.mulf %299, %300 : vector<24x24xf32>
    %302 = arith.addf %301, %40 : vector<24x24xf32>
    %cst_130 = arith.constant dense<0xFF800000> : vector<24xf32>
    %303 = vector.multi_reduction <maximumf>, %302, %cst_130 [1] : vector<24x24xf32> to vector<24xf32>
    %304 = vector.shape_cast %303 : vector<24xf32> to vector<24x1xf32>
    %305 = vector.broadcast %304 : vector<24x1xf32> to vector<24x24xf32>
    %306 = arith.subf %302, %305 : vector<24x24xf32>
    %307 = math.exp %306 : vector<24x24xf32>
    %cst_131 = arith.constant dense<0.000000e+00> : vector<24xf32>
    %308 = vector.multi_reduction <add>, %307, %cst_131 [1] : vector<24x24xf32> to vector<24xf32>
    %309 = vector.shape_cast %308 : vector<24xf32> to vector<24x1xf32>
    %310 = tpu.reciprocal %309 {approx = true} : vector<24x1xf32> -> vector<24x1xf32>
    %311 = vector.broadcast %310 : vector<24x1xf32> to vector<24x24xf32>
    %312 = arith.mulf %307, %311 : vector<24x24xf32>
    %cst_132 = arith.constant dense<0.000000e+00> : vector<24x8xf32>
    %313 = tpu.matmul %312, %298, %cst_132 {dimension_numbers = #tpu.dot_dimension_numbers<[1], [0], [0], [1], [0, 0, 1, 1], [], []>} : vector<24x24xf32>, vector<24x8xf32>, vector<24x8xf32> -> vector<24x8xf32>
    %c0_133 = arith.constant 0 : index
    %c24_134 = arith.constant 24 : index
    %314 = vector.load %arg16[%c0_133, %c24_134] : memref<24x32xf32, #tpu.memory_space<vmem>>, vector<24x8xf32>
    tpu.vector_store %arg16[%c0_133, %c24_134], %313 {strides = array<i32>} : memref<24x32xf32, #tpu.memory_space<vmem>>, vector<24x8xf32>,
    %c0_135 = arith.constant 0 : index
    %c0_136 = arith.constant 0 : index
    %315 = vector.load %arg16[%c0_135, %c0_136] : memref<24x32xf32, #tpu.memory_space<vmem>>, vector<24x32xf32>
    %c1_137 = arith.constant 1 : index
    %c0_138 = arith.constant 0 : index
    %c0_139 = arith.constant 0 : index
    %316 = vector.load %arg9[%c1_137, %c0_138, %c0_139] : memref<2x32x32xf32, #tpu.memory_space<vmem>>, vector<1x32x32xf32>
    %317 = vector.shape_cast %316 : vector<1x32x32xf32> to vector<32x32xf32>
    %cst_140 = arith.constant dense<0.000000e+00> : vector<24x32xf32>
    %318 = tpu.matmul %315, %317, %cst_140 {dimension_numbers = #tpu.dot_dimension_numbers<[1], [0], [0], [1], [0, 0, 1, 1], [], []>} : vector<24x32xf32>, vector<32x32xf32>, vector<24x32xf32> -> vector<24x32xf32>
    %c1_141 = arith.constant 1 : index
    %c0_142 = arith.constant 0 : index
    %c0_143 = arith.constant 0 : index
    %319 = vector.load %arg10[%c1_141, %c0_142, %c0_143] : memref<2x1x32xf32, #tpu.memory_space<vmem>>, vector<1x1x32xf32>
    %320 = vector.shape_cast %319 : vector<1x1x32xf32> to vector<1x32xf32>
    %321 = vector.broadcast %320 : vector<1x32xf32> to vector<24x32xf32>
    %322 = arith.addf %318, %321 : vector<24x32xf32>
    %323 = arith.addf %205, %322 : vector<24x32xf32>
    %324 = vector.extract_strided_slice %207 {offsets = [2, 0], sizes = [1, 32], strides = [1, 1]} : vector<4x32xf32> to vector<1x32xf32>
    %325 = vector.extract_strided_slice %207 {offsets = [3, 0], sizes = [1, 32], strides = [1, 1]} : vector<4x32xf32> to vector<1x32xf32>
    %cst_144 = arith.constant dense<0.000000e+00> : vector<24xf32>
    %326 = vector.multi_reduction <add>, %323, %cst_144 [1] : vector<24x32xf32> to vector<24xf32>
    %327 = vector.shape_cast %326 : vector<24xf32> to vector<24x1xf32>
    %cst_145 = arith.constant 3.200000e+01 : f32
    %328 = vector.broadcast %cst_145 : f32 to vector<24x1xf32>
    %329 = arith.divf %327, %328 : vector<24x1xf32>
    %330 = vector.broadcast %329 : vector<24x1xf32> to vector<24x32xf32>
    %331 = arith.subf %323, %330 : vector<24x32xf32>
    %332 = arith.mulf %331, %331 : vector<24x32xf32>
    %cst_146 = arith.constant dense<0.000000e+00> : vector<24xf32>
    %333 = vector.multi_reduction <add>, %332, %cst_146 [1] : vector<24x32xf32> to vector<24xf32>
    %334 = vector.shape_cast %333 : vector<24xf32> to vector<24x1xf32>
    %cst_147 = arith.constant 3.200000e+01 : f32
    %335 = vector.broadcast %cst_147 : f32 to vector<24x1xf32>
    %336 = arith.divf %334, %335 : vector<24x1xf32>
    %337 = vector.broadcast %329 : vector<24x1xf32> to vector<24x32xf32>
    %338 = arith.subf %323, %337 : vector<24x32xf32>
    %cst_148 = arith.constant 9.99999974E-6 : f32
    %339 = vector.broadcast %cst_148 : f32 to vector<24x1xf32>
    %340 = arith.addf %336, %339 : vector<24x1xf32>
    %341 = math.rsqrt %340 : vector<24x1xf32>
    %342 = vector.broadcast %341 : vector<24x1xf32> to vector<24x32xf32>
    %343 = arith.mulf %338, %342 : vector<24x32xf32>
    %344 = vector.broadcast %324 : vector<1x32xf32> to vector<24x32xf32>
    %345 = arith.mulf %343, %344 : vector<24x32xf32>
    %346 = vector.broadcast %325 : vector<1x32xf32> to vector<24x32xf32>
    %347 = arith.addf %345, %346 : vector<24x32xf32>
    %c1_149 = arith.constant 1 : index
    %c0_150 = arith.constant 0 : index
    %c0_151 = arith.constant 0 : index
    %348 = vector.load %arg11[%c1_149, %c0_150, %c0_151] : memref<2x32x64xf32, #tpu.memory_space<vmem>>, vector<1x32x64xf32>
    %349 = vector.shape_cast %348 : vector<1x32x64xf32> to vector<32x64xf32>
    %cst_152 = arith.constant dense<0.000000e+00> : vector<24x64xf32>
    %350 = tpu.matmul %347, %349, %cst_152 {dimension_numbers = #tpu.dot_dimension_numbers<[1], [0], [0], [1], [0, 0, 1, 1], [], []>} : vector<24x32xf32>, vector<32x64xf32>, vector<24x64xf32> -> vector<24x64xf32>
    %c1_153 = arith.constant 1 : index
    %c0_154 = arith.constant 0 : index
    %c0_155 = arith.constant 0 : index
    %351 = vector.load %arg12[%c1_153, %c0_154, %c0_155] : memref<2x1x64xf32, #tpu.memory_space<vmem>>, vector<1x1x64xf32>
    %352 = vector.shape_cast %351 : vector<1x1x64xf32> to vector<1x64xf32>
    %353 = vector.broadcast %352 : vector<1x64xf32> to vector<24x64xf32>
    %354 = arith.addf %350, %353 : vector<24x64xf32>
    %cst_156 = arith.constant 1.702000e+00 : f32
    %355 = vector.broadcast %cst_156 : f32 to vector<24x64xf32>
    %356 = arith.mulf %355, %354 : vector<24x64xf32>
    %357 = arith.negf %356 : vector<24x64xf32>
    %358 = math.exp %357 : vector<24x64xf32>
    %cst_157 = arith.constant 1.000000e+00 : f32
    %359 = vector.broadcast %cst_157 : f32 to vector<24x64xf32>
    %360 = arith.addf %359, %358 : vector<24x64xf32>
    %361 = arith.divf %359, %360 : vector<24x64xf32>
    %362 = arith.mulf %354, %361 : vector<24x64xf32>
    %c1_158 = arith.constant 1 : index
    %c0_159 = arith.constant 0 : index
    %c0_160 = arith.constant 0 : index
    %363 = vector.load %arg13[%c1_158, %c0_159, %c0_160] : memref<2x64x32xf32, #tpu.memory_space<vmem>>, vector<1x64x32xf32>
    %364 = vector.shape_cast %363 : vector<1x64x32xf32> to vector<64x32xf32>
    %cst_161 = arith.constant dense<0.000000e+00> : vector<24x32xf32>
    %365 = tpu.matmul %362, %364, %cst_161 {dimension_numbers = #tpu.dot_dimension_numbers<[1], [0], [0], [1], [0, 0, 1, 1], [], []>} : vector<24x64xf32>, vector<64x32xf32>, vector<24x32xf32> -> vector<24x32xf32>
    %c1_162 = arith.constant 1 : index
    %c0_163 = arith.constant 0 : index
    %c0_164 = arith.constant 0 : index
    %366 = vector.load %arg14[%c1_162, %c0_163, %c0_164] : memref<2x1x32xf32, #tpu.memory_space<vmem>>, vector<1x1x32xf32>
    %367 = vector.shape_cast %366 : vector<1x1x32xf32> to vector<1x32xf32>
    %368 = vector.broadcast %367 : vector<1x32xf32> to vector<24x32xf32>
    %369 = arith.addf %365, %368 : vector<24x32xf32>
    %370 = arith.addf %323, %369 : vector<24x32xf32>
    %371 = vector.extract_strided_slice %370 {offsets = [16, 0], sizes = [1, 32], strides = [1, 1]} : vector<24x32xf32> to vector<1x32xf32>
    %372 = vector.extract_strided_slice %10 {offsets = [2, 0], sizes = [1, 32], strides = [1, 1]} : vector<4x32xf32> to vector<1x32xf32>
    %373 = vector.extract_strided_slice %10 {offsets = [3, 0], sizes = [1, 32], strides = [1, 1]} : vector<4x32xf32> to vector<1x32xf32>
    %cst_165 = arith.constant dense<0.000000e+00> : vector<1xf32>
    %374 = vector.multi_reduction <add>, %371, %cst_165 [1] : vector<1x32xf32> to vector<1xf32>
    %375 = vector.shape_cast %374 : vector<1xf32> to vector<1x1xf32>
    %cst_166 = arith.constant 3.200000e+01 : f32
    %376 = vector.broadcast %cst_166 : f32 to vector<1x1xf32>
    %377 = arith.divf %375, %376 : vector<1x1xf32>
    %378 = vector.broadcast %377 : vector<1x1xf32> to vector<1x32xf32>
    %379 = arith.subf %371, %378 : vector<1x32xf32>
    %380 = arith.mulf %379, %379 : vector<1x32xf32>
    %cst_167 = arith.constant dense<0.000000e+00> : vector<1xf32>
    %381 = vector.multi_reduction <add>, %380, %cst_167 [1] : vector<1x32xf32> to vector<1xf32>
    %382 = vector.shape_cast %381 : vector<1xf32> to vector<1x1xf32>
    %cst_168 = arith.constant 3.200000e+01 : f32
    %383 = vector.broadcast %cst_168 : f32 to vector<1x1xf32>
    %384 = arith.divf %382, %383 : vector<1x1xf32>
    %385 = vector.broadcast %377 : vector<1x1xf32> to vector<1x32xf32>
    %386 = arith.subf %371, %385 : vector<1x32xf32>
    %cst_169 = arith.constant 9.99999974E-6 : f32
    %387 = vector.broadcast %cst_169 : f32 to vector<1x1xf32>
    %388 = arith.addf %384, %387 : vector<1x1xf32>
    %389 = math.rsqrt %388 : vector<1x1xf32>
    %390 = vector.broadcast %389 : vector<1x1xf32> to vector<1x32xf32>
    %391 = arith.mulf %386, %390 : vector<1x32xf32>
    %392 = arith.mulf %391, %372 : vector<1x32xf32>
    %393 = arith.addf %392, %373 : vector<1x32xf32>
    %c0_170 = arith.constant 0 : index
    %c0_171 = arith.constant 0 : index
    %394 = vector.load %arg5[%c0_170, %c0_171] : memref<32x16xf32, #tpu.memory_space<vmem>>, vector<32x16xf32>
    %cst_172 = arith.constant dense<0.000000e+00> : vector<1x16xf32>
    %395 = tpu.matmul %393, %394, %cst_172 {dimension_numbers = #tpu.dot_dimension_numbers<[1], [0], [0], [1], [0, 0, 1, 1], [], []>} : vector<1x32xf32>, vector<32x16xf32>, vector<1x16xf32> -> vector<1x16xf32>
    %c0_173 = arith.constant 0 : index
    %c0_174 = arith.constant 0 : index
    %c0_175 = arith.constant 0 : index
    %396 = vector.load %arg15[%c0_173, %c0_174, %c0_175] : memref<1x1x16xf32, #tpu.memory_space<vmem>>, vector<1x1x16xf32>
    %397 = vector.shape_cast %396 : vector<1x1x16xf32> to vector<1x16xf32>
    %398 = vector.shape_cast %395 : vector<1x16xf32> to vector<1x1x16xf32>
    tpu.vector_store %arg15[%c0_173, %c0_174, %c0_175], %398 {strides = array<i32>} : memref<1x1x16xf32, #tpu.memory_space<vmem>>, vector<1x1x16xf32>,
    return
  }
  func.func @transform_0(%arg0: i32) -> (i32, i32, i32) {
    %c0_i32 = arith.constant 0 : i32
    %c0_i32_0 = arith.constant 0 : i32
    %c0_i32_1 = arith.constant 0 : i32
    return %arg0, %c0_i32, %c0_i32_0 : i32, i32, i32
  }
  func.func @transform_1(%arg0: i32) -> (i32, i32) {
    %c0_i32 = arith.constant 0 : i32
    %c0_i32_0 = arith.constant 0 : i32
    %c0_i32_1 = arith.constant 0 : i32
    return %c0_i32, %c0_i32_0 : i32, i32
  }
  func.func @transform_2(%arg0: i32) -> (i32, i32) {
    %c0_i32 = arith.constant 0 : i32
    %c0_i32_0 = arith.constant 0 : i32
    %c0_i32_1 = arith.constant 0 : i32
    return %c0_i32, %c0_i32_0 : i32, i32
  }
  func.func @transform_3(%arg0: i32) -> (i32, i32) {
    %c0_i32 = arith.constant 0 : i32
    %c0_i32_0 = arith.constant 0 : i32
    %c0_i32_1 = arith.constant 0 : i32
    return %c0_i32, %c0_i32_0 : i32, i32
  }
  func.func @transform_4(%arg0: i32) -> (i32, i32) {
    %c0_i32 = arith.constant 0 : i32
    %c0_i32_0 = arith.constant 0 : i32
    %c0_i32_1 = arith.constant 0 : i32
    return %c0_i32, %c0_i32_0 : i32, i32
  }
  func.func @transform_5(%arg0: i32) -> (i32, i32, i32) {
    %c0_i32 = arith.constant 0 : i32
    %c0_i32_0 = arith.constant 0 : i32
    %c0_i32_1 = arith.constant 0 : i32
    %c0_i32_2 = arith.constant 0 : i32
    return %c0_i32, %c0_i32_0, %c0_i32_1 : i32, i32, i32
  }
  func.func @transform_6(%arg0: i32) -> (i32, i32, i32) {
    %c0_i32 = arith.constant 0 : i32
    %c0_i32_0 = arith.constant 0 : i32
    %c0_i32_1 = arith.constant 0 : i32
    %c0_i32_2 = arith.constant 0 : i32
    return %c0_i32, %c0_i32_0, %c0_i32_1 : i32, i32, i32
  }
  func.func @transform_7(%arg0: i32) -> (i32, i32, i32) {
    %c0_i32 = arith.constant 0 : i32
    %c0_i32_0 = arith.constant 0 : i32
    %c0_i32_1 = arith.constant 0 : i32
    %c0_i32_2 = arith.constant 0 : i32
    return %c0_i32, %c0_i32_0, %c0_i32_1 : i32, i32, i32
  }
  func.func @transform_8(%arg0: i32) -> (i32, i32, i32) {
    %c0_i32 = arith.constant 0 : i32
    %c0_i32_0 = arith.constant 0 : i32
    %c0_i32_1 = arith.constant 0 : i32
    %c0_i32_2 = arith.constant 0 : i32
    return %c0_i32, %c0_i32_0, %c0_i32_1 : i32, i32, i32
  }
  func.func @transform_9(%arg0: i32) -> (i32, i32, i32) {
    %c0_i32 = arith.constant 0 : i32
    %c0_i32_0 = arith.constant 0 : i32
    %c0_i32_1 = arith.constant 0 : i32
    %c0_i32_2 = arith.constant 0 : i32
    return %c0_i32, %c0_i32_0, %c0_i32_1 : i32, i32, i32
  }
  func.func @transform_10(%arg0: i32) -> (i32, i32, i32) {
    %c0_i32 = arith.constant 0 : i32
    %c0_i32_0 = arith.constant 0 : i32
    %c0_i32_1 = arith.constant 0 : i32
    %c0_i32_2 = arith.constant 0 : i32
    return %c0_i32, %c0_i32_0, %c0_i32_1 : i32, i32, i32
  }
  func.func @transform_11(%arg0: i32) -> (i32, i32, i32) {
    %c0_i32 = arith.constant 0 : i32
    %c0_i32_0 = arith.constant 0 : i32
    %c0_i32_1 = arith.constant 0 : i32
    %c0_i32_2 = arith.constant 0 : i32
    return %c0_i32, %c0_i32_0, %c0_i32_1 : i32, i32, i32
  }
  func.func @transform_12(%arg0: i32) -> (i32, i32, i32) {
    %c0_i32 = arith.constant 0 : i32
    %c0_i32_0 = arith.constant 0 : i32
    %c0_i32_1 = arith.constant 0 : i32
    %c0_i32_2 = arith.constant 0 : i32
    return %c0_i32, %c0_i32_0, %c0_i32_1 : i32, i32, i32
  }
  func.func @transform_13(%arg0: i32) -> (i32, i32, i32) {
    %c0_i32 = arith.constant 0 : i32
    %c0_i32_0 = arith.constant 0 : i32
    %c0_i32_1 = arith.constant 0 : i32
    %c0_i32_2 = arith.constant 0 : i32
    return %c0_i32, %c0_i32_0, %c0_i32_1 : i32, i32, i32
  }
  func.func @transform_14(%arg0: i32) -> (i32, i32, i32) {
    %c0_i32 = arith.constant 0 : i32
    %c0_i32_0 = arith.constant 0 : i32
    %c0_i32_1 = arith.constant 0 : i32
    return %arg0, %c0_i32, %c0_i32_0 : i32, i32, i32
  }
}

</mosaic_0001>

<llo_original>
// kernel: clip_image_features.1
$region0: #{clip_image_features.1}
  #allocation0 [shape = 'u32[]', space=smem, size = 0x4, offset = 0x4, fixed_abs, tag = 'smem constant byte address 0x4 - core index']
  #allocation1 [shape = 'u32[144,128]{1,0:T(1,128)}', space=vmem, size = 0x12000, scoped, tag = 'internal scratch']
  #allocation2 [shape = 'f32[24,32]{1,0:T(8,128)}', space=vmem, size = 0x3000, scoped, tag = 'scratch operand']
  %s0 = inlined_call_operand.vmem [shape: f32[2,16,192], index: 0, kind: input, shape index: {}]
  %s1 = inlined_call_operand.vmem [shape: f32[24,32], index: 1, kind: input, shape index: {}]
  %s2 = inlined_call_operand.vmem [shape: f32[192,32], index: 2, kind: input, shape index: {}]
  %s3 = inlined_call_operand.vmem [shape: f32[4,32], index: 3, kind: input, shape index: {}]
  %s4 = inlined_call_operand.vmem [shape: f32[32,16], index: 4, kind: input, shape index: {}]
  %s5 = inlined_call_operand.vmem [shape: f32[2,4,32], index: 5, kind: input, shape index: {}]
  %s6 = inlined_call_operand.vmem [shape: f32[2,32,96], index: 6, kind: input, shape index: {}]
  %s7 = inlined_call_operand.vmem [shape: f32[2,1,96], index: 7, kind: input, shape index: {}]
  %s8 = inlined_call_operand.vmem [shape: f32[2,32,32], index: 8, kind: input, shape index: {}]
  %s9 = inlined_call_operand.vmem [shape: f32[2,1,32], index: 9, kind: input, shape index: {}]
  %s10 = inlined_call_operand.vmem [shape: f32[2,32,64], index: 10, kind: input, shape index: {}]
  %s11 = inlined_call_operand.vmem [shape: f32[2,1,64], index: 11, kind: input, shape index: {}]
  %s12 = inlined_call_operand.vmem [shape: f32[2,64,32], index: 12, kind: input, shape index: {}]
  %s13 = inlined_call_operand.vmem [shape: f32[2,1,32], index: 13, kind: input, shape index: {}]
  %s14 = inlined_call_operand.hbm [shape: f32[2,1,16], index: 14, kind: output, shape index: {}]
  %s15 = sld [smem:[#allocation0]]
  $region89: #{clip_image_features.1} parent=0
    _
  %s17 = ssub.s32 1, %s15
  %s18 = scalar_select 0, %s17, %s15
  $region1: #{clip_image_features.1} parent=0
    #allocation3 [shape = 'u8[1024]{0}', space=vmem, size = 0x400, scoped, tag = 'output window, operand 0']
    #allocation4 [shape = 's32[2]{0}', space=sflag, size = 0x8, scoped, tag = 'scoped memory for clip_image_features.1']
    %19 = vsyncpa [#allocation4], 0
    %s20 = scalar_lea.sflag [#allocation4], 1
    %21 = vsyncpa %s20, 0
    loop: start=0, step=1, limit=4
    $region2: #{clip_image_features.1} parent=1 // loop_pre_header
      _
    $region3: #{clip_image_features.1} parent=1 // loop_header
      %s23 = sphi 0, %s27
      %p24 = scmp.ge.s32.totalorder %s23, 4
      %s33 = sphi 0, %s35
      %s36 = sphi 0, %s33
      %s37 = sphi 0, %s36
      %s53 = sphi 0, %s37
      %s57 = sphi 0, %s57
      %s59 = sphi 0, %s57
      %s60 = sphi 0, %s59
      %s74 = sphi 0, %s60
      %s78 = sphi 0, %s78
      %s80 = sphi 0, %s78
      %s81 = sphi 0, %s80
      %s95 = sphi 0, %s81
      %s99 = sphi 0, %s99
      %s101 = sphi 0, %s99
      %s102 = sphi 0, %s101
      %s116 = sphi 0, %s102
      %s120 = sphi 0, %s120
      %s122 = sphi 0, %s120
      %s123 = sphi 0, %s122
      %s137 = sphi 0, %s123
      %s141 = sphi 0, %s141
      %s143 = sphi 0, %s141
      %s144 = sphi 0, %s143
      %s158 = sphi 0, %s144
      %s162 = sphi 0, %s162
      %s164 = sphi 0, %s162
      %s165 = sphi 0, %s164
      %s179 = sphi 0, %s165
      %s183 = sphi 0, %s183
      %s185 = sphi 0, %s183
      %s186 = sphi 0, %s185
      %s200 = sphi 0, %s186
      %s204 = sphi 0, %s204
      %s206 = sphi 0, %s204
      %s207 = sphi 0, %s206
      %s221 = sphi 0, %s207
      %s225 = sphi 0, %s225
      %s227 = sphi 0, %s225
      %s228 = sphi 0, %s227
      %s242 = sphi 0, %s228
      %s246 = sphi 0, %s246
      %s248 = sphi 0, %s246
      %s249 = sphi 0, %s248
      %s263 = sphi 0, %s249
      %s267 = sphi 0, %s267
      %s269 = sphi 0, %s267
      %s270 = sphi 0, %s269
      %s284 = sphi 0, %s270
      %s288 = sphi 0, %s288
      %s290 = sphi 0, %s288
      %s291 = sphi 0, %s290
      %s305 = sphi 0, %s291
      %s309 = sphi 0, %s309
      %s311 = sphi 0, %s309
      %s312 = sphi 0, %s311
      %s326 = sphi 0, %s312
      %s332 = sphi 0, %s334
      %s335 = sphi 0, %s332
      %s336 = sphi 0, %s335
      %s352 = sphi 0, %s336
    $region4: #{clip_image_features.1} parent=1 // loop_header_branch
      %26 = sbr.rel (%p24) target = $region8
    $region5: #{clip_image_features.1} parent=1 // loop_body
      %s28 = ssub.s32 %s23, 1
      %s29 = ssub.s32 %s23, 2
      %s30 = sadd.s32 %s23, 1
      %s31 = ssub.s32 %s23, %s30
      %p32 = scmp.eq.s32.totalorder %s31, 0
      %s34 = sadd.s32 %s33, 1
      %s35 = scalar_select %p32, %s33, %s34
      %p38 = pneg %p32
      %p39 = scmp.eq.s32.totalorder %s23, 1
      %p40 = por %p38, %p39
      %p41 = scmp.ne.s32.totalorder %s33, %s36
      %p42 = scmp.eq.s32.totalorder %s23, 0
      %p43 = por %p41, %p42
      %p44 = scmp.ne.s32.totalorder %s33, %s36
      %p45 = scmp.eq.s32.totalorder %s28, 1
      %p46 = por %p44, %p45
      %p47 = scmp.ne.s32.totalorder %s36, %s37
      %p48 = scmp.eq.s32.totalorder %s28, 0
      %p49 = por %p47, %p48
      %p50 = scmp.ne.s32.totalorder %s36, %s37
      %p51 = scmp.eq.s32.totalorder %s29, 1
      %p52 = por %p50, %p51
      %p54 = scmp.ne.s32.totalorder %s37, %s53
      %p55 = scmp.eq.s32.totalorder %s29, 0
      %p56 = por %p54, %p55
      %s58 = sadd.s32 %s57, 1
      %p61 = scmp.eq.s32.totalorder %s23, 1
      %p62 = scmp.ne.s32.totalorder %s57, %s59
      %p63 = scmp.eq.s32.totalorder %s23, 0
      %p64 = por %p62, %p63
      %p65 = scmp.ne.s32.totalorder %s57, %s59
      %p66 = scmp.eq.s32.totalorder %s28, 1
      %p67 = por %p65, %p66
      %p68 = scmp.ne.s32.totalorder %s59, %s60
      %p69 = scmp.eq.s32.totalorder %s28, 0
      %p70 = por %p68, %p69
      %p71 = scmp.ne.s32.totalorder %s59, %s60
      %p72 = scmp.eq.s32.totalorder %s29, 1
      %p73 = por %p71, %p72
      %p75 = scmp.ne.s32.totalorder %s60, %s74
      %p76 = scmp.eq.s32.totalorder %s29, 0
      %p77 = por %p75, %p76
      %s79 = sadd.s32 %s78, 1
      %p82 = scmp.eq.s32.totalorder %s23, 1
      %p83 = scmp.ne.s32.totalorder %s78, %s80
      %p84 = scmp.eq.s32.totalorder %s23, 0
      %p85 = por %p83, %p84
      %p86 = scmp.ne.s32.totalorder %s78, %s80
      %p87 = scmp.eq.s32.totalorder %s28, 1
      %p88 = por %p86, %p87
      %p89 = scmp.ne.s32.totalorder %s80, %s81
      %p90 = scmp.eq.s32.totalorder %s28, 0
      %p91 = por %p89, %p90
      %p92 = scmp.ne.s32.totalorder %s80, %s81
      %p93 = scmp.eq.s32.totalorder %s29, 1
      %p94 = por %p92, %p93
      %p96 = scmp.ne.s32.totalorder %s81, %s95
      %p97 = scmp.eq.s32.totalorder %s29, 0
      %p98 = por %p96, %p97
      %s100 = sadd.s32 %s99, 1
      %p103 = scmp.eq.s32.totalorder %s23, 1
      %p104 = scmp.ne.s32.totalorder %s99, %s101
      %p105 = scmp.eq.s32.totalorder %s23, 0
      %p106 = por %p104, %p105
      %p107 = scmp.ne.s32.totalorder %s99, %s101
      %p108 = scmp.eq.s32.totalorder %s28, 1
      %p109 = por %p107, %p108
      %p110 = scmp.ne.s32.totalorder %s101, %s102
      %p111 = scmp.eq.s32.totalorder %s28, 0
      %p112 = por %p110, %p111
      %p113 = scmp.ne.s32.totalorder %s101, %s102
      %p114 = scmp.eq.s32.totalorder %s29, 1
      %p115 = por %p113, %p114
      %p117 = scmp.ne.s32.totalorder %s102, %s116
      %p118 = scmp.eq.s32.totalorder %s29, 0
      %p119 = por %p117, %p118
      %s121 = sadd.s32 %s120, 1
      %p124 = scmp.eq.s32.totalorder %s23, 1
      %p125 = scmp.ne.s32.totalorder %s120, %s122
      %p126 = scmp.eq.s32.totalorder %s23, 0
      %p127 = por %p125, %p126
      %p128 = scmp.ne.s32.totalorder %s120, %s122
      %p129 = scmp.eq.s32.totalorder %s28, 1
      %p130 = por %p128, %p129
      %p131 = scmp.ne.s32.totalorder %s122, %s123
      %p132 = scmp.eq.s32.totalorder %s28, 0
      %p133 = por %p131, %p132
      %p134 = scmp.ne.s32.totalorder %s122, %s123
      %p135 = scmp.eq.s32.totalorder %s29, 1
      %p136 = por %p134, %p135
      %p138 = scmp.ne.s32.totalorder %s123, %s137
      %p139 = scmp.eq.s32.totalorder %s29, 0
      %p140 = por %p138, %p139
      %s142 = sadd.s32 %s141, 1
      %p145 = scmp.eq.s32.totalorder %s23, 1
      %p146 = scmp.ne.s32.totalorder %s141, %s143
      %p147 = scmp.eq.s32.totalorder %s23, 0
      %p148 = por %p146, %p147
      %p149 = scmp.ne.s32.totalorder %s141, %s143
      %p150 = scmp.eq.s32.totalorder %s28, 1
      %p151 = por %p149, %p150
      %p152 = scmp.ne.s32.totalorder %s143, %s144
      %p153 = scmp.eq.s32.totalorder %s28, 0
      %p154 = por %p152, %p153
      %p155 = scmp.ne.s32.totalorder %s143, %s144
      %p156 = scmp.eq.s32.totalorder %s29, 1
      %p157 = por %p155, %p156
      %p159 = scmp.ne.s32.totalorder %s144, %s158
      %p160 = scmp.eq.s32.totalorder %s29, 0
      %p161 = por %p159, %p160
      %s163 = sadd.s32 %s162, 1
      %p166 = scmp.eq.s32.totalorder %s23, 1
      %p167 = scmp.ne.s32.totalorder %s162, %s164
      %p168 = scmp.eq.s32.totalorder %s23, 0
      %p169 = por %p167, %p168
      %p170 = scmp.ne.s32.totalorder %s162, %s164
      %p171 = scmp.eq.s32.totalorder %s28, 1
      %p172 = por %p170, %p171
      %p173 = scmp.ne.s32.totalorder %s164, %s165
      %p174 = scmp.eq.s32.totalorder %s28, 0
      %p175 = por %p173, %p174
      %p176 = scmp.ne.s32.totalorder %s164, %s165
      %p177 = scmp.eq.s32.totalorder %s29, 1
      %p178 = por %p176, %p177
      %p180 = scmp.ne.s32.totalorder %s165, %s179
      %p181 = scmp.eq.s32.totalorder %s29, 0
      %p182 = por %p180, %p181
      %s184 = sadd.s32 %s183, 1
      %p187 = scmp.eq.s32.totalorder %s23, 1
      %p188 = scmp.ne.s32.totalorder %s183, %s185
      %p189 = scmp.eq.s32.totalorder %s23, 0
      %p190 = por %p188, %p189
      %p191 = scmp.ne.s32.totalorder %s183, %s185
      %p192 = scmp.eq.s32.totalorder %s28, 1
      %p193 = por %p191, %p192
      %p194 = scmp.ne.s32.totalorder %s185, %s186
      %p195 = scmp.eq.s32.totalorder %s28, 0
      %p196 = por %p194, %p195
      %p197 = scmp.ne.s32.totalorder %s185, %s186
      %p198 = scmp.eq.s32.totalorder %s29, 1
      %p199 = por %p197, %p198
      %p201 = scmp.ne.s32.totalorder %s186, %s200
      %p202 = scmp.eq.s32.totalorder %s29, 0
      %p203 = por %p201, %p202
      %s205 = sadd.s32 %s204, 1
      %p208 = scmp.eq.s32.totalorder %s23, 1
      %p209 = scmp.ne.s32.totalorder %s204, %s206
      %p210 = scmp.eq.s32.totalorder %s23, 0
      %p211 = por %p209, %p210
      %p212 = scmp.ne.s32.totalorder %s204, %s206
      %p213 = scmp.eq.s32.totalorder %s28, 1
      %p214 = por %p212, %p213
      %p215 = scmp.ne.s32.totalorder %s206, %s207
      %p216 = scmp.eq.s32.totalorder %s28, 0
      %p217 = por %p215, %p216
      %p218 = scmp.ne.s32.totalorder %s206, %s207
      %p219 = scmp.eq.s32.totalorder %s29, 1
      %p220 = por %p218, %p219
      %p222 = scmp.ne.s32.totalorder %s207, %s221
      %p223 = scmp.eq.s32.totalorder %s29, 0
      %p224 = por %p222, %p223
      %s226 = sadd.s32 %s225, 1
      %p229 = scmp.eq.s32.totalorder %s23, 1
      %p230 = scmp.ne.s32.totalorder %s225, %s227
      %p231 = scmp.eq.s32.totalorder %s23, 0
      %p232 = por %p230, %p231
      %p233 = scmp.ne.s32.totalorder %s225, %s227
      %p234 = scmp.eq.s32.totalorder %s28, 1
      %p235 = por %p233, %p234
      %p236 = scmp.ne.s32.totalorder %s227, %s228
      %p237 = scmp.eq.s32.totalorder %s28, 0
      %p238 = por %p236, %p237
      %p239 = scmp.ne.s32.totalorder %s227, %s228
      %p240 = scmp.eq.s32.totalorder %s29, 1
      %p241 = por %p239, %p240
      %p243 = scmp.ne.s32.totalorder %s228, %s242
      %p244 = scmp.eq.s32.totalorder %s29, 0
      %p245 = por %p243, %p244
      %s247 = sadd.s32 %s246, 1
      %p250 = scmp.eq.s32.totalorder %s23, 1
      %p251 = scmp.ne.s32.totalorder %s246, %s248
      %p252 = scmp.eq.s32.totalorder %s23, 0
      %p253 = por %p251, %p252
      %p254 = scmp.ne.s32.totalorder %s246, %s248
      %p255 = scmp.eq.s32.totalorder %s28, 1
      %p256 = por %p254, %p255
      %p257 = scmp.ne.s32.totalorder %s248, %s249
      %p258 = scmp.eq.s32.totalorder %s28, 0
      %p259 = por %p257, %p258
      %p260 = scmp.ne.s32.totalorder %s248, %s249
      %p261 = scmp.eq.s32.totalorder %s29, 1
      %p262 = por %p260, %p261
      %p264 = scmp.ne.s32.totalorder %s249, %s263
      %p265 = scmp.eq.s32.totalorder %s29, 0
      %p266 = por %p264, %p265
      %s268 = sadd.s32 %s267, 1
      %p271 = scmp.eq.s32.totalorder %s23, 1
      %p272 = scmp.ne.s32.totalorder %s267, %s269
      %p273 = scmp.eq.s32.totalorder %s23, 0
      %p274 = por %p272, %p273
      %p275 = scmp.ne.s32.totalorder %s267, %s269
      %p276 = scmp.eq.s32.totalorder %s28, 1
      %p277 = por %p275, %p276
      %p278 = scmp.ne.s32.totalorder %s269, %s270
      %p279 = scmp.eq.s32.totalorder %s28, 0
      %p280 = por %p278, %p279
      %p281 = scmp.ne.s32.totalorder %s269, %s270
      %p282 = scmp.eq.s32.totalorder %s29, 1
      %p283 = por %p281, %p282
      %p285 = scmp.ne.s32.totalorder %s270, %s284
      %p286 = scmp.eq.s32.totalorder %s29, 0
      %p287 = por %p285, %p286
      %s289 = sadd.s32 %s288, 1
      %p292 = scmp.eq.s32.totalorder %s23, 1
      %p293 = scmp.ne.s32.totalorder %s288, %s290
      %p294 = scmp.eq.s32.totalorder %s23, 0
      %p295 = por %p293, %p294
      %p296 = scmp.ne.s32.totalorder %s288, %s290
      %p297 = scmp.eq.s32.totalorder %s28, 1
      %p298 = por %p296, %p297
      %p299 = scmp.ne.s32.totalorder %s290, %s291
      %p300 = scmp.eq.s32.totalorder %s28, 0
      %p301 = por %p299, %p300
      %p302 = scmp.ne.s32.totalorder %s290, %s291
      %p303 = scmp.eq.s32.totalorder %s29, 1
      %p304 = por %p302, %p303
      %p306 = scmp.ne.s32.totalorder %s291, %s305
      %p307 = scmp.eq.s32.totalorder %s29, 0
      %p308 = por %p306, %p307
      %s310 = sadd.s32 %s309, 1
      %p313 = scmp.eq.s32.totalorder %s23, 1
      %p314 = scmp.ne.s32.totalorder %s309, %s311
      %p315 = scmp.eq.s32.totalorder %s23, 0
      %p316 = por %p314, %p315
      %p317 = scmp.ne.s32.totalorder %s309, %s311
      %p318 = scmp.eq.s32.totalorder %s28, 1
      %p319 = por %p317, %p318
      %p320 = scmp.ne.s32.totalorder %s311, %s312
      %p321 = scmp.eq.s32.totalorder %s28, 0
      %p322 = por %p320, %p321
      %p323 = scmp.ne.s32.totalorder %s311, %s312
      %p324 = scmp.eq.s32.totalorder %s29, 1
      %p325 = por %p323, %p324
      %p327 = scmp.ne.s32.totalorder %s312, %s326
      %p328 = scmp.eq.s32.totalorder %s29, 0
      %p329 = por %p327, %p328
      %s330 = ssub.s32 %s23, %s30
      %p331 = scmp.eq.s32.totalorder %s330, 0
      %s333 = sadd.s32 %s332, 1
      %s334 = scalar_select %p331, %s332, %s333
      %p337 = pneg %p331
      %p338 = scmp.eq.s32.totalorder %s23, 1
      %p339 = por %p337, %p338
      %p340 = scmp.ne.s32.totalorder %s332, %s335
      %p341 = scmp.eq.s32.totalorder %s23, 0
      %p342 = por %p340, %p341
      %p343 = scmp.ne.s32.totalorder %s332, %s335
      %p344 = scmp.eq.s32.totalorder %s28, 1
      %p345 = por %p343, %p344
      %p346 = scmp.ne.s32.totalorder %s335, %s336
      %p347 = scmp.eq.s32.totalorder %s28, 0
      %p348 = por %p346, %p347
      %p349 = scmp.ne.s32.totalorder %s335, %s336
      %p350 = scmp.eq.s32.totalorder %s29, 1
      %p351 = por %p349, %p350
      %p353 = scmp.ne.s32.totalorder %s336, %s352
      %p354 = scmp.eq.s32.totalorder %s29, 0
      %p355 = por %p353, %p354
      %p356 = scmp.le.s32.totalorder 1, %s23
      %p357 = scmp.lt.s32.totalorder %s23, 3
      %p358 = pnand %p356, %p357
      %p359 = pneg %p358
      // Predicated region
      $region9: #{clip_image_features.1} parent=5 // pred_check
        _
      $region10: #{clip_image_features.1} parent=5 // pred_check_branch
        %361 = sbr.rel (%p358) target = $region12
      $region11: #{clip_image_features.1} parent=5 // pred_region
        %s362 = ssub.s32 %s23, 1
        // Predicated region
        $region13: #{clip_image_features.1} parent=11 // pred_check
          %p363 = pneg %p70
        $region14: #{clip_image_features.1} parent=11 // pred_check_branch
          %365 = sbr.rel (%p363) target = $region16
        $region15: #{clip_image_features.1} parent=11 // pred_region
          _
        $region16: #{clip_image_features.1} parent=11 // pred_fallthru
          _
        // Predicated region
        $region17: #{clip_image_features.1} parent=11 // pred_check
          %p366 = pneg %p91
        $region18: #{clip_image_features.1} parent=11 // pred_check_branch
          %368 = sbr.rel (%p366) target = $region20
        $region19: #{clip_image_features.1} parent=11 // pred_region
          _
        $region20: #{clip_image_features.1} parent=11 // pred_fallthru
          _
        // Predicated region
        $region21: #{clip_image_features.1} parent=11 // pred_check
          %p369 = pneg %p112
        $region22: #{clip_image_features.1} parent=11 // pred_check_branch
          %371 = sbr.rel (%p369) target = $region24
        $region23: #{clip_image_features.1} parent=11 // pred_region
          _
        $region24: #{clip_image_features.1} parent=11 // pred_fallthru
          _
        // Predicated region
        $region25: #{clip_image_features.1} parent=11 // pred_check
          %p372 = pneg %p133
        $region26: #{clip_image_features.1} parent=11 // pred_check_branch
          %374 = sbr.rel (%p372) target = $region28
        $region27: #{clip_image_features.1} parent=11 // pred_region
          _
        $region28: #{clip_image_features.1} parent=11 // pred_fallthru
          _
        // Predicated region
        $region29: #{clip_image_features.1} parent=11 // pred_check
          %p375 = pneg %p154
        $region30: #{clip_image_features.1} parent=11 // pred_check_branch
          %377 = sbr.rel (%p375) target = $region32
        $region31: #{clip_image_features.1} parent=11 // pred_region
          _
        $region32: #{clip_image_features.1} parent=11 // pred_fallthru
          _
        // Predicated region
        $region33: #{clip_image_features.1} parent=11 // pred_check
          %p378 = pneg %p175
        $region34: #{clip_image_features.1} parent=11 // pred_check_branch
          %380 = sbr.rel (%p378) target = $region36
        $region35: #{clip_image_features.1} parent=11 // pred_region
          _
        $region36: #{clip_image_features.1} parent=11 // pred_fallthru
          _
        // Predicated region
        $region37: #{clip_image_features.1} parent=11 // pred_check
          %p381 = pneg %p196
        $region38: #{clip_image_features.1} parent=11 // pred_check_branch
          %383 = sbr.rel (%p381) target = $region40
        $region39: #{clip_image_features.1} parent=11 // pred_region
          _
        $region40: #{clip_image_features.1} parent=11 // pred_fallthru
          _
        // Predicated region
        $region41: #{clip_image_features.1} parent=11 // pred_check
          %p384 = pneg %p217
        $region42: #{clip_image_features.1} parent=11 // pred_check_branch
          %386 = sbr.rel (%p384) target = $region44
        $region43: #{clip_image_features.1} parent=11 // pred_region
          _
        $region44: #{clip_image_features.1} parent=11 // pred_fallthru
          _
        // Predicated region
        $region45: #{clip_image_features.1} parent=11 // pred_check
          %p387 = pneg %p238
        $region46: #{clip_image_features.1} parent=11 // pred_check_branch
          %389 = sbr.rel (%p387) target = $region48
        $region47: #{clip_image_features.1} parent=11 // pred_region
          _
        $region48: #{clip_image_features.1} parent=11 // pred_fallthru
          _
        // Predicated region
        $region49: #{clip_image_features.1} parent=11 // pred_check
          %p390 = pneg %p259
        $region50: #{clip_image_features.1} parent=11 // pred_check_branch
          %392 = sbr.rel (%p390) target = $region52
        $region51: #{clip_image_features.1} parent=11 // pred_region
          _
        $region52: #{clip_image_features.1} parent=11 // pred_fallthru
          _
        // Predicated region
        $region53: #{clip_image_features.1} parent=11 // pred_check
          %p393 = pneg %p280
        $region54: #{clip_image_features.1} parent=11 // pred_check_branch
          %395 = sbr.rel (%p393) target = $region56
        $region55: #{clip_image_features.1} parent=11 // pred_region
          _
        $region56: #{clip_image_features.1} parent=11 // pred_fallthru
          _
        // Predicated region
        $region57: #{clip_image_features.1} parent=11 // pred_check
          %p396 = pneg %p301
        $region58: #{clip_image_features.1} parent=11 // pred_check_branch
          %398 = sbr.rel (%p396) target = $region60
        $region59: #{clip_image_features.1} parent=11 // pred_region
          _
        $region60: #{clip_image_features.1} parent=11 // pred_fallthru
          _
        // Predicated region
        $region61: #{clip_image_features.1} parent=11 // pred_check
          %p399 = pneg %p322
        $region62: #{clip_image_features.1} parent=11 // pred_check_branch
          %401 = sbr.rel (%p399) target = $region64
        $region63: #{clip_image_features.1} parent=11 // pred_region
          _
        $region64: #{clip_image_features.1} parent=11 // pred_fallthru
          _
      $region12: #{clip_image_features.1} parent=5 // pred_fallthru
        _
      %p402 = scmp.lt.s32.totalorder %s23, 2
      // Predicated region
      $region65: #{clip_image_features.1} parent=5 // pred_check
        %p403 = pneg %p402
      $region66: #{clip_image_features.1} parent=5 // pred_check_branch
        %405 = sbr.rel (%p403) target = $region68
      $region67: #{clip_image_features.1} parent=5 // pred_region
        // Predicated region
        $region69: #{clip_image_features.1} parent=67 // pred_check
          %p406 = pneg %p43
        $region70: #{clip_image_features.1} parent=67 // pred_check_branch
          %408 = sbr.rel (%p406) target = $region72
        $region71: #{clip_image_features.1} parent=67 // pred_region
          %p409 = scmp.lt.s32.totalorder %s23, 1
          %s410 = scalar_select %p409, %s23, 1
          %s411 = smul.addr %s410, 4
          %s412 = smul.addr %s411, 8
          %s413 = scalar_lea.vmem %s0, %s412
        $region72: #{clip_image_features.1} parent=67 // pred_fallthru
          _
      $region68: #{clip_image_features.1} parent=5 // pred_fallthru
        _
      %p414 = scmp.le.s32.totalorder 1, %s23
      %p415 = scmp.lt.s32.totalorder %s23, 3
      %p416 = pnand %p414, %p415
      %p417 = pneg %p416
      // Predicated region
      $region73: #{clip_image_features.1} parent=5 // pred_check
        _
      $region74: #{clip_image_features.1} parent=5 // pred_check_branch
        %419 = sbr.rel (%p416) target = $region76
      $region75: #{clip_image_features.1} parent=5 // pred_region
        %s420 = ssub.s32 %s23, 1
        %p421 = scmp.lt.s32.totalorder %s28, 1
        %s422 = scalar_select %p421, %s28, 1
        %s423 = smul.addr %s422, 4
        %s424 = smul.addr %s423, 8
        %s425 = scalar_lea.vmem %s0, %s424
        %p426 = pneg %p49
        %p427 = pneg %p46
        %p428 = pneg %p70
        %p429 = pneg %p67
        %p430 = pneg %p91
        %p431 = pneg %p88
        %p432 = pneg %p112
        %p433 = pneg %p109
        %p434 = pneg %p133
        %p435 = pneg %p130
        %p436 = pneg %p154
        %p437 = pneg %p151
        %p438 = pneg %p175
        %p439 = pneg %p172
        %p440 = pneg %p196
        %p441 = pneg %p193
        %p442 = pneg %p217
        %p443 = pneg %p214
        %p444 = pneg %p238
        %p445 = pneg %p235
        %p446 = pneg %p259
        %p447 = pneg %p256
        %p448 = pneg %p280
        %p449 = pneg %p277
        %p450 = pneg %p301
        %p451 = pneg %p298
        %p452 = pneg %p322
        %p453 = pneg %p319
        %p454 = pneg %p348
        %p455 = pneg %p345
        %s456 = sand.u32 %s335, 1
        %s457 = scalar_lea.sflag [#allocation4], %s456
        %s458 = sand.u32 %s335, 1
        %s459 = scalar_lea.vmem [#allocation3], %s458
        %p460 = scmp.lt.s32.totalorder %s28, 1
        %s461 = scalar_select %p460, %s28, 1
        %s462 = smul.addr %s461, 4
        %s463 = smul.addr %s462, 8
        %s464 = scalar_lea.vmem %s0, %s463
        %v465 = vld [vmem:[%s464] sm:$0xff]
        %v466 = vld [vmem:[%s464 + $0x8] sm:$0xff]
        %v467 = vld [vmem:[%s464 + $0x10] sm:$0xff]
        %v468 = vld [vmem:[%s464 + $0x18] sm:$0xff]
        %v469 = vld [vmem:[%s2] sm:$0xff]
        %v470 = vld [vmem:[%s2 + $0x8] sm:$0xff]
        %v471 = vld [vmem:[%s2 + $0x10] sm:$0xff]
        %v472 = vld [vmem:[%s2 + $0x18] sm:$0xff]
        %v473 = vld [vmem:[%s2 + $0x20] sm:$0xff]
        %v474 = vld [vmem:[%s2 + $0x28] sm:$0xff]
        %v475 = vld [vmem:[%s2 + $0x30] sm:$0xff]
        %v476 = vld [vmem:[%s2 + $0x38] sm:$0xff]
        %v477 = vld [vmem:[%s2 + $0x40] sm:$0xff]
        %v478 = vld [vmem:[%s2 + $0x48] sm:$0xff]
        %v479 = vld [vmem:[%s2 + $0x50] sm:$0xff]
        %v480 = vld [vmem:[%s2 + $0x58] sm:$0xff]
        %v481 = vld [vmem:[%s2 + $0x60] sm:$0xff]
        %v482 = vld [vmem:[%s2 + $0x68] sm:$0xff]
        %v483 = vld [vmem:[%s2 + $0x70] sm:$0xff]
        %v484 = vld [vmem:[%s2 + $0x78] sm:$0xff]
        %v485 = vld [vmem:[%s2 + $0x80] sm:$0xff]
        %v486 = vld [vmem:[%s2 + $0x88] sm:$0xff]
        %v487 = vld [vmem:[%s2 + $0x90] sm:$0xff]
        %v488 = vld [vmem:[%s2 + $0x98] sm:$0xff]
        %v489 = vld [vmem:[%s2 + $0xa0] sm:$0xff]
        %v490 = vld [vmem:[%s2 + $0xa8] sm:$0xff]
        %v491 = vld [vmem:[%s2 + $0xb0] sm:$0xff]
        %v492 = vld [vmem:[%s2 + $0xb8] sm:$0xff]
        %vm493 = vcmask 523264
        %v495 = vsel %vm493, %v466, 0
        %v498 = vsel %vm493, %v468, 0
        %500 = vmatprep.subr.mxu0 0.0
        %501 = vmatpush1.msra.mxu0 %v484
        %502 = vmatprep.subr.mxu0 0.0
        %503 = vmatpush1.msra.mxu0 %v483
        %504 = vmatprep.subr.mxu0 0.0
        %505 = vmatpush1.msra.mxu0 %v482
        %506 = vmatprep.subr.mxu0 0.0
        %507 = vmatpush1.msra.mxu0 %v481
        %508 = vmatprep.subr.mxu0 0.0
        %509 = vmatpush1.msra.mxu0 %v480
        %510 = vmatprep.subr.mxu0 0.0
        %511 = vmatpush1.msra.mxu0 %v479
        %512 = vmatprep.subr.mxu0 0.0
        %513 = vmatpush1.msra.mxu0 %v478
        %514 = vmatprep.subr.mxu0 0.0
        %515 = vmatpush1.msra.mxu0 %v477
        %516 = vmatprep.subr.mxu0 0.0
        %517 = vmatpush1.msra.mxu0 %v476
        %518 = vmatprep.subr.mxu0 0.0
        %519 = vmatpush1.msra.mxu0 %v475
        %520 = vmatprep.subr.mxu0 0.0
        %521 = vmatpush1.msra.mxu0 %v474
        %522 = vmatprep.subr.mxu0 0.0
        %523 = vmatpush1.msra.mxu0 %v473
        %524 = vmatprep.subr.mxu0 0.0
        %525 = vmatpush1.msra.mxu0 %v472
        %526 = vmatprep.subr.mxu0 0.0
        %527 = vmatpush1.msra.mxu0 %v471
        %528 = vmatprep.subr.mxu0 0.0
        %529 = vmatpush1.msra.mxu0 %v470
        %530 = vmatprep.subr.mxu0 0.0
        %531 = vmatpush1.msra.mxu0 %v469
        %532 = vmatprep.subr.mxu0 0.0
        %533 = vmatpush2.msra.mxu0 0.0
        %534 = vmatprep.subr.mxu0 0.0
        %535 = vmatpush2.msra.mxu0 0.0
        %536 = vmatprep.subr.mxu0 0.0
        %537 = vmatpush2.msra.mxu0 0.0
        %538 = vmatprep.subr.mxu0 0.0
        %539 = vmatpush2.msra.mxu0 0.0
        %540 = vmatprep.subr.mxu0 0.0
        %541 = vmatpush2.msra.mxu0 0.0
        %542 = vmatprep.subr.mxu0 0.0
        %543 = vmatpush2.msra.mxu0 0.0
        %544 = vmatprep.subr.mxu0 0.0
        %545 = vmatpush2.msra.mxu0 0.0
        %546 = vmatprep.subr.mxu0 0.0
        %547 = vmatpush2.msra.mxu0 0.0
        %548 = vmatprep.subr.mxu0 0.0
        %549 = vmatpush2.msra.mxu0 %v492
        %550 = vmatprep.subr.mxu0 0.0
        %551 = vmatpush2.msra.mxu0 %v491
        %552 = vmatprep.subr.mxu0 0.0
        %553 = vmatpush2.msra.mxu0 %v490
        %554 = vmatprep.subr.mxu0 0.0
        %555 = vmatpush2.msra.mxu0 %v489
        %556 = vmatprep.subr.mxu0 0.0
        %557 = vmatpush2.msra.mxu0 %v488
        %558 = vmatprep.subr.mxu0 0.0
        %559 = vmatpush2.msra.mxu0 %v487
        %560 = vmatprep.subr.mxu0 0.0
        %561 = vmatpush2.msra.mxu0 %v486
        %562 = vmatprep.subr.mxu0 0.0
        %563 = vmatpush2.msra.mxu0 %v485
        %564 = vmatprep.mubr.f32.mxu0 %v495
        %565 = vmatmul.mubr.f32.gmra.mxu0 %v465
        %v566 = vpop.f32.mrf.mxu0
        %v567 = vadd.f32 0.0, %v566
        %v568 = vpop.f32.mrf.mxu0
        %569 = vmatprep.mubr.f32.mxu0 %v498
        %570 = vmatmul.mubr.f32.gmra.mxu0 %v467
        %v571 = vpop.f32.mrf.mxu0
        %v572 = vadd.f32 0.0, %v571
        %v573 = vpop.f32.mrf.mxu0
        %574 = vdwg.mxu0
        %v575 = vld [vmem:[%s1] sm:$0xff]
        %v576 = vld [vmem:[%s1 + $0x8] sm:$0xff]
        %v577 = vadd.f32 %v575, %v567
        %v578 = vadd.f32 %v576, %v572
        %vm579 = vcmask 261120
        %580 = vst.msk [vmem:[#allocation2] sm:$0xff] %vm579, %v577
        %581 = vst.msk [vmem:[#allocation2 + $0x8] sm:$0xff] %vm579, %v578
        %v582 = vld [vmem:[%s1 + $0x10] sm:$0xff]
        %583 = vst.msk [vmem:[#allocation2 + $0x10] sm:$0xff] %vm579, %v582
        %v584 = vld [vmem:[#allocation2] sm:$0xff]
        %v585 = vld [vmem:[#allocation2 + $0x8] sm:$0xff]
        %v586 = vld [vmem:[#allocation2 + $0x10] sm:$0xff]
        %v587 = vld [vmem:[%s3] sm:$0xf]
        %v588 = vsel %vm579, %v584, 0.0
        %589 = vadd.xlane.f32.xlu0 %v588
        %v590 = vpop.xlane.xlu0 %589
        %v591 = vsel %vm579, %v585, 0.0
        %592 = vadd.xlane.f32.xlu0 %v591
        %v593 = vpop.xlane.xlu0 %592
        %v594 = vsel %vm579, %v586, 0.0
        %595 = vadd.xlane.f32.xlu0 %v594
        %v596 = vpop.xlane.xlu0 %595
        %v597 = vrcp.pop 32.0
        %v598 = vmul.f32 %v590, %v597
        %v599 = vmul.f32 %v593, %v597
        %v600 = vmul.f32 %v596, %v597
        %v601 = vsub.f32 %v584, %v598
        %v602 = vsub.f32 %v585, %v599
        %v603 = vsub.f32 %v586, %v600
        %v604 = vmul.f32 %v601, %v601
        %v605 = vmul.f32 %v602, %v602
        %v606 = vmul.f32 %v603, %v603
        %v607 = vsel %vm579, %v604, 0.0
        %608 = vadd.xlane.f32.xlu0 %v607
        %v609 = vpop.xlane.xlu0 %608
        %v610 = vsel %vm579, %v605, 0.0
        %611 = vadd.xlane.f32.xlu0 %v610
        %v612 = vpop.xlane.xlu0 %611
        %v613 = vsel %vm579, %v606, 0.0
        %614 = vadd.xlane.f32.xlu0 %v613
        %v615 = vpop.xlane.xlu0 %614
        %v616 = vmul.f32 %v609, %v597
        %v617 = vmul.f32 %v612, %v597
        %v618 = vmul.f32 %v615, %v597
        %v619 = vadd.f32 %v616, 1e-05
        %v620 = vadd.f32 %v617, 1e-05
        %v621 = vadd.f32 %v618, 1e-05
        %v622 = vrsqrt.pop %v619
        %v623 = vrsqrt.pop %v620
        %v624 = vrsqrt.pop %v621
        %v625 = vmul.f32 %v601, %v622
        %v626 = vmul.f32 %v602, %v623
        %v627 = vmul.f32 %v603, %v624
        %v628 = vlaneseq
        %v629 = vshrl.u32 %v628, 7
        %v630 = vsub.s32 0, %v629
        %v631 = vrot.slane %v587, %v630
        %v632 = vmul.f32 %v625, %v631
        %v633 = vmul.f32 %v626, %v631
        %v634 = vmul.f32 %v627, %v631
        %v635 = vlaneseq
        %v636 = vshrl.u32 %v635, 7
        %v637 = vsub.s32 1, %v636
        %v638 = vrot.slane %v587, %v637
        %v639 = vadd.f32 %v632, %v638
        %v640 = vadd.f32 %v633, %v638
        %v641 = vadd.f32 %v634, %v638
        %v642 = vlaneseq
        %v643 = vand.u32 %v642, 127
        %vm644 = vcmp.lt.s32.totalorder %v643, 17
        %v645 = vsel %vm644, 0.0, -1e+30
        %v646 = vld [vmem:[%s5] sm:$0xf]
        %v647 = vsel %vm579, %v639, 0.0
        %648 = vadd.xlane.f32.xlu0 %v647
        %v649 = vpop.xlane.xlu0 %648
        %v650 = vsel %vm579, %v640, 0.0
        %651 = vadd.xlane.f32.xlu0 %v650
        %v652 = vpop.xlane.xlu0 %651
        %v653 = vsel %vm579, %v641, 0.0
        %654 = vadd.xlane.f32.xlu0 %v653
        %v655 = vpop.xlane.xlu0 %654
        %v656 = vmul.f32 %v649, %v597
        %v657 = vmul.f32 %v652, %v597
        %v658 = vmul.f32 %v655, %v597
        %v659 = vsub.f32 %v639, %v656
        %v660 = vsub.f32 %v640, %v657
        %v661 = vsub.f32 %v641, %v658
        %v662 = vmul.f32 %v659, %v659
        %v663 = vmul.f32 %v660, %v660
        %v664 = vmul.f32 %v661, %v661
        %v665 = vsel %vm579, %v662, 0.0
        %666 = vadd.xlane.f32.xlu0 %v665
        %v667 = vpop.xlane.xlu0 %666
        %v668 = vsel %vm579, %v663, 0.0
        %669 = vadd.xlane.f32.xlu0 %v668
        %v670 = vpop.xlane.xlu0 %669
        %v671 = vsel %vm579, %v664, 0.0
        %672 = vadd.xlane.f32.xlu0 %v671
        %v673 = vpop.xlane.xlu0 %672
        %v674 = vmul.f32 %v667, %v597
        %v675 = vmul.f32 %v670, %v597
        %v676 = vmul.f32 %v673, %v597
        %v677 = vadd.f32 %v674, 1e-05
        %v678 = vadd.f32 %v675, 1e-05
        %v679 = vadd.f32 %v676, 1e-05
        %v680 = vrsqrt.pop %v677
        %v681 = vrsqrt.pop %v678
        %v682 = vrsqrt.pop %v679
        %v683 = vmul.f32 %v659, %v680
        %v684 = vmul.f32 %v660, %v681
        %v685 = vmul.f32 %v661, %v682
        %v686 = vlaneseq
        %v687 = vshrl.u32 %v686, 7
        %v688 = vsub.s32 0, %v687
        %v689 = vrot.slane %v646, %v688
        %v690 = vmul.f32 %v683, %v689
        %v691 = vmul.f32 %v684, %v689
        %v692 = vmul.f32 %v685, %v689
        %v693 = vlaneseq
        %v694 = vshrl.u32 %v693, 7
        %v695 = vsub.s32 1, %v694
        %v696 = vrot.slane %v646, %v695
        %v697 = vadd.f32 %v690, %v696
        %v698 = vadd.f32 %v691, %v696
        %v699 = vadd.f32 %v692, %v696
        %v700 = vld [vmem:[%s6] sm:$0xff]
        %v701 = vld [vmem:[%s6 + $0x8] sm:$0xff]
        %v702 = vld [vmem:[%s6 + $0x10] sm:$0xff]
        %v703 = vld [vmem:[%s6 + $0x18] sm:$0xff]
        %v704 = vld [vmem:[%s7] sm:$0x1]
        %v706 = vlaneseq
        %v707 = vshrl.u32 %v706, 7
        %v708 = vsub.s32 0, %v707
        %v709 = vrot.slane %v704, %v708
        %v712 = vsel %vm579, %v697, 0
        %v715 = vsel %vm579, %v698, 0
        %v718 = vsel %vm579, %v699, 0
        %720 = vmatprep.subr.mxu0 0.0
        %721 = vmatpush1.msra.mxu0 0.0
        %722 = vmatprep.subr.mxu0 0.0
        %723 = vmatpush1.msra.mxu0 0.0
        %724 = vmatprep.subr.mxu0 0.0
        %725 = vmatpush1.msra.mxu0 0.0
        %726 = vmatprep.subr.mxu0 0.0
        %727 = vmatpush1.msra.mxu0 0.0
        %728 = vmatprep.subr.mxu0 0.0
        %729 = vmatpush1.msra.mxu0 0.0
        %730 = vmatprep.subr.mxu0 0.0
        %731 = vmatpush1.msra.mxu0 0.0
        %732 = vmatprep.subr.mxu0 0.0
        %733 = vmatpush1.msra.mxu0 0.0
        %734 = vmatprep.subr.mxu0 0.0
        %735 = vmatpush1.msra.mxu0 0.0
        %736 = vmatprep.subr.mxu0 0.0
        %737 = vmatpush1.msra.mxu0 0.0
        %738 = vmatprep.subr.mxu0 0.0
        %739 = vmatpush1.msra.mxu0 0.0
        %740 = vmatprep.subr.mxu0 0.0
        %741 = vmatpush1.msra.mxu0 0.0
        %742 = vmatprep.subr.mxu0 0.0
        %743 = vmatpush1.msra.mxu0 0.0
        %744 = vmatprep.subr.mxu0 0.0
        %745 = vmatpush1.msra.mxu0 %v703
        %746 = vmatprep.subr.mxu0 0.0
        %747 = vmatpush1.msra.mxu0 %v702
        %748 = vmatprep.subr.mxu0 0.0
        %749 = vmatpush1.msra.mxu0 %v701
        %750 = vmatprep.subr.mxu0 0.0
        %751 = vmatpush1.msra.mxu0 %v700
        %752 = vmatprep.subr.mxu0 0.0
        %753 = vmatpush2.msra.mxu0 0.0
        %754 = vmatprep.subr.mxu0 0.0
        %755 = vmatpush2.msra.mxu0 0.0
        %756 = vmatprep.subr.mxu0 0.0
        %757 = vmatpush2.msra.mxu0 0.0
        %758 = vmatprep.subr.mxu0 0.0
        %759 = vmatpush2.msra.mxu0 0.0
        %760 = vmatprep.subr.mxu0 0.0
        %761 = vmatpush2.msra.mxu0 0.0
        %762 = vmatprep.subr.mxu0 0.0
        %763 = vmatpush2.msra.mxu0 0.0
        %764 = vmatprep.subr.mxu0 0.0
        %765 = vmatpush2.msra.mxu0 0.0
        %766 = vmatprep.subr.mxu0 0.0
        %767 = vmatpush2.msra.mxu0 0.0
        %768 = vmatprep.subr.mxu0 0.0
        %769 = vmatpush2.msra.mxu0 0.0
        %770 = vmatprep.subr.mxu0 0.0
        %771 = vmatpush2.msra.mxu0 0.0
        %772 = vmatprep.subr.mxu0 0.0
        %773 = vmatpush2.msra.mxu0 0.0
        %774 = vmatprep.subr.mxu0 0.0
        %775 = vmatpush2.msra.mxu0 0.0
        %776 = vmatprep.subr.mxu0 0.0
        %777 = vmatpush2.msra.mxu0 0.0
        %778 = vmatprep.subr.mxu0 0.0
        %779 = vmatpush2.msra.mxu0 0.0
        %780 = vmatprep.subr.mxu0 0.0
        %781 = vmatpush2.msra.mxu0 0.0
        %782 = vmatprep.subr.mxu0 0.0
        %783 = vmatpush2.msra.mxu0 0.0
        %784 = vmatprep.mubr.f32.mxu0 0.0
        %785 = vmatmul.mubr.f32.gmra.mxu0 %v712
        %v786 = vpop.f32.mrf.mxu0
        %v787 = vadd.f32 %v709, %v786
        %v788 = vpop.f32.mrf.mxu0
        %789 = vmatprep.mubr.f32.mxu0 0.0
        %790 = vmatmul.mubr.f32.gmra.mxu0 %v715
        %v791 = vpop.f32.mrf.mxu0
        %v792 = vadd.f32 %v709, %v791
        %v793 = vpop.f32.mrf.mxu0
        %794 = vmatprep.mubr.f32.mxu0 0.0
        %795 = vmatmul.mubr.f32.gmra.mxu0 %v718
        %v796 = vpop.f32.mrf.mxu0
        %v797 = vadd.f32 %v709, %v796
        %v798 = vpop.f32.mrf.mxu0
        %799 = vdwg.mxu0
        %803 = vrot.lane.b32.xlu0 %v787, 96
        %v804 = vpop.permute.xlu0 %803
        %805 = vrot.lane.b32.xlu0 %v792, 96
        %v806 = vpop.permute.xlu0 %805
        %807 = vrot.lane.b32.xlu0 %v797, 96
        %v808 = vpop.permute.xlu0 %807
        %vm809 = vcmask 64512
        %v810 = vsel %vm809, %v787, 0
        %v812 = vsel %vm809, %v792, 0
        %v814 = vsel %vm809, %v797, 0
        %v816 = vsel %vm809, %v804, 0
        %v818 = vsel %vm809, %v806, 0
        %v820 = vsel %vm809, %v808, 0
        %822 = vmatprep.subr.mxu0 0.0
        %823 = vmatpush1.xpose.msra.mxu0 0.0
        %824 = vmatprep.subr.mxu0 0.0
        %825 = vmatpush1.xpose.msra.mxu0 0.0
        %826 = vmatprep.subr.mxu0 0.0
        %827 = vmatpush1.xpose.msra.mxu0 0.0
        %828 = vmatprep.subr.mxu0 0.0
        %829 = vmatpush1.xpose.msra.mxu0 0.0
        %830 = vmatprep.subr.mxu0 0.0
        %831 = vmatpush1.xpose.msra.mxu0 0.0
        %832 = vmatprep.subr.mxu0 0.0
        %833 = vmatpush1.xpose.msra.mxu0 0.0
        %834 = vmatprep.subr.mxu0 0.0
        %835 = vmatpush1.xpose.msra.mxu0 0.0
        %836 = vmatprep.subr.mxu0 0.0
        %837 = vmatpush1.xpose.msra.mxu0 0.0
        %838 = vmatprep.subr.mxu0 0.0
        %839 = vmatpush1.xpose.msra.mxu0 0.0
        %840 = vmatprep.subr.mxu0 0.0
        %841 = vmatpush1.xpose.msra.mxu0 0.0
        %842 = vmatprep.subr.mxu0 0.0
        %843 = vmatpush1.xpose.msra.mxu0 0.0
        %844 = vmatprep.subr.mxu0 0.0
        %845 = vmatpush1.xpose.msra.mxu0 0.0
        %846 = vmatprep.subr.mxu0 0.0
        %847 = vmatpush1.xpose.msra.mxu0 0.0
        %848 = vmatprep.subr.mxu0 0.0
        %849 = vmatpush1.xpose.msra.mxu0 %v820
        %850 = vmatprep.subr.mxu0 0.0
        %851 = vmatpush1.xpose.msra.mxu0 %v818
        %852 = vmatprep.subr.mxu0 0.0
        %853 = vmatpush1.xpose.msra.mxu0 %v816
        %854 = vmatprep.subr.mxu0 0.0
        %855 = vmatpush2.xpose.msra.mxu0 0.0
        %856 = vmatprep.subr.mxu0 0.0
        %857 = vmatpush2.xpose.msra.mxu0 0.0
        %858 = vmatprep.subr.mxu0 0.0
        %859 = vmatpush2.xpose.msra.mxu0 0.0
        %860 = vmatprep.subr.mxu0 0.0
        %861 = vmatpush2.xpose.msra.mxu0 0.0
        %862 = vmatprep.subr.mxu0 0.0
        %863 = vmatpush2.xpose.msra.mxu0 0.0
        %864 = vmatprep.subr.mxu0 0.0
        %865 = vmatpush2.xpose.msra.mxu0 0.0
        %866 = vmatprep.subr.mxu0 0.0
        %867 = vmatpush2.xpose.msra.mxu0 0.0
        %868 = vmatprep.subr.mxu0 0.0
        %869 = vmatpush2.xpose.msra.mxu0 0.0
        %870 = vmatprep.subr.mxu0 0.0
        %871 = vmatpush2.xpose.msra.mxu0 0.0
        %872 = vmatprep.subr.mxu0 0.0
        %873 = vmatpush2.xpose.msra.mxu0 0.0
        %874 = vmatprep.subr.mxu0 0.0
        %875 = vmatpush2.xpose.msra.mxu0 0.0
        %876 = vmatprep.subr.mxu0 0.0
        %877 = vmatpush2.xpose.msra.mxu0 0.0
        %878 = vmatprep.subr.mxu0 0.0
        %879 = vmatpush2.xpose.msra.mxu0 0.0
        %880 = vmatprep.subr.mxu0 0.0
        %881 = vmatpush2.xpose.msra.mxu0 0.0
        %882 = vmatprep.subr.mxu0 0.0
        %883 = vmatpush2.xpose.msra.mxu0 0.0
        %884 = vmatprep.subr.mxu0 0.0
        %885 = vmatpush2.xpose.msra.mxu0 0.0
        %886 = vmatprep.mubr.f32.mxu0 0.0
        %887 = vmatmul.mubr.f32.gmra.mxu0 %v810
        %v888 = vpop.f32.mrf.mxu0
        %v889 = vadd.f32 0.0, %v888
        %v890 = vpop.f32.mrf.mxu0
        %891 = vmatprep.mubr.f32.mxu0 0.0
        %892 = vmatmul.mubr.f32.gmra.mxu0 %v812
        %v893 = vpop.f32.mrf.mxu0
        %v894 = vadd.f32 0.0, %v893
        %v895 = vpop.f32.mrf.mxu0
        %896 = vmatprep.mubr.f32.mxu0 0.0
        %897 = vmatmul.mubr.f32.gmra.mxu0 %v814
        %v898 = vpop.f32.mrf.mxu0
        %v899 = vadd.f32 0.0, %v898
        %v900 = vpop.f32.mrf.mxu0
        %901 = vdwg.mxu0
        %v902 = vmul.f32 %v889, 0.35355338
        %v903 = vmul.f32 %v894, 0.35355338
        %v904 = vmul.f32 %v899, 0.35355338
        %v905 = vadd.f32 %v902, %v645
        %v906 = vadd.f32 %v903, %v645
        %v907 = vadd.f32 %v904, %v645
        %vm908 = vcmask 195584
        %v909 = vsel %vm908, %v905, -inf
        %910 = vmax.xlane.f32.xlu0 %v909
        %v911 = vpop.xlane.xlu0 %910
        %v912 = vsel %vm908, %v906, -inf
        %913 = vmax.xlane.f32.xlu0 %v912
        %v914 = vpop.xlane.xlu0 %913
        %v915 = vsel %vm908, %v907, -inf
        %916 = vmax.xlane.f32.xlu0 %v915
        %v917 = vpop.xlane.xlu0 %916
        %v918 = vsub.f32 %v905, %v911
        %v919 = vsub.f32 %v906, %v914
        %v920 = vsub.f32 %v907, %v917
        %v921 = vmul.f32 %v918, 1.442695
        %v922 = vpow.pop %v921
        %v923 = vmul.f32 %v919, 1.442695
        %v924 = vpow.pop %v923
        %v925 = vmul.f32 %v920, 1.442695
        %v926 = vpow.pop %v925
        %v927 = vsel %vm908, %v922, 0.0
        %928 = vadd.xlane.f32.xlu0 %v927
        %v929 = vpop.xlane.xlu0 %928
        %v930 = vsel %vm908, %v924, 0.0
        %931 = vadd.xlane.f32.xlu0 %v930
        %v932 = vpop.xlane.xlu0 %931
        %v933 = vsel %vm908, %v926, 0.0
        %934 = vadd.xlane.f32.xlu0 %v933
        %v935 = vpop.xlane.xlu0 %934
        %v936 = vrcp.pop %v929
        %v937 = vrcp.pop %v932
        %v938 = vrcp.pop %v935
        %v939 = vmul.f32 %v922, %v936
        %v940 = vmul.f32 %v924, %v937
        %v941 = vmul.f32 %v926, %v938
        %942 = vrot.lane.b32.xlu0 %v787, 64
        %v943 = vpop.permute.xlu0 %942
        %944 = vrot.lane.b32.xlu0 %v792, 64
        %v945 = vpop.permute.xlu0 %944
        %946 = vrot.lane.b32.xlu0 %v797, 64
        %v947 = vpop.permute.xlu0 %946
        %v952 = vsel %vm908, %v939, 0
        %v955 = vsel %vm908, %v940, 0
        %v958 = vsel %vm908, %v941, 0
        %960 = vmatprep.subr.mxu0 0.0
        %961 = vmatpush1.msra.mxu0 0.0
        %962 = vmatprep.subr.mxu0 0.0
        %963 = vmatpush1.msra.mxu0 0.0
        %964 = vmatprep.subr.mxu0 0.0
        %965 = vmatpush1.msra.mxu0 0.0
        %966 = vmatprep.subr.mxu0 0.0
        %967 = vmatpush1.msra.mxu0 0.0
        %968 = vmatprep.subr.mxu0 0.0
        %969 = vmatpush1.msra.mxu0 0.0
        %970 = vmatprep.subr.mxu0 0.0
        %971 = vmatpush1.msra.mxu0 0.0
        %972 = vmatprep.subr.mxu0 0.0
        %973 = vmatpush1.msra.mxu0 0.0
        %974 = vmatprep.subr.mxu0 0.0
        %975 = vmatpush1.msra.mxu0 0.0
        %976 = vmatprep.subr.mxu0 0.0
        %977 = vmatpush1.msra.mxu0 0.0
        %978 = vmatprep.subr.mxu0 0.0
        %979 = vmatpush1.msra.mxu0 0.0
        %980 = vmatprep.subr.mxu0 0.0
        %981 = vmatpush1.msra.mxu0 0.0
        %982 = vmatprep.subr.mxu0 0.0
        %983 = vmatpush1.msra.mxu0 0.0
        %984 = vmatprep.subr.mxu0 0.0
        %985 = vmatpush1.msra.mxu0 0.0
        %986 = vmatprep.subr.mxu0 0.0
        %987 = vmatpush1.msra.mxu0 %v947
        %988 = vmatprep.subr.mxu0 0.0
        %989 = vmatpush1.msra.mxu0 %v945
        %990 = vmatprep.subr.mxu0 0.0
        %991 = vmatpush1.msra.mxu0 %v943
        %992 = vmatprep.subr.mxu0 0.0
        %993 = vmatpush2.msra.mxu0 0.0
        %994 = vmatprep.subr.mxu0 0.0
        %995 = vmatpush2.msra.mxu0 0.0
        %996 = vmatprep.subr.mxu0 0.0
        %997 = vmatpush2.msra.mxu0 0.0
        %998 = vmatprep.subr.mxu0 0.0
        %999 = vmatpush2.msra.mxu0 0.0
        %1000 = vmatprep.subr.mxu0 0.0
        %1001 = vmatpush2.msra.mxu0 0.0
        %1002 = vmatprep.subr.mxu0 0.0
        %1003 = vmatpush2.msra.mxu0 0.0
        %1004 = vmatprep.subr.mxu0 0.0
        %1005 = vmatpush2.msra.mxu0 0.0
        %1006 = vmatprep.subr.mxu0 0.0
        %1007 = vmatpush2.msra.mxu0 0.0
        %1008 = vmatprep.subr.mxu0 0.0
        %1009 = vmatpush2.msra.mxu0 0.0
        %1010 = vmatprep.subr.mxu0 0.0
        %1011 = vmatpush2.msra.mxu0 0.0
        %1012 = vmatprep.subr.mxu0 0.0
        %1013 = vmatpush2.msra.mxu0 0.0
        %1014 = vmatprep.subr.mxu0 0.0
        %1015 = vmatpush2.msra.mxu0 0.0
        %1016 = vmatprep.subr.mxu0 0.0
        %1017 = vmatpush2.msra.mxu0 0.0
        %1018 = vmatprep.subr.mxu0 0.0
        %1019 = vmatpush2.msra.mxu0 0.0
        %1020 = vmatprep.subr.mxu0 0.0
        %1021 = vmatpush2.msra.mxu0 0.0
        %1022 = vmatprep.subr.mxu0 0.0
        %1023 = vmatpush2.msra.mxu0 0.0
        %1024 = vmatprep.mubr.f32.mxu0 0.0
        %1025 = vmatmul.mubr.f32.gmra.mxu0 %v952
        %v1026 = vpop.f32.mrf.mxu0
        %v1027 = vadd.f32 0.0, %v1026
        %v1028 = vpop.f32.mrf.mxu0
        %1029 = vmatprep.mubr.f32.mxu0 0.0
        %1030 = vmatmul.mubr.f32.gmra.mxu0 %v955
        %v1031 = vpop.f32.mrf.mxu0
        %v1032 = vadd.f32 0.0, %v1031
        %v1033 = vpop.f32.mrf.mxu0
        %1034 = vmatprep.mubr.f32.mxu0 0.0
        %1035 = vmatmul.mubr.f32.gmra.mxu0 %v958
        %v1036 = vpop.f32.mrf.mxu0
        %v1037 = vadd.f32 0.0, %v1036
        %v1038 = vpop.f32.mrf.mxu0
        %1039 = vdwg.mxu0
        %1040 = vst.msk [vmem:[#allocation2] sm:$0xff] %vm809, %v1027
        %1041 = vst.msk [vmem:[#allocation2 + $0x8] sm:$0xff] %vm809, %v1032
        %1042 = vst.msk [vmem:[#allocation2 + $0x10] sm:$0xff] %vm809, %v1037
        %1043 = vrot.lane.b32.xlu0 %v787, 120
        %v1044 = vpop.permute.xlu0 %1043
        %1045 = vrot.lane.b32.xlu0 %v792, 120
        %v1046 = vpop.permute.xlu0 %1045
        %1047 = vrot.lane.b32.xlu0 %v797, 120
        %v1048 = vpop.permute.xlu0 %1047
        %1049 = vrot.lane.b32.xlu0 %v787, 88
        %v1050 = vpop.permute.xlu0 %1049
        %1051 = vrot.lane.b32.xlu0 %v792, 88
        %v1052 = vpop.permute.xlu0 %1051
        %1053 = vrot.lane.b32.xlu0 %v797, 88
        %v1054 = vpop.permute.xlu0 %1053
        %v1055 = vsel %vm809, %v1044, 0
        %v1057 = vsel %vm809, %v1046, 0
        %v1059 = vsel %vm809, %v1048, 0
        %v1061 = vsel %vm809, %v1050, 0
        %v1063 = vsel %vm809, %v1052, 0
        %v1065 = vsel %vm809, %v1054, 0
        %1067 = vmatprep.subr.mxu0 0.0
        %1068 = vmatpush1.xpose.msra.mxu0 0.0
        %1069 = vmatprep.subr.mxu0 0.0
        %1070 = vmatpush1.xpose.msra.mxu0 0.0
        %1071 = vmatprep.subr.mxu0 0.0
        %1072 = vmatpush1.xpose.msra.mxu0 0.0
        %1073 = vmatprep.subr.mxu0 0.0
        %1074 = vmatpush1.xpose.msra.mxu0 0.0
        %1075 = vmatprep.subr.mxu0 0.0
        %1076 = vmatpush1.xpose.msra.mxu0 0.0
        %1077 = vmatprep.subr.mxu0 0.0
        %1078 = vmatpush1.xpose.msra.mxu0 0.0
        %1079 = vmatprep.subr.mxu0 0.0
        %1080 = vmatpush1.xpose.msra.mxu0 0.0
        %1081 = vmatprep.subr.mxu0 0.0
        %1082 = vmatpush1.xpose.msra.mxu0 0.0
        %1083 = vmatprep.subr.mxu0 0.0
        %1084 = vmatpush1.xpose.msra.mxu0 0.0
        %1085 = vmatprep.subr.mxu0 0.0
        %1086 = vmatpush1.xpose.msra.mxu0 0.0
        %1087 = vmatprep.subr.mxu0 0.0
        %1088 = vmatpush1.xpose.msra.mxu0 0.0
        %1089 = vmatprep.subr.mxu0 0.0
        %1090 = vmatpush1.xpose.msra.mxu0 0.0
        %1091 = vmatprep.subr.mxu0 0.0
        %1092 = vmatpush1.xpose.msra.mxu0 0.0
        %1093 = vmatprep.subr.mxu0 0.0
        %1094 = vmatpush1.xpose.msra.mxu0 %v1065
        %1095 = vmatprep.subr.mxu0 0.0
        %1096 = vmatpush1.xpose.msra.mxu0 %v1063
        %1097 = vmatprep.subr.mxu0 0.0
        %1098 = vmatpush1.xpose.msra.mxu0 %v1061
        %1099 = vmatprep.subr.mxu0 0.0
        %1100 = vmatpush2.xpose.msra.mxu0 0.0
        %1101 = vmatprep.subr.mxu0 0.0
        %1102 = vmatpush2.xpose.msra.mxu0 0.0
        %1103 = vmatprep.subr.mxu0 0.0
        %1104 = vmatpush2.xpose.msra.mxu0 0.0
        %1105 = vmatprep.subr.mxu0 0.0
        %1106 = vmatpush2.xpose.msra.mxu0 0.0
        %1107 = vmatprep.subr.mxu0 0.0
        %1108 = vmatpush2.xpose.msra.mxu0 0.0
        %1109 = vmatprep.subr.mxu0 0.0
        %1110 = vmatpush2.xpose.msra.mxu0 0.0
        %1111 = vmatprep.subr.mxu0 0.0
        %1112 = vmatpush2.xpose.msra.mxu0 0.0
        %1113 = vmatprep.subr.mxu0 0.0
        %1114 = vmatpush2.xpose.msra.mxu0 0.0
        %1115 = vmatprep.subr.mxu0 0.0
        %1116 = vmatpush2.xpose.msra.mxu0 0.0
        %1117 = vmatprep.subr.mxu0 0.0
        %1118 = vmatpush2.xpose.msra.mxu0 0.0
        %1119 = vmatprep.subr.mxu0 0.0
        %1120 = vmatpush2.xpose.msra.mxu0 0.0
        %1121 = vmatprep.subr.mxu0 0.0
        %1122 = vmatpush2.xpose.msra.mxu0 0.0
        %1123 = vmatprep.subr.mxu0 0.0
        %1124 = vmatpush2.xpose.msra.mxu0 0.0
        %1125 = vmatprep.subr.mxu0 0.0
        %1126 = vmatpush2.xpose.msra.mxu0 0.0
        %1127 = vmatprep.subr.mxu0 0.0
        %1128 = vmatpush2.xpose.msra.mxu0 0.0
        %1129 = vmatprep.subr.mxu0 0.0
        %1130 = vmatpush2.xpose.msra.mxu0 0.0
        %1131 = vmatprep.mubr.f32.mxu0 0.0
        %1132 = vmatmul.mubr.f32.gmra.mxu0 %v1055
        %v1133 = vpop.f32.mrf.mxu0
        %v1134 = vadd.f32 0.0, %v1133
        %v1135 = vpop.f32.mrf.mxu0
        %1136 = vmatprep.mubr.f32.mxu0 0.0
        %1137 = vmatmul.mubr.f32.gmra.mxu0 %v1057
        %v1138 = vpop.f32.mrf.mxu0
        %v1139 = vadd.f32 0.0, %v1138
        %v1140 = vpop.f32.mrf.mxu0
        %1141 = vmatprep.mubr.f32.mxu0 0.0
        %1142 = vmatmul.mubr.f32.gmra.mxu0 %v1059
        %v1143 = vpop.f32.mrf.mxu0
        %v1144 = vadd.f32 0.0, %v1143
        %v1145 = vpop.f32.mrf.mxu0
        %1146 = vdwg.mxu0
        %v1147 = vmul.f32 %v1134, 0.35355338
        %v1148 = vmul.f32 %v1139, 0.35355338
        %v1149 = vmul.f32 %v1144, 0.35355338
        %v1150 = vadd.f32 %v1147, %v645
        %v1151 = vadd.f32 %v1148, %v645
        %v1152 = vadd.f32 %v1149, %v645
        %v1153 = vsel %vm908, %v1150, -inf
        %1154 = vmax.xlane.f32.xlu0 %v1153
        %v1155 = vpop.xlane.xlu0 %1154
        %v1156 = vsel %vm908, %v1151, -inf
        %1157 = vmax.xlane.f32.xlu0 %v1156
        %v1158 = vpop.xlane.xlu0 %1157
        %v1159 = vsel %vm908, %v1152, -inf
        %1160 = vmax.xlane.f32.xlu0 %v1159
        %v1161 = vpop.xlane.xlu0 %1160
        %v1162 = vsub.f32 %v1150, %v1155
        %v1163 = vsub.f32 %v1151, %v1158
        %v1164 = vsub.f32 %v1152, %v1161
        %v1165 = vmul.f32 %v1162, 1.442695
        %v1166 = vpow.pop %v1165
        %v1167 = vmul.f32 %v1163, 1.442695
        %v1168 = vpow.pop %v1167
        %v1169 = vmul.f32 %v1164, 1.442695
        %v1170 = vpow.pop %v1169
        %v1171 = vsel %vm908, %v1166, 0.0
        %1172 = vadd.xlane.f32.xlu0 %v1171
        %v1173 = vpop.xlane.xlu0 %1172
        %v1174 = vsel %vm908, %v1168, 0.0
        %1175 = vadd.xlane.f32.xlu0 %v1174
        %v1176 = vpop.xlane.xlu0 %1175
        %v1177 = vsel %vm908, %v1170, 0.0
        %1178 = vadd.xlane.f32.xlu0 %v1177
        %v1179 = vpop.xlane.xlu0 %1178
        %v1180 = vrcp.pop %v1173
        %v1181 = vrcp.pop %v1176
        %v1182 = vrcp.pop %v1179
        %v1183 = vmul.f32 %v1166, %v1180
        %v1184 = vmul.f32 %v1168, %v1181
        %v1185 = vmul.f32 %v1170, %v1182
        %1186 = vrot.lane.b32.xlu0 %v787, 56
        %v1187 = vpop.permute.xlu0 %1186
        %1188 = vrot.lane.b32.xlu0 %v792, 56
        %v1189 = vpop.permute.xlu0 %1188
        %1190 = vrot.lane.b32.xlu0 %v797, 56
        %v1191 = vpop.permute.xlu0 %1190
        %v1196 = vsel %vm908, %v1183, 0
        %v1199 = vsel %vm908, %v1184, 0
        %v1202 = vsel %vm908, %v1185, 0
        %1204 = vmatprep.subr.mxu0 0.0
        %1205 = vmatpush1.msra.mxu0 0.0
        %1206 = vmatprep.subr.mxu0 0.0
        %1207 = vmatpush1.msra.mxu0 0.0
        %1208 = vmatprep.subr.mxu0 0.0
        %1209 = vmatpush1.msra.mxu0 0.0
        %1210 = vmatprep.subr.mxu0 0.0
        %1211 = vmatpush1.msra.mxu0 0.0
        %1212 = vmatprep.subr.mxu0 0.0
        %1213 = vmatpush1.msra.mxu0 0.0
        %1214 = vmatprep.subr.mxu0 0.0
        %1215 = vmatpush1.msra.mxu0 0.0
        %1216 = vmatprep.subr.mxu0 0.0
        %1217 = vmatpush1.msra.mxu0 0.0
        %1218 = vmatprep.subr.mxu0 0.0
        %1219 = vmatpush1.msra.mxu0 0.0
        %1220 = vmatprep.subr.mxu0 0.0
        %1221 = vmatpush1.msra.mxu0 0.0
        %1222 = vmatprep.subr.mxu0 0.0
        %1223 = vmatpush1.msra.mxu0 0.0
        %1224 = vmatprep.subr.mxu0 0.0
        %1225 = vmatpush1.msra.mxu0 0.0
        %1226 = vmatprep.subr.mxu0 0.0
        %1227 = vmatpush1.msra.mxu0 0.0
        %1228 = vmatprep.subr.mxu0 0.0
        %1229 = vmatpush1.msra.mxu0 0.0
        %1230 = vmatprep.subr.mxu0 0.0
        %1231 = vmatpush1.msra.mxu0 %v1191
        %1232 = vmatprep.subr.mxu0 0.0
        %1233 = vmatpush1.msra.mxu0 %v1189
        %1234 = vmatprep.subr.mxu0 0.0
        %1235 = vmatpush1.msra.mxu0 %v1187
        %1236 = vmatprep.subr.mxu0 0.0
        %1237 = vmatpush2.msra.mxu0 0.0
        %1238 = vmatprep.subr.mxu0 0.0
        %1239 = vmatpush2.msra.mxu0 0.0
        %1240 = vmatprep.subr.mxu0 0.0
        %1241 = vmatpush2.msra.mxu0 0.0
        %1242 = vmatprep.subr.mxu0 0.0
        %1243 = vmatpush2.msra.mxu0 0.0
        %1244 = vmatprep.subr.mxu0 0.0
        %1245 = vmatpush2.msra.mxu0 0.0
        %1246 = vmatprep.subr.mxu0 0.0
        %1247 = vmatpush2.msra.mxu0 0.0
        %1248 = vmatprep.subr.mxu0 0.0
        %1249 = vmatpush2.msra.mxu0 0.0
        %1250 = vmatprep.subr.mxu0 0.0
        %1251 = vmatpush2.msra.mxu0 0.0
        %1252 = vmatprep.subr.mxu0 0.0
        %1253 = vmatpush2.msra.mxu0 0.0
        %1254 = vmatprep.subr.mxu0 0.0
        %1255 = vmatpush2.msra.mxu0 0.0
        %1256 = vmatprep.subr.mxu0 0.0
        %1257 = vmatpush2.msra.mxu0 0.0
        %1258 = vmatprep.subr.mxu0 0.0
        %1259 = vmatpush2.msra.mxu0 0.0
        %1260 = vmatprep.subr.mxu0 0.0
        %1261 = vmatpush2.msra.mxu0 0.0
        %1262 = vmatprep.subr.mxu0 0.0
        %1263 = vmatpush2.msra.mxu0 0.0
        %1264 = vmatprep.subr.mxu0 0.0
        %1265 = vmatpush2.msra.mxu0 0.0
        %1266 = vmatprep.subr.mxu0 0.0
        %1267 = vmatpush2.msra.mxu0 0.0
        %1268 = vmatprep.mubr.f32.mxu0 0.0
        %1269 = vmatmul.mubr.f32.gmra.mxu0 %v1196
        %v1270 = vpop.f32.mrf.mxu0
        %v1271 = vadd.f32 0.0, %v1270
        %v1272 = vpop.f32.mrf.mxu0
        %1273 = vmatprep.mubr.f32.mxu0 0.0
        %1274 = vmatmul.mubr.f32.gmra.mxu0 %v1199
        %v1275 = vpop.f32.mrf.mxu0
        %v1276 = vadd.f32 0.0, %v1275
        %v1277 = vpop.f32.mrf.mxu0
        %1278 = vmatprep.mubr.f32.mxu0 0.0
        %1279 = vmatmul.mubr.f32.gmra.mxu0 %v1202
        %v1280 = vpop.f32.mrf.mxu0
        %v1281 = vadd.f32 0.0, %v1280
        %v1282 = vpop.f32.mrf.mxu0
        %1283 = vdwg.mxu0
        %1287 = vrot.lane.b32.xlu0 %v1271, 8
        %v1288 = vpop.permute.xlu0 %1287
        %1289 = vrot.lane.b32.xlu0 %v1276, 8
        %v1290 = vpop.permute.xlu0 %1289
        %1291 = vrot.lane.b32.xlu0 %v1281, 8
        %v1292 = vpop.permute.xlu0 %1291
        %vm1296 = vcmask 130112
        %1297 = vst.msk [vmem:[#allocation2] sm:$0xff] %vm1296, %v1288
        %1298 = vst.msk [vmem:[#allocation2 + $0x8] sm:$0xff] %vm1296, %v1290
        %1299 = vst.msk [vmem:[#allocation2 + $0x10] sm:$0xff] %vm1296, %v1292
        %1300 = vrot.lane.b32.xlu0 %v787, 112
        %v1301 = vpop.permute.xlu0 %1300
        %1302 = vrot.lane.b32.xlu0 %v792, 112
        %v1303 = vpop.permute.xlu0 %1302
        %1304 = vrot.lane.b32.xlu0 %v797, 112
        %v1305 = vpop.permute.xlu0 %1304
        %1306 = vrot.lane.b32.xlu0 %v787, 80
        %v1307 = vpop.permute.xlu0 %1306
        %1308 = vrot.lane.b32.xlu0 %v792, 80
        %v1309 = vpop.permute.xlu0 %1308
        %1310 = vrot.lane.b32.xlu0 %v797, 80
        %v1311 = vpop.permute.xlu0 %1310
        %v1312 = vsel %vm809, %v1301, 0
        %v1314 = vsel %vm809, %v1303, 0
        %v1316 = vsel %vm809, %v1305, 0
        %v1318 = vsel %vm809, %v1307, 0
        %v1320 = vsel %vm809, %v1309, 0
        %v1322 = vsel %vm809, %v1311, 0
        %1324 = vmatprep.subr.mxu0 0.0
        %1325 = vmatpush1.xpose.msra.mxu0 0.0
        %1326 = vmatprep.subr.mxu0 0.0
        %1327 = vmatpush1.xpose.msra.mxu0 0.0
        %1328 = vmatprep.subr.mxu0 0.0
        %1329 = vmatpush1.xpose.msra.mxu0 0.0
        %1330 = vmatprep.subr.mxu0 0.0
        %1331 = vmatpush1.xpose.msra.mxu0 0.0
        %1332 = vmatprep.subr.mxu0 0.0
        %1333 = vmatpush1.xpose.msra.mxu0 0.0
        %1334 = vmatprep.subr.mxu0 0.0
        %1335 = vmatpush1.xpose.msra.mxu0 0.0
        %1336 = vmatprep.subr.mxu0 0.0
        %1337 = vmatpush1.xpose.msra.mxu0 0.0
        %1338 = vmatprep.subr.mxu0 0.0
        %1339 = vmatpush1.xpose.msra.mxu0 0.0
        %1340 = vmatprep.subr.mxu0 0.0
        %1341 = vmatpush1.xpose.msra.mxu0 0.0
        %1342 = vmatprep.subr.mxu0 0.0
        %1343 = vmatpush1.xpose.msra.mxu0 0.0
        %1344 = vmatprep.subr.mxu0 0.0
        %1345 = vmatpush1.xpose.msra.mxu0 0.0
        %1346 = vmatprep.subr.mxu0 0.0
        %1347 = vmatpush1.xpose.msra.mxu0 0.0
        %1348 = vmatprep.subr.mxu0 0.0
        %1349 = vmatpush1.xpose.msra.mxu0 0.0
        %1350 = vmatprep.subr.mxu0 0.0
        %1351 = vmatpush1.xpose.msra.mxu0 %v1322
        %1352 = vmatprep.subr.mxu0 0.0
        %1353 = vmatpush1.xpose.msra.mxu0 %v1320
        %1354 = vmatprep.subr.mxu0 0.0
        %1355 = vmatpush1.xpose.msra.mxu0 %v1318
        %1356 = vmatprep.subr.mxu0 0.0
        %1357 = vmatpush2.xpose.msra.mxu0 0.0
        %1358 = vmatprep.subr.mxu0 0.0
        %1359 = vmatpush2.xpose.msra.mxu0 0.0
        %1360 = vmatprep.subr.mxu0 0.0
        %1361 = vmatpush2.xpose.msra.mxu0 0.0
        %1362 = vmatprep.subr.mxu0 0.0
        %1363 = vmatpush2.xpose.msra.mxu0 0.0
        %1364 = vmatprep.subr.mxu0 0.0
        %1365 = vmatpush2.xpose.msra.mxu0 0.0
        %1366 = vmatprep.subr.mxu0 0.0
        %1367 = vmatpush2.xpose.msra.mxu0 0.0
        %1368 = vmatprep.subr.mxu0 0.0
        %1369 = vmatpush2.xpose.msra.mxu0 0.0
        %1370 = vmatprep.subr.mxu0 0.0
        %1371 = vmatpush2.xpose.msra.mxu0 0.0
        %1372 = vmatprep.subr.mxu0 0.0
        %1373 = vmatpush2.xpose.msra.mxu0 0.0
        %1374 = vmatprep.subr.mxu0 0.0
        %1375 = vmatpush2.xpose.msra.mxu0 0.0
        %1376 = vmatprep.subr.mxu0 0.0
        %1377 = vmatpush2.xpose.msra.mxu0 0.0
        %1378 = vmatprep.subr.mxu0 0.0
        %1379 = vmatpush2.xpose.msra.mxu0 0.0
        %1380 = vmatprep.subr.mxu0 0.0
        %1381 = vmatpush2.xpose.msra.mxu0 0.0
        %1382 = vmatprep.subr.mxu0 0.0
        %1383 = vmatpush2.xpose.msra.mxu0 0.0
        %1384 = vmatprep.subr.mxu0 0.0
        %1385 = vmatpush2.xpose.msra.mxu0 0.0
        %1386 = vmatprep.subr.mxu0 0.0
        %1387 = vmatpush2.xpose.msra.mxu0 0.0
        %1388 = vmatprep.mubr.f32.mxu0 0.0
        %1389 = vmatmul.mubr.f32.gmra.mxu0 %v1312
        %v1390 = vpop.f32.mrf.mxu0
        %v1391 = vadd.f32 0.0, %v1390
        %v1392 = vpop.f32.mrf.mxu0
        %1393 = vmatprep.mubr.f32.mxu0 0.0
        %1394 = vmatmul.mubr.f32.gmra.mxu0 %v1314
        %v1395 = vpop.f32.mrf.mxu0
        %v1396 = vadd.f32 0.0, %v1395
        %v1397 = vpop.f32.mrf.mxu0
        %1398 = vmatprep.mubr.f32.mxu0 0.0
        %1399 = vmatmul.mubr.f32.gmra.mxu0 %v1316
        %v1400 = vpop.f32.mrf.mxu0
        %v1401 = vadd.f32 0.0, %v1400
        %v1402 = vpop.f32.mrf.mxu0
        %1403 = vdwg.mxu0
        %v1404 = vmul.f32 %v1391, 0.35355338
        %v1405 = vmul.f32 %v1396, 0.35355338
        %v1406 = vmul.f32 %v1401, 0.35355338
        %v1407 = vadd.f32 %v1404, %v645
        %v1408 = vadd.f32 %v1405, %v645
        %v1409 = vadd.f32 %v1406, %v645
        %v1410 = vsel %vm908, %v1407, -inf
        %1411 = vmax.xlane.f32.xlu0 %v1410
        %v1412 = vpop.xlane.xlu0 %1411
        %v1413 = vsel %vm908, %v1408, -inf
        %1414 = vmax.xlane.f32.xlu0 %v1413
        %v1415 = vpop.xlane.xlu0 %1414
        %v1416 = vsel %vm908, %v1409, -inf
        %1417 = vmax.xlane.f32.xlu0 %v1416
        %v1418 = vpop.xlane.xlu0 %1417
        %v1419 = vsub.f32 %v1407, %v1412
        %v1420 = vsub.f32 %v1408, %v1415
        %v1421 = vsub.f32 %v1409, %v1418
        %v1422 = vmul.f32 %v1419, 1.442695
        %v1423 = vpow.pop %v1422
        %v1424 = vmul.f32 %v1420, 1.442695
        %v1425 = vpow.pop %v1424
        %v1426 = vmul.f32 %v1421, 1.442695
        %v1427 = vpow.pop %v1426
        %v1428 = vsel %vm908, %v1423, 0.0
        %1429 = vadd.xlane.f32.xlu0 %v1428
        %v1430 = vpop.xlane.xlu0 %1429
        %v1431 = vsel %vm908, %v1425, 0.0
        %1432 = vadd.xlane.f32.xlu0 %v1431
        %v1433 = vpop.xlane.xlu0 %1432
        %v1434 = vsel %vm908, %v1427, 0.0
        %1435 = vadd.xlane.f32.xlu0 %v1434
        %v1436 = vpop.xlane.xlu0 %1435
        %v1437 = vrcp.pop %v1430
        %v1438 = vrcp.pop %v1433
        %v1439 = vrcp.pop %v1436
        %v1440 = vmul.f32 %v1423, %v1437
        %v1441 = vmul.f32 %v1425, %v1438
        %v1442 = vmul.f32 %v1427, %v1439
        %1443 = vrot.lane.b32.xlu0 %v787, 48
        %v1444 = vpop.permute.xlu0 %1443
        %1445 = vrot.lane.b32.xlu0 %v792, 48
        %v1446 = vpop.permute.xlu0 %1445
        %1447 = vrot.lane.b32.xlu0 %v797, 48
        %v1448 = vpop.permute.xlu0 %1447
        %v1453 = vsel %vm908, %v1440, 0
        %v1456 = vsel %vm908, %v1441, 0
        %v1459 = vsel %vm908, %v1442, 0
        %1461 = vmatprep.subr.mxu0 0.0
        %1462 = vmatpush1.msra.mxu0 0.0
        %1463 = vmatprep.subr.mxu0 0.0
        %1464 = vmatpush1.msra.mxu0 0.0
        %1465 = vmatprep.subr.mxu0 0.0
        %1466 = vmatpush1.msra.mxu0 0.0
        %1467 = vmatprep.subr.mxu0 0.0
        %1468 = vmatpush1.msra.mxu0 0.0
        %1469 = vmatprep.subr.mxu0 0.0
        %1470 = vmatpush1.msra.mxu0 0.0
        %1471 = vmatprep.subr.mxu0 0.0
        %1472 = vmatpush1.msra.mxu0 0.0
        %1473 = vmatprep.subr.mxu0 0.0
        %1474 = vmatpush1.msra.mxu0 0.0
        %1475 = vmatprep.subr.mxu0 0.0
        %1476 = vmatpush1.msra.mxu0 0.0
        %1477 = vmatprep.subr.mxu0 0.0
        %1478 = vmatpush1.msra.mxu0 0.0
        %1479 = vmatprep.subr.mxu0 0.0
        %1480 = vmatpush1.msra.mxu0 0.0
        %1481 = vmatprep.subr.mxu0 0.0
        %1482 = vmatpush1.msra.mxu0 0.0
        %1483 = vmatprep.subr.mxu0 0.0
        %1484 = vmatpush1.msra.mxu0 0.0
        %1485 = vmatprep.subr.mxu0 0.0
        %1486 = vmatpush1.msra.mxu0 0.0
        %1487 = vmatprep.subr.mxu0 0.0
        %1488 = vmatpush1.msra.mxu0 %v1448
        %1489 = vmatprep.subr.mxu0 0.0
        %1490 = vmatpush1.msra.mxu0 %v1446
        %1491 = vmatprep.subr.mxu0 0.0
        %1492 = vmatpush1.msra.mxu0 %v1444
        %1493 = vmatprep.subr.mxu0 0.0
        %1494 = vmatpush2.msra.mxu0 0.0
        %1495 = vmatprep.subr.mxu0 0.0
        %1496 = vmatpush2.msra.mxu0 0.0
        %1497 = vmatprep.subr.mxu0 0.0
        %1498 = vmatpush2.msra.mxu0 0.0
        %1499 = vmatprep.subr.mxu0 0.0
        %1500 = vmatpush2.msra.mxu0 0.0
        %1501 = vmatprep.subr.mxu0 0.0
        %1502 = vmatpush2.msra.mxu0 0.0
        %1503 = vmatprep.subr.mxu0 0.0
        %1504 = vmatpush2.msra.mxu0 0.0
        %1505 = vmatprep.subr.mxu0 0.0
        %1506 = vmatpush2.msra.mxu0 0.0
        %1507 = vmatprep.subr.mxu0 0.0
        %1508 = vmatpush2.msra.mxu0 0.0
        %1509 = vmatprep.subr.mxu0 0.0
        %1510 = vmatpush2.msra.mxu0 0.0
        %1511 = vmatprep.subr.mxu0 0.0
        %1512 = vmatpush2.msra.mxu0 0.0
        %1513 = vmatprep.subr.mxu0 0.0
        %1514 = vmatpush2.msra.mxu0 0.0
        %1515 = vmatprep.subr.mxu0 0.0
        %1516 = vmatpush2.msra.mxu0 0.0
        %1517 = vmatprep.subr.mxu0 0.0
        %1518 = vmatpush2.msra.mxu0 0.0
        %1519 = vmatprep.subr.mxu0 0.0
        %1520 = vmatpush2.msra.mxu0 0.0
        %1521 = vmatprep.subr.mxu0 0.0
        %1522 = vmatpush2.msra.mxu0 0.0
        %1523 = vmatprep.subr.mxu0 0.0
        %1524 = vmatpush2.msra.mxu0 0.0
        %1525 = vmatprep.mubr.f32.mxu0 0.0
        %1526 = vmatmul.mubr.f32.gmra.mxu0 %v1453
        %v1527 = vpop.f32.mrf.mxu0
        %v1528 = vadd.f32 0.0, %v1527
        %v1529 = vpop.f32.mrf.mxu0
        %1530 = vmatprep.mubr.f32.mxu0 0.0
        %1531 = vmatmul.mubr.f32.gmra.mxu0 %v1456
        %v1532 = vpop.f32.mrf.mxu0
        %v1533 = vadd.f32 0.0, %v1532
        %v1534 = vpop.f32.mrf.mxu0
        %1535 = vmatprep.mubr.f32.mxu0 0.0
        %1536 = vmatmul.mubr.f32.gmra.mxu0 %v1459
        %v1537 = vpop.f32.mrf.mxu0
        %v1538 = vadd.f32 0.0, %v1537
        %v1539 = vpop.f32.mrf.mxu0
        %1540 = vdwg.mxu0
        %1544 = vrot.lane.b32.xlu0 %v1528, 16
        %v1545 = vpop.permute.xlu0 %1544
        %1546 = vrot.lane.b32.xlu0 %v1533, 16
        %v1547 = vpop.permute.xlu0 %1546
        %1548 = vrot.lane.b32.xlu0 %v1538, 16
        %v1549 = vpop.permute.xlu0 %1548
        %vm1553 = vcmask 195712
        %1554 = vst.msk [vmem:[#allocation2] sm:$0xff] %vm1553, %v1545
        %1555 = vst.msk [vmem:[#allocation2 + $0x8] sm:$0xff] %vm1553, %v1547
        %1556 = vst.msk [vmem:[#allocation2 + $0x10] sm:$0xff] %vm1553, %v1549
        %1557 = vrot.lane.b32.xlu0 %v787, 104
        %v1558 = vpop.permute.xlu0 %1557
        %1559 = vrot.lane.b32.xlu0 %v792, 104
        %v1560 = vpop.permute.xlu0 %1559
        %1561 = vrot.lane.b32.xlu0 %v797, 104
        %v1562 = vpop.permute.xlu0 %1561
        %1563 = vrot.lane.b32.xlu0 %v787, 72
        %v1564 = vpop.permute.xlu0 %1563
        %1565 = vrot.lane.b32.xlu0 %v792, 72
        %v1566 = vpop.permute.xlu0 %1565
        %1567 = vrot.lane.b32.xlu0 %v797, 72
        %v1568 = vpop.permute.xlu0 %1567
        %v1569 = vsel %vm809, %v1558, 0
        %v1571 = vsel %vm809, %v1560, 0
        %v1573 = vsel %vm809, %v1562, 0
        %v1575 = vsel %vm809, %v1564, 0
        %v1577 = vsel %vm809, %v1566, 0
        %v1579 = vsel %vm809, %v1568, 0
        %1581 = vmatprep.subr.mxu0 0.0
        %1582 = vmatpush1.xpose.msra.mxu0 0.0
        %1583 = vmatprep.subr.mxu0 0.0
        %1584 = vmatpush1.xpose.msra.mxu0 0.0
        %1585 = vmatprep.subr.mxu0 0.0
        %1586 = vmatpush1.xpose.msra.mxu0 0.0
        %1587 = vmatprep.subr.mxu0 0.0
        %1588 = vmatpush1.xpose.msra.mxu0 0.0
        %1589 = vmatprep.subr.mxu0 0.0
        %1590 = vmatpush1.xpose.msra.mxu0 0.0
        %1591 = vmatprep.subr.mxu0 0.0
        %1592 = vmatpush1.xpose.msra.mxu0 0.0
        %1593 = vmatprep.subr.mxu0 0.0
        %1594 = vmatpush1.xpose.msra.mxu0 0.0
        %1595 = vmatprep.subr.mxu0 0.0
        %1596 = vmatpush1.xpose.msra.mxu0 0.0
        %1597 = vmatprep.subr.mxu0 0.0
        %1598 = vmatpush1.xpose.msra.mxu0 0.0
        %1599 = vmatprep.subr.mxu0 0.0
        %1600 = vmatpush1.xpose.msra.mxu0 0.0
        %1601 = vmatprep.subr.mxu0 0.0
        %1602 = vmatpush1.xpose.msra.mxu0 0.0
        %1603 = vmatprep.subr.mxu0 0.0
        %1604 = vmatpush1.xpose.msra.mxu0 0.0
        %1605 = vmatprep.subr.mxu0 0.0
        %1606 = vmatpush1.xpose.msra.mxu0 0.0
        %1607 = vmatprep.subr.mxu0 0.0
        %1608 = vmatpush1.xpose.msra.mxu0 %v1579
        %1609 = vmatprep.subr.mxu0 0.0
        %1610 = vmatpush1.xpose.msra.mxu0 %v1577
        %1611 = vmatprep.subr.mxu0 0.0
        %1612 = vmatpush1.xpose.msra.mxu0 %v1575
        %1613 = vmatprep.subr.mxu0 0.0
        %1614 = vmatpush2.xpose.msra.mxu0 0.0
        %1615 = vmatprep.subr.mxu0 0.0
        %1616 = vmatpush2.xpose.msra.mxu0 0.0
        %1617 = vmatprep.subr.mxu0 0.0
        %1618 = vmatpush2.xpose.msra.mxu0 0.0
        %1619 = vmatprep.subr.mxu0 0.0
        %1620 = vmatpush2.xpose.msra.mxu0 0.0
        %1621 = vmatprep.subr.mxu0 0.0
        %1622 = vmatpush2.xpose.msra.mxu0 0.0
        %1623 = vmatprep.subr.mxu0 0.0
        %1624 = vmatpush2.xpose.msra.mxu0 0.0
        %1625 = vmatprep.subr.mxu0 0.0
        %1626 = vmatpush2.xpose.msra.mxu0 0.0
        %1627 = vmatprep.subr.mxu0 0.0
        %1628 = vmatpush2.xpose.msra.mxu0 0.0
        %1629 = vmatprep.subr.mxu0 0.0
        %1630 = vmatpush2.xpose.msra.mxu0 0.0
        %1631 = vmatprep.subr.mxu0 0.0
        %1632 = vmatpush2.xpose.msra.mxu0 0.0
        %1633 = vmatprep.subr.mxu0 0.0
        %1634 = vmatpush2.xpose.msra.mxu0 0.0
        %1635 = vmatprep.subr.mxu0 0.0
        %1636 = vmatpush2.xpose.msra.mxu0 0.0
        %1637 = vmatprep.subr.mxu0 0.0
        %1638 = vmatpush2.xpose.msra.mxu0 0.0
        %1639 = vmatprep.subr.mxu0 0.0
        %1640 = vmatpush2.xpose.msra.mxu0 0.0
        %1641 = vmatprep.subr.mxu0 0.0
        %1642 = vmatpush2.xpose.msra.mxu0 0.0
        %1643 = vmatprep.subr.mxu0 0.0
        %1644 = vmatpush2.xpose.msra.mxu0 0.0
        %1645 = vmatprep.mubr.f32.mxu0 0.0
        %1646 = vmatmul.mubr.f32.gmra.mxu0 %v1569
        %v1647 = vpop.f32.mrf.mxu0
        %v1648 = vadd.f32 0.0, %v1647
        %v1649 = vpop.f32.mrf.mxu0
        %1650 = vmatprep.mubr.f32.mxu0 0.0
        %1651 = vmatmul.mubr.f32.gmra.mxu0 %v1571
        %v1652 = vpop.f32.mrf.mxu0
        %v1653 = vadd.f32 0.0, %v1652
        %v1654 = vpop.f32.mrf.mxu0
        %1655 = vmatprep.mubr.f32.mxu0 0.0
        %1656 = vmatmul.mubr.f32.gmra.mxu0 %v1573
        %v1657 = vpop.f32.mrf.mxu0
        %v1658 = vadd.f32 0.0, %v1657
        %v1659 = vpop.f32.mrf.mxu0
        %1660 = vdwg.mxu0
        %v1661 = vmul.f32 %v1648, 0.35355338
        %v1662 = vmul.f32 %v1653, 0.35355338
        %v1663 = vmul.f32 %v1658, 0.35355338
        %v1664 = vadd.f32 %v1661, %v645
        %v1665 = vadd.f32 %v1662, %v645
        %v1666 = vadd.f32 %v1663, %v645
        %v1667 = vsel %vm908, %v1664, -inf
        %1668 = vmax.xlane.f32.xlu0 %v1667
        %v1669 = vpop.xlane.xlu0 %1668
        %v1670 = vsel %vm908, %v1665, -inf
        %1671 = vmax.xlane.f32.xlu0 %v1670
        %v1672 = vpop.xlane.xlu0 %1671
        %v1673 = vsel %vm908, %v1666, -inf
        %1674 = vmax.xlane.f32.xlu0 %v1673
        %v1675 = vpop.xlane.xlu0 %1674
        %v1676 = vsub.f32 %v1664, %v1669
        %v1677 = vsub.f32 %v1665, %v1672
        %v1678 = vsub.f32 %v1666, %v1675
        %v1679 = vmul.f32 %v1676, 1.442695
        %v1680 = vpow.pop %v1679
        %v1681 = vmul.f32 %v1677, 1.442695
        %v1682 = vpow.pop %v1681
        %v1683 = vmul.f32 %v1678, 1.442695
        %v1684 = vpow.pop %v1683
        %v1685 = vsel %vm908, %v1680, 0.0
        %1686 = vadd.xlane.f32.xlu0 %v1685
        %v1687 = vpop.xlane.xlu0 %1686
        %v1688 = vsel %vm908, %v1682, 0.0
        %1689 = vadd.xlane.f32.xlu0 %v1688
        %v1690 = vpop.xlane.xlu0 %1689
        %v1691 = vsel %vm908, %v1684, 0.0
        %1692 = vadd.xlane.f32.xlu0 %v1691
        %v1693 = vpop.xlane.xlu0 %1692
        %v1694 = vrcp.pop %v1687
        %v1695 = vrcp.pop %v1690
        %v1696 = vrcp.pop %v1693
        %v1697 = vmul.f32 %v1680, %v1694
        %v1698 = vmul.f32 %v1682, %v1695
        %v1699 = vmul.f32 %v1684, %v1696
        %1700 = vrot.lane.b32.xlu0 %v787, 40
        %v1701 = vpop.permute.xlu0 %1700
        %1702 = vrot.lane.b32.xlu0 %v792, 40
        %v1703 = vpop.permute.xlu0 %1702
        %1704 = vrot.lane.b32.xlu0 %v797, 40
        %v1705 = vpop.permute.xlu0 %1704
        %v1710 = vsel %vm908, %v1697, 0
        %v1713 = vsel %vm908, %v1698, 0
        %v1716 = vsel %vm908, %v1699, 0
        %1718 = vmatprep.subr.mxu0 0.0
        %1719 = vmatpush1.msra.mxu0 0.0
        %1720 = vmatprep.subr.mxu0 0.0
        %1721 = vmatpush1.msra.mxu0 0.0
        %1722 = vmatprep.subr.mxu0 0.0
        %1723 = vmatpush1.msra.mxu0 0.0
        %1724 = vmatprep.subr.mxu0 0.0
        %1725 = vmatpush1.msra.mxu0 0.0
        %1726 = vmatprep.subr.mxu0 0.0
        %1727 = vmatpush1.msra.mxu0 0.0
        %1728 = vmatprep.subr.mxu0 0.0
        %1729 = vmatpush1.msra.mxu0 0.0
        %1730 = vmatprep.subr.mxu0 0.0
        %1731 = vmatpush1.msra.mxu0 0.0
        %1732 = vmatprep.subr.mxu0 0.0
        %1733 = vmatpush1.msra.mxu0 0.0
        %1734 = vmatprep.subr.mxu0 0.0
        %1735 = vmatpush1.msra.mxu0 0.0
        %1736 = vmatprep.subr.mxu0 0.0
        %1737 = vmatpush1.msra.mxu0 0.0
        %1738 = vmatprep.subr.mxu0 0.0
        %1739 = vmatpush1.msra.mxu0 0.0
        %1740 = vmatprep.subr.mxu0 0.0
        %1741 = vmatpush1.msra.mxu0 0.0
        %1742 = vmatprep.subr.mxu0 0.0
        %1743 = vmatpush1.msra.mxu0 0.0
        %1744 = vmatprep.subr.mxu0 0.0
        %1745 = vmatpush1.msra.mxu0 %v1705
        %1746 = vmatprep.subr.mxu0 0.0
        %1747 = vmatpush1.msra.mxu0 %v1703
        %1748 = vmatprep.subr.mxu0 0.0
        %1749 = vmatpush1.msra.mxu0 %v1701
        %1750 = vmatprep.subr.mxu0 0.0
        %1751 = vmatpush2.msra.mxu0 0.0
        %1752 = vmatprep.subr.mxu0 0.0
        %1753 = vmatpush2.msra.mxu0 0.0
        %1754 = vmatprep.subr.mxu0 0.0
        %1755 = vmatpush2.msra.mxu0 0.0
        %1756 = vmatprep.subr.mxu0 0.0
        %1757 = vmatpush2.msra.mxu0 0.0
        %1758 = vmatprep.subr.mxu0 0.0
        %1759 = vmatpush2.msra.mxu0 0.0
        %1760 = vmatprep.subr.mxu0 0.0
        %1761 = vmatpush2.msra.mxu0 0.0
        %1762 = vmatprep.subr.mxu0 0.0
        %1763 = vmatpush2.msra.mxu0 0.0
        %1764 = vmatprep.subr.mxu0 0.0
        %1765 = vmatpush2.msra.mxu0 0.0
        %1766 = vmatprep.subr.mxu0 0.0
        %1767 = vmatpush2.msra.mxu0 0.0
        %1768 = vmatprep.subr.mxu0 0.0
        %1769 = vmatpush2.msra.mxu0 0.0
        %1770 = vmatprep.subr.mxu0 0.0
        %1771 = vmatpush2.msra.mxu0 0.0
        %1772 = vmatprep.subr.mxu0 0.0
        %1773 = vmatpush2.msra.mxu0 0.0
        %1774 = vmatprep.subr.mxu0 0.0
        %1775 = vmatpush2.msra.mxu0 0.0
        %1776 = vmatprep.subr.mxu0 0.0
        %1777 = vmatpush2.msra.mxu0 0.0
        %1778 = vmatprep.subr.mxu0 0.0
        %1779 = vmatpush2.msra.mxu0 0.0
        %1780 = vmatprep.subr.mxu0 0.0
        %1781 = vmatpush2.msra.mxu0 0.0
        %1782 = vmatprep.mubr.f32.mxu0 0.0
        %1783 = vmatmul.mubr.f32.gmra.mxu0 %v1710
        %v1784 = vpop.f32.mrf.mxu0
        %v1785 = vadd.f32 0.0, %v1784
        %v1786 = vpop.f32.mrf.mxu0
        %1787 = vmatprep.mubr.f32.mxu0 0.0
        %1788 = vmatmul.mubr.f32.gmra.mxu0 %v1713
        %v1789 = vpop.f32.mrf.mxu0
        %v1790 = vadd.f32 0.0, %v1789
        %v1791 = vpop.f32.mrf.mxu0
        %1792 = vmatprep.mubr.f32.mxu0 0.0
        %1793 = vmatmul.mubr.f32.gmra.mxu0 %v1716
        %v1794 = vpop.f32.mrf.mxu0
        %v1795 = vadd.f32 0.0, %v1794
        %v1796 = vpop.f32.mrf.mxu0
        %1797 = vdwg.mxu0
        %1801 = vrot.lane.b32.xlu0 %v1785, 24
        %v1802 = vpop.permute.xlu0 %1801
        %1803 = vrot.lane.b32.xlu0 %v1790, 24
        %v1804 = vpop.permute.xlu0 %1803
        %1805 = vrot.lane.b32.xlu0 %v1795, 24
        %v1806 = vpop.permute.xlu0 %1805
        %vm1810 = vcmask 261312
        %1811 = vst.msk [vmem:[#allocation2] sm:$0xff] %vm1810, %v1802
        %1812 = vst.msk [vmem:[#allocation2 + $0x8] sm:$0xff] %vm1810, %v1804
        %1813 = vst.msk [vmem:[#allocation2 + $0x10] sm:$0xff] %vm1810, %v1806
        %v1814 = vld [vmem:[#allocation2] sm:$0xff]
        %v1815 = vld [vmem:[#allocation2 + $0x8] sm:$0xff]
        %v1816 = vld [vmem:[#allocation2 + $0x10] sm:$0xff]
        %v1817 = vld [vmem:[%s8] sm:$0xff]
        %v1818 = vld [vmem:[%s8 + $0x8] sm:$0xff]
        %v1819 = vld [vmem:[%s8 + $0x10] sm:$0xff]
        %v1820 = vld [vmem:[%s8 + $0x18] sm:$0xff]
        %v1821 = vld [vmem:[%s9] sm:$0x1]
        %v1823 = vlaneseq
        %v1824 = vshrl.u32 %v1823, 7
        %v1825 = vsub.s32 0, %v1824
        %v1826 = vrot.slane %v1821, %v1825
        %v1829 = vsel %vm579, %v1814, 0
        %v1832 = vsel %vm579, %v1815, 0
        %v1835 = vsel %vm579, %v1816, 0
        %1837 = vmatprep.subr.mxu0 0.0
        %1838 = vmatpush1.msra.mxu0 0.0
        %1839 = vmatprep.subr.mxu0 0.0
        %1840 = vmatpush1.msra.mxu0 0.0
        %1841 = vmatprep.subr.mxu0 0.0
        %1842 = vmatpush1.msra.mxu0 0.0
        %1843 = vmatprep.subr.mxu0 0.0
        %1844 = vmatpush1.msra.mxu0 0.0
        %1845 = vmatprep.subr.mxu0 0.0
        %1846 = vmatpush1.msra.mxu0 0.0
        %1847 = vmatprep.subr.mxu0 0.0
        %1848 = vmatpush1.msra.mxu0 0.0
        %1849 = vmatprep.subr.mxu0 0.0
        %1850 = vmatpush1.msra.mxu0 0.0
        %1851 = vmatprep.subr.mxu0 0.0
        %1852 = vmatpush1.msra.mxu0 0.0
        %1853 = vmatprep.subr.mxu0 0.0
        %1854 = vmatpush1.msra.mxu0 0.0
        %1855 = vmatprep.subr.mxu0 0.0
        %1856 = vmatpush1.msra.mxu0 0.0
        %1857 = vmatprep.subr.mxu0 0.0
        %1858 = vmatpush1.msra.mxu0 0.0
        %1859 = vmatprep.subr.mxu0 0.0
        %1860 = vmatpush1.msra.mxu0 0.0
        %1861 = vmatprep.subr.mxu0 0.0
        %1862 = vmatpush1.msra.mxu0 %v1820
        %1863 = vmatprep.subr.mxu0 0.0
        %1864 = vmatpush1.msra.mxu0 %v1819
        %1865 = vmatprep.subr.mxu0 0.0
        %1866 = vmatpush1.msra.mxu0 %v1818
        %1867 = vmatprep.subr.mxu0 0.0
        %1868 = vmatpush1.msra.mxu0 %v1817
        %1869 = vmatprep.subr.mxu0 0.0
        %1870 = vmatpush2.msra.mxu0 0.0
        %1871 = vmatprep.subr.mxu0 0.0
        %1872 = vmatpush2.msra.mxu0 0.0
        %1873 = vmatprep.subr.mxu0 0.0
        %1874 = vmatpush2.msra.mxu0 0.0
        %1875 = vmatprep.subr.mxu0 0.0
        %1876 = vmatpush2.msra.mxu0 0.0
        %1877 = vmatprep.subr.mxu0 0.0
        %1878 = vmatpush2.msra.mxu0 0.0
        %1879 = vmatprep.subr.mxu0 0.0
        %1880 = vmatpush2.msra.mxu0 0.0
        %1881 = vmatprep.subr.mxu0 0.0
        %1882 = vmatpush2.msra.mxu0 0.0
        %1883 = vmatprep.subr.mxu0 0.0
        %1884 = vmatpush2.msra.mxu0 0.0
        %1885 = vmatprep.subr.mxu0 0.0
        %1886 = vmatpush2.msra.mxu0 0.0
        %1887 = vmatprep.subr.mxu0 0.0
        %1888 = vmatpush2.msra.mxu0 0.0
        %1889 = vmatprep.subr.mxu0 0.0
        %1890 = vmatpush2.msra.mxu0 0.0
        %1891 = vmatprep.subr.mxu0 0.0
        %1892 = vmatpush2.msra.mxu0 0.0
        %1893 = vmatprep.subr.mxu0 0.0
        %1894 = vmatpush2.msra.mxu0 0.0
        %1895 = vmatprep.subr.mxu0 0.0
        %1896 = vmatpush2.msra.mxu0 0.0
        %1897 = vmatprep.subr.mxu0 0.0
        %1898 = vmatpush2.msra.mxu0 0.0
        %1899 = vmatprep.subr.mxu0 0.0
        %1900 = vmatpush2.msra.mxu0 0.0
        %1901 = vmatprep.mubr.f32.mxu0 0.0
        %1902 = vmatmul.mubr.f32.gmra.mxu0 %v1829
        %v1903 = vpop.f32.mrf.mxu0
        %v1904 = vadd.f32 %v1826, %v1903
        %v1905 = vpop.f32.mrf.mxu0
        %1906 = vmatprep.mubr.f32.mxu0 0.0
        %1907 = vmatmul.mubr.f32.gmra.mxu0 %v1832
        %v1908 = vpop.f32.mrf.mxu0
        %v1909 = vadd.f32 %v1826, %v1908
        %v1910 = vpop.f32.mrf.mxu0
        %1911 = vmatprep.mubr.f32.mxu0 0.0
        %1912 = vmatmul.mubr.f32.gmra.mxu0 %v1835
        %v1913 = vpop.f32.mrf.mxu0
        %v1914 = vadd.f32 %v1826, %v1913
        %v1915 = vpop.f32.mrf.mxu0
        %1916 = vdwg.mxu0
        %v1917 = vadd.f32 %v639, %v1904
        %v1918 = vadd.f32 %v640, %v1909
        %v1919 = vadd.f32 %v641, %v1914
        %v1920 = vsel %vm579, %v1917, 0.0
        %1921 = vadd.xlane.f32.xlu0 %v1920
        %v1922 = vpop.xlane.xlu0 %1921
        %v1923 = vsel %vm579, %v1918, 0.0
        %1924 = vadd.xlane.f32.xlu0 %v1923
        %v1925 = vpop.xlane.xlu0 %1924
        %v1926 = vsel %vm579, %v1919, 0.0
        %1927 = vadd.xlane.f32.xlu0 %v1926
        %v1928 = vpop.xlane.xlu0 %1927
        %v1929 = vmul.f32 %v1922, %v597
        %v1930 = vmul.f32 %v1925, %v597
        %v1931 = vmul.f32 %v1928, %v597
        %v1932 = vsub.f32 %v1917, %v1929
        %v1933 = vsub.f32 %v1918, %v1930
        %v1934 = vsub.f32 %v1919, %v1931
        %v1935 = vmul.f32 %v1932, %v1932
        %v1936 = vmul.f32 %v1933, %v1933
        %v1937 = vmul.f32 %v1934, %v1934
        %v1938 = vsel %vm579, %v1935, 0.0
        %1939 = vadd.xlane.f32.xlu0 %v1938
        %v1940 = vpop.xlane.xlu0 %1939
        %v1941 = vsel %vm579, %v1936, 0.0
        %1942 = vadd.xlane.f32.xlu0 %v1941
        %v1943 = vpop.xlane.xlu0 %1942
        %v1944 = vsel %vm579, %v1937, 0.0
        %1945 = vadd.xlane.f32.xlu0 %v1944
        %v1946 = vpop.xlane.xlu0 %1945
        %v1947 = vmul.f32 %v1940, %v597
        %v1948 = vmul.f32 %v1943, %v597
        %v1949 = vmul.f32 %v1946, %v597
        %v1950 = vadd.f32 %v1947, 1e-05
        %v1951 = vadd.f32 %v1948, 1e-05
        %v1952 = vadd.f32 %v1949, 1e-05
        %v1953 = vrsqrt.pop %v1950
        %v1954 = vrsqrt.pop %v1951
        %v1955 = vrsqrt.pop %v1952
        %v1956 = vmul.f32 %v1932, %v1953
        %v1957 = vmul.f32 %v1933, %v1954
        %v1958 = vmul.f32 %v1934, %v1955
        %v1959 = vlaneseq
        %v1960 = vshrl.u32 %v1959, 7
        %v1961 = vsub.s32 2, %v1960
        %v1962 = vrot.slane %v646, %v1961
        %v1963 = vmul.f32 %v1956, %v1962
        %v1964 = vmul.f32 %v1957, %v1962
        %v1965 = vmul.f32 %v1958, %v1962
        %v1966 = vlaneseq
        %v1967 = vshrl.u32 %v1966, 7
        %v1968 = vsub.s32 3, %v1967
        %v1969 = vrot.slane %v646, %v1968
        %v1970 = vadd.f32 %v1963, %v1969
        %v1971 = vadd.f32 %v1964, %v1969
        %v1972 = vadd.f32 %v1965, %v1969
        %v1973 = vld [vmem:[%s10] sm:$0xff]
        %v1974 = vld [vmem:[%s10 + $0x8] sm:$0xff]
        %v1975 = vld [vmem:[%s10 + $0x10] sm:$0xff]
        %v1976 = vld [vmem:[%s10 + $0x18] sm:$0xff]
        %v1977 = vld [vmem:[%s11] sm:$0x1]
        %v1979 = vlaneseq
        %v1980 = vshrl.u32 %v1979, 7
        %v1981 = vsub.s32 0, %v1980
        %v1982 = vrot.slane %v1977, %v1981
        %v1985 = vsel %vm579, %v1970, 0
        %v1988 = vsel %vm579, %v1971, 0
        %v1991 = vsel %vm579, %v1972, 0
        %1993 = vmatprep.subr.mxu0 0.0
        %1994 = vmatpush1.msra.mxu0 0.0
        %1995 = vmatprep.subr.mxu0 0.0
        %1996 = vmatpush1.msra.mxu0 0.0
        %1997 = vmatprep.subr.mxu0 0.0
        %1998 = vmatpush1.msra.mxu0 0.0
        %1999 = vmatprep.subr.mxu0 0.0
        %2000 = vmatpush1.msra.mxu0 0.0
        %2001 = vmatprep.subr.mxu0 0.0
        %2002 = vmatpush1.msra.mxu0 0.0
        %2003 = vmatprep.subr.mxu0 0.0
        %2004 = vmatpush1.msra.mxu0 0.0
        %2005 = vmatprep.subr.mxu0 0.0
        %2006 = vmatpush1.msra.mxu0 0.0
        %2007 = vmatprep.subr.mxu0 0.0
        %2008 = vmatpush1.msra.mxu0 0.0
        %2009 = vmatprep.subr.mxu0 0.0
        %2010 = vmatpush1.msra.mxu0 0.0
        %2011 = vmatprep.subr.mxu0 0.0
        %2012 = vmatpush1.msra.mxu0 0.0
        %2013 = vmatprep.subr.mxu0 0.0
        %2014 = vmatpush1.msra.mxu0 0.0
        %2015 = vmatprep.subr.mxu0 0.0
        %2016 = vmatpush1.msra.mxu0 0.0
        %2017 = vmatprep.subr.mxu0 0.0
        %2018 = vmatpush1.msra.mxu0 %v1976
        %2019 = vmatprep.subr.mxu0 0.0
        %2020 = vmatpush1.msra.mxu0 %v1975
        %2021 = vmatprep.subr.mxu0 0.0
        %2022 = vmatpush1.msra.mxu0 %v1974
        %2023 = vmatprep.subr.mxu0 0.0
        %2024 = vmatpush1.msra.mxu0 %v1973
        %2025 = vmatprep.subr.mxu0 0.0
        %2026 = vmatpush2.msra.mxu0 0.0
        %2027 = vmatprep.subr.mxu0 0.0
        %2028 = vmatpush2.msra.mxu0 0.0
        %2029 = vmatprep.subr.mxu0 0.0
        %2030 = vmatpush2.msra.mxu0 0.0
        %2031 = vmatprep.subr.mxu0 0.0
        %2032 = vmatpush2.msra.mxu0 0.0
        %2033 = vmatprep.subr.mxu0 0.0
        %2034 = vmatpush2.msra.mxu0 0.0
        %2035 = vmatprep.subr.mxu0 0.0
        %2036 = vmatpush2.msra.mxu0 0.0
        %2037 = vmatprep.subr.mxu0 0.0
        %2038 = vmatpush2.msra.mxu0 0.0
        %2039 = vmatprep.subr.mxu0 0.0
        %2040 = vmatpush2.msra.mxu0 0.0
        %2041 = vmatprep.subr.mxu0 0.0
        %2042 = vmatpush2.msra.mxu0 0.0
        %2043 = vmatprep.subr.mxu0 0.0
        %2044 = vmatpush2.msra.mxu0 0.0
        %2045 = vmatprep.subr.mxu0 0.0
        %2046 = vmatpush2.msra.mxu0 0.0
        %2047 = vmatprep.subr.mxu0 0.0
        %2048 = vmatpush2.msra.mxu0 0.0
        %2049 = vmatprep.subr.mxu0 0.0
        %2050 = vmatpush2.msra.mxu0 0.0
        %2051 = vmatprep.subr.mxu0 0.0
        %2052 = vmatpush2.msra.mxu0 0.0
        %2053 = vmatprep.subr.mxu0 0.0
        %2054 = vmatpush2.msra.mxu0 0.0
        %2055 = vmatprep.subr.mxu0 0.0
        %2056 = vmatpush2.msra.mxu0 0.0
        %2057 = vmatprep.mubr.f32.mxu0 0.0
        %2058 = vmatmul.mubr.f32.gmra.mxu0 %v1985
        %v2059 = vpop.f32.mrf.mxu0
        %v2060 = vadd.f32 %v1982, %v2059
        %v2061 = vpop.f32.mrf.mxu0
        %2062 = vmatprep.mubr.f32.mxu0 0.0
        %2063 = vmatmul.mubr.f32.gmra.mxu0 %v1988
        %v2064 = vpop.f32.mrf.mxu0
        %v2065 = vadd.f32 %v1982, %v2064
        %v2066 = vpop.f32.mrf.mxu0
        %2067 = vmatprep.mubr.f32.mxu0 0.0
        %2068 = vmatmul.mubr.f32.gmra.mxu0 %v1991
        %v2069 = vpop.f32.mrf.mxu0
        %v2070 = vadd.f32 %v1982, %v2069
        %v2071 = vpop.f32.mrf.mxu0
        %2072 = vdwg.mxu0
        %v2073 = vmul.f32 %v2060, 1.702
        %v2074 = vmul.f32 %v2065, 1.702
        %v2075 = vmul.f32 %v2070, 1.702
        %v2076 = vxor.u32 %v2073, 2147483648
        %v2077 = vxor.u32 %v2074, 2147483648
        %v2078 = vxor.u32 %v2075, 2147483648
        %v2079 = vmul.f32 %v2076, 1.442695
        %v2080 = vpow.pop %v2079
        %v2081 = vmul.f32 %v2077, 1.442695
        %v2082 = vpow.pop %v2081
        %v2083 = vmul.f32 %v2078, 1.442695
        %v2084 = vpow.pop %v2083
        %v2085 = vadd.f32 %v2080, 1.0
        %v2086 = vadd.f32 %v2082, 1.0
        %v2087 = vadd.f32 %v2084, 1.0
        %v2088 = vrcp.pop %v2085
        %v2089 = vmul.f32 1.0, %v2088
        %v2090 = vrcp.pop %v2086
        %v2091 = vmul.f32 1.0, %v2090
        %v2092 = vrcp.pop %v2087
        %v2093 = vmul.f32 1.0, %v2092
        %v2094 = vmul.f32 %v2060, %v2089
        %v2095 = vmul.f32 %v2065, %v2091
        %v2096 = vmul.f32 %v2070, %v2093
        %v2097 = vld [vmem:[%s12] sm:$0xff]
        %v2098 = vld [vmem:[%s12 + $0x8] sm:$0xff]
        %v2099 = vld [vmem:[%s12 + $0x10] sm:$0xff]
        %v2100 = vld [vmem:[%s12 + $0x18] sm:$0xff]
        %v2101 = vld [vmem:[%s12 + $0x20] sm:$0xff]
        %v2102 = vld [vmem:[%s12 + $0x28] sm:$0xff]
        %v2103 = vld [vmem:[%s12 + $0x30] sm:$0xff]
        %v2104 = vld [vmem:[%s12 + $0x38] sm:$0xff]
        %v2105 = vld [vmem:[%s13] sm:$0x1]
        %v2107 = vlaneseq
        %v2108 = vshrl.u32 %v2107, 7
        %v2109 = vsub.s32 0, %v2108
        %v2110 = vrot.slane %v2105, %v2109
        %v2113 = vsel %vm493, %v2094, 0
        %v2116 = vsel %vm493, %v2095, 0
        %v2119 = vsel %vm493, %v2096, 0
        %2121 = vmatprep.subr.mxu0 0.0
        %2122 = vmatpush1.msra.mxu0 0.0
        %2123 = vmatprep.subr.mxu0 0.0
        %2124 = vmatpush1.msra.mxu0 0.0
        %2125 = vmatprep.subr.mxu0 0.0
        %2126 = vmatpush1.msra.mxu0 0.0
        %2127 = vmatprep.subr.mxu0 0.0
        %2128 = vmatpush1.msra.mxu0 0.0
        %2129 = vmatprep.subr.mxu0 0.0
        %2130 = vmatpush1.msra.mxu0 0.0
        %2131 = vmatprep.subr.mxu0 0.0
        %2132 = vmatpush1.msra.mxu0 0.0
        %2133 = vmatprep.subr.mxu0 0.0
        %2134 = vmatpush1.msra.mxu0 0.0
        %2135 = vmatprep.subr.mxu0 0.0
        %2136 = vmatpush1.msra.mxu0 0.0
        %2137 = vmatprep.subr.mxu0 0.0
        %2138 = vmatpush1.msra.mxu0 %v2104
        %2139 = vmatprep.subr.mxu0 0.0
        %2140 = vmatpush1.msra.mxu0 %v2103
        %2141 = vmatprep.subr.mxu0 0.0
        %2142 = vmatpush1.msra.mxu0 %v2102
        %2143 = vmatprep.subr.mxu0 0.0
        %2144 = vmatpush1.msra.mxu0 %v2101
        %2145 = vmatprep.subr.mxu0 0.0
        %2146 = vmatpush1.msra.mxu0 %v2100
        %2147 = vmatprep.subr.mxu0 0.0
        %2148 = vmatpush1.msra.mxu0 %v2099
        %2149 = vmatprep.subr.mxu0 0.0
        %2150 = vmatpush1.msra.mxu0 %v2098
        %2151 = vmatprep.subr.mxu0 0.0
        %2152 = vmatpush1.msra.mxu0 %v2097
        %2153 = vmatprep.subr.mxu0 0.0
        %2154 = vmatpush2.msra.mxu0 0.0
        %2155 = vmatprep.subr.mxu0 0.0
        %2156 = vmatpush2.msra.mxu0 0.0
        %2157 = vmatprep.subr.mxu0 0.0
        %2158 = vmatpush2.msra.mxu0 0.0
        %2159 = vmatprep.subr.mxu0 0.0
        %2160 = vmatpush2.msra.mxu0 0.0
        %2161 = vmatprep.subr.mxu0 0.0
        %2162 = vmatpush2.msra.mxu0 0.0
        %2163 = vmatprep.subr.mxu0 0.0
        %2164 = vmatpush2.msra.mxu0 0.0
        %2165 = vmatprep.subr.mxu0 0.0
        %2166 = vmatpush2.msra.mxu0 0.0
        %2167 = vmatprep.subr.mxu0 0.0
        %2168 = vmatpush2.msra.mxu0 0.0
        %2169 = vmatprep.subr.mxu0 0.0
        %2170 = vmatpush2.msra.mxu0 0.0
        %2171 = vmatprep.subr.mxu0 0.0
        %2172 = vmatpush2.msra.mxu0 0.0
        %2173 = vmatprep.subr.mxu0 0.0
        %2174 = vmatpush2.msra.mxu0 0.0
        %2175 = vmatprep.subr.mxu0 0.0
        %2176 = vmatpush2.msra.mxu0 0.0
        %2177 = vmatprep.subr.mxu0 0.0
        %2178 = vmatpush2.msra.mxu0 0.0
        %2179 = vmatprep.subr.mxu0 0.0
        %2180 = vmatpush2.msra.mxu0 0.0
        %2181 = vmatprep.subr.mxu0 0.0
        %2182 = vmatpush2.msra.mxu0 0.0
        %2183 = vmatprep.subr.mxu0 0.0
        %2184 = vmatpush2.msra.mxu0 0.0
        %2185 = vmatprep.mubr.f32.mxu0 0.0
        %2186 = vmatmul.mubr.f32.gmra.mxu0 %v2113
        %v2187 = vpop.f32.mrf.mxu0
        %v2188 = vadd.f32 %v2110, %v2187
        %v2189 = vpop.f32.mrf.mxu0
        %2190 = vmatprep.mubr.f32.mxu0 0.0
        %2191 = vmatmul.mubr.f32.gmra.mxu0 %v2116
        %v2192 = vpop.f32.mrf.mxu0
        %v2193 = vadd.f32 %v2110, %v2192
        %v2194 = vpop.f32.mrf.mxu0
        %2195 = vmatprep.mubr.f32.mxu0 0.0
        %2196 = vmatmul.mubr.f32.gmra.mxu0 %v2119
        %v2197 = vpop.f32.mrf.mxu0
        %v2198 = vadd.f32 %v2110, %v2197
        %v2199 = vpop.f32.mrf.mxu0
        %2200 = vdwg.mxu0
        %v2201 = vadd.f32 %v1917, %v2188
        %v2202 = vadd.f32 %v1918, %v2193
        %v2203 = vadd.f32 %v1919, %v2198
        %s2204 = scalar_lea.vmem %s5, 4
        %v2205 = vld [vmem:[%s2204] sm:$0xf]
        %v2206 = vsel %vm579, %v2201, 0.0
        %2207 = vadd.xlane.f32.xlu0 %v2206
        %v2208 = vpop.xlane.xlu0 %2207
        %v2209 = vsel %vm579, %v2202, 0.0
        %2210 = vadd.xlane.f32.xlu0 %v2209
        %v2211 = vpop.xlane.xlu0 %2210
        %v2212 = vsel %vm579, %v2203, 0.0
        %2213 = vadd.xlane.f32.xlu0 %v2212
        %v2214 = vpop.xlane.xlu0 %2213
        %v2215 = vmul.f32 %v2208, %v597
        %v2216 = vmul.f32 %v2211, %v597
        %v2217 = vmul.f32 %v2214, %v597
        %v2218 = vsub.f32 %v2201, %v2215
        %v2219 = vsub.f32 %v2202, %v2216
        %v2220 = vsub.f32 %v2203, %v2217
        %v2221 = vmul.f32 %v2218, %v2218
        %v2222 = vmul.f32 %v2219, %v2219
        %v2223 = vmul.f32 %v2220, %v2220
        %v2224 = vsel %vm579, %v2221, 0.0
        %2225 = vadd.xlane.f32.xlu0 %v2224
        %v2226 = vpop.xlane.xlu0 %2225
        %v2227 = vsel %vm579, %v2222, 0.0
        %2228 = vadd.xlane.f32.xlu0 %v2227
        %v2229 = vpop.xlane.xlu0 %2228
        %v2230 = vsel %vm579, %v2223, 0.0
        %2231 = vadd.xlane.f32.xlu0 %v2230
        %v2232 = vpop.xlane.xlu0 %2231
        %v2233 = vmul.f32 %v2226, %v597
        %v2234 = vmul.f32 %v2229, %v597
        %v2235 = vmul.f32 %v2232, %v597
        %v2236 = vadd.f32 %v2233, 1e-05
        %v2237 = vadd.f32 %v2234, 1e-05
        %v2238 = vadd.f32 %v2235, 1e-05
        %v2239 = vrsqrt.pop %v2236
        %v2240 = vrsqrt.pop %v2237
        %v2241 = vrsqrt.pop %v2238
        %v2242 = vmul.f32 %v2218, %v2239
        %v2243 = vmul.f32 %v2219, %v2240
        %v2244 = vmul.f32 %v2220, %v2241
        %v2245 = vlaneseq
        %v2246 = vshrl.u32 %v2245, 7
        %v2247 = vsub.s32 0, %v2246
        %v2248 = vrot.slane %v2205, %v2247
        %v2249 = vmul.f32 %v2242, %v2248
        %v2250 = vmul.f32 %v2243, %v2248
        %v2251 = vmul.f32 %v2244, %v2248
        %v2252 = vlaneseq
        %v2253 = vshrl.u32 %v2252, 7
        %v2254 = vsub.s32 1, %v2253
        %v2255 = vrot.slane %v2205, %v2254
        %v2256 = vadd.f32 %v2249, %v2255
        %v2257 = vadd.f32 %v2250, %v2255
        %v2258 = vadd.f32 %v2251, %v2255
        %s2259 = scalar_lea.vmem %s6, 32
        %v2260 = vld [vmem:[%s2259] sm:$0xff]
        %v2261 = vld [vmem:[%s2259 + $0x8] sm:$0xff]
        %v2262 = vld [vmem:[%s2259 + $0x10] sm:$0xff]
        %v2263 = vld [vmem:[%s2259 + $0x18] sm:$0xff]
        %s2264 = scalar_lea.vmem %s7, 1
        %v2265 = vld [vmem:[%s2264] sm:$0x1]
        %v2267 = vlaneseq
        %v2268 = vshrl.u32 %v2267, 7
        %v2269 = vsub.s32 0, %v2268
        %v2270 = vrot.slane %v2265, %v2269
        %v2273 = vsel %vm579, %v2256, 0
        %v2276 = vsel %vm579, %v2257, 0
        %v2279 = vsel %vm579, %v2258, 0
        %2281 = vmatprep.subr.mxu0 0.0
        %2282 = vmatpush1.msra.mxu0 0.0
        %2283 = vmatprep.subr.mxu0 0.0
        %2284 = vmatpush1.msra.mxu0 0.0
        %2285 = vmatprep.subr.mxu0 0.0
        %2286 = vmatpush1.msra.mxu0 0.0
        %2287 = vmatprep.subr.mxu0 0.0
        %2288 = vmatpush1.msra.mxu0 0.0
        %2289 = vmatprep.subr.mxu0 0.0
        %2290 = vmatpush1.msra.mxu0 0.0
        %2291 = vmatprep.subr.mxu0 0.0
        %2292 = vmatpush1.msra.mxu0 0.0
        %2293 = vmatprep.subr.mxu0 0.0
        %2294 = vmatpush1.msra.mxu0 0.0
        %2295 = vmatprep.subr.mxu0 0.0
        %2296 = vmatpush1.msra.mxu0 0.0
        %2297 = vmatprep.subr.mxu0 0.0
        %2298 = vmatpush1.msra.mxu0 0.0
        %2299 = vmatprep.subr.mxu0 0.0
        %2300 = vmatpush1.msra.mxu0 0.0
        %2301 = vmatprep.subr.mxu0 0.0
        %2302 = vmatpush1.msra.mxu0 0.0
        %2303 = vmatprep.subr.mxu0 0.0
        %2304 = vmatpush1.msra.mxu0 0.0
        %2305 = vmatprep.subr.mxu0 0.0
        %2306 = vmatpush1.msra.mxu0 %v2263
        %2307 = vmatprep.subr.mxu0 0.0
        %2308 = vmatpush1.msra.mxu0 %v2262
        %2309 = vmatprep.subr.mxu0 0.0
        %2310 = vmatpush1.msra.mxu0 %v2261
        %2311 = vmatprep.subr.mxu0 0.0
        %2312 = vmatpush1.msra.mxu0 %v2260
        %2313 = vmatprep.subr.mxu0 0.0
        %2314 = vmatpush2.msra.mxu0 0.0
        %2315 = vmatprep.subr.mxu0 0.0
        %2316 = vmatpush2.msra.mxu0 0.0
        %2317 = vmatprep.subr.mxu0 0.0
        %2318 = vmatpush2.msra.mxu0 0.0
        %2319 = vmatprep.subr.mxu0 0.0
        %2320 = vmatpush2.msra.mxu0 0.0
        %2321 = vmatprep.subr.mxu0 0.0
        %2322 = vmatpush2.msra.mxu0 0.0
        %2323 = vmatprep.subr.mxu0 0.0
        %2324 = vmatpush2.msra.mxu0 0.0
        %2325 = vmatprep.subr.mxu0 0.0
        %2326 = vmatpush2.msra.mxu0 0.0
        %2327 = vmatprep.subr.mxu0 0.0
        %2328 = vmatpush2.msra.mxu0 0.0
        %2329 = vmatprep.subr.mxu0 0.0
        %2330 = vmatpush2.msra.mxu0 0.0
        %2331 = vmatprep.subr.mxu0 0.0
        %2332 = vmatpush2.msra.mxu0 0.0
        %2333 = vmatprep.subr.mxu0 0.0
        %2334 = vmatpush2.msra.mxu0 0.0
        %2335 = vmatprep.subr.mxu0 0.0
        %2336 = vmatpush2.msra.mxu0 0.0
        %2337 = vmatprep.subr.mxu0 0.0
        %2338 = vmatpush2.msra.mxu0 0.0
        %2339 = vmatprep.subr.mxu0 0.0
        %2340 = vmatpush2.msra.mxu0 0.0
        %2341 = vmatprep.subr.mxu0 0.0
        %2342 = vmatpush2.msra.mxu0 0.0
        %2343 = vmatprep.subr.mxu0 0.0
        %2344 = vmatpush2.msra.mxu0 0.0
        %2345 = vmatprep.mubr.f32.mxu0 0.0
        %2346 = vmatmul.mubr.f32.gmra.mxu0 %v2273
        %v2347 = vpop.f32.mrf.mxu0
        %v2348 = vadd.f32 %v2270, %v2347
        %v2349 = vpop.f32.mrf.mxu0
        %2350 = vmatprep.mubr.f32.mxu0 0.0
        %2351 = vmatmul.mubr.f32.gmra.mxu0 %v2276
        %v2352 = vpop.f32.mrf.mxu0
        %v2353 = vadd.f32 %v2270, %v2352
        %v2354 = vpop.f32.mrf.mxu0
        %2355 = vmatprep.mubr.f32.mxu0 0.0
        %2356 = vmatmul.mubr.f32.gmra.mxu0 %v2279
        %v2357 = vpop.f32.mrf.mxu0
        %v2358 = vadd.f32 %v2270, %v2357
        %v2359 = vpop.f32.mrf.mxu0
        %2360 = vdwg.mxu0
        %2364 = vrot.lane.b32.xlu0 %v2348, 96
        %v2365 = vpop.permute.xlu0 %2364
        %2366 = vrot.lane.b32.xlu0 %v2353, 96
        %v2367 = vpop.permute.xlu0 %2366
        %2368 = vrot.lane.b32.xlu0 %v2358, 96
        %v2369 = vpop.permute.xlu0 %2368
        %v2370 = vsel %vm809, %v2348, 0
        %v2372 = vsel %vm809, %v2353, 0
        %v2374 = vsel %vm809, %v2358, 0
        %v2376 = vsel %vm809, %v2365, 0
        %v2378 = vsel %vm809, %v2367, 0
        %v2380 = vsel %vm809, %v2369, 0
        %2382 = vmatprep.subr.mxu0 0.0
        %2383 = vmatpush1.xpose.msra.mxu0 0.0
        %2384 = vmatprep.subr.mxu0 0.0
        %2385 = vmatpush1.xpose.msra.mxu0 0.0
        %2386 = vmatprep.subr.mxu0 0.0
        %2387 = vmatpush1.xpose.msra.mxu0 0.0
        %2388 = vmatprep.subr.mxu0 0.0
        %2389 = vmatpush1.xpose.msra.mxu0 0.0
        %2390 = vmatprep.subr.mxu0 0.0
        %2391 = vmatpush1.xpose.msra.mxu0 0.0
        %2392 = vmatprep.subr.mxu0 0.0
        %2393 = vmatpush1.xpose.msra.mxu0 0.0
        %2394 = vmatprep.subr.mxu0 0.0
        %2395 = vmatpush1.xpose.msra.mxu0 0.0
        %2396 = vmatprep.subr.mxu0 0.0
        %2397 = vmatpush1.xpose.msra.mxu0 0.0
        %2398 = vmatprep.subr.mxu0 0.0
        %2399 = vmatpush1.xpose.msra.mxu0 0.0
        %2400 = vmatprep.subr.mxu0 0.0
        %2401 = vmatpush1.xpose.msra.mxu0 0.0
        %2402 = vmatprep.subr.mxu0 0.0
        %2403 = vmatpush1.xpose.msra.mxu0 0.0
        %2404 = vmatprep.subr.mxu0 0.0
        %2405 = vmatpush1.xpose.msra.mxu0 0.0
        %2406 = vmatprep.subr.mxu0 0.0
        %2407 = vmatpush1.xpose.msra.mxu0 0.0
        %2408 = vmatprep.subr.mxu0 0.0
        %2409 = vmatpush1.xpose.msra.mxu0 %v2380
        %2410 = vmatprep.subr.mxu0 0.0
        %2411 = vmatpush1.xpose.msra.mxu0 %v2378
        %2412 = vmatprep.subr.mxu0 0.0
        %2413 = vmatpush1.xpose.msra.mxu0 %v2376
        %2414 = vmatprep.subr.mxu0 0.0
        %2415 = vmatpush2.xpose.msra.mxu0 0.0
        %2416 = vmatprep.subr.mxu0 0.0
        %2417 = vmatpush2.xpose.msra.mxu0 0.0
        %2418 = vmatprep.subr.mxu0 0.0
        %2419 = vmatpush2.xpose.msra.mxu0 0.0
        %2420 = vmatprep.subr.mxu0 0.0
        %2421 = vmatpush2.xpose.msra.mxu0 0.0
        %2422 = vmatprep.subr.mxu0 0.0
        %2423 = vmatpush2.xpose.msra.mxu0 0.0
        %2424 = vmatprep.subr.mxu0 0.0
        %2425 = vmatpush2.xpose.msra.mxu0 0.0
        %2426 = vmatprep.subr.mxu0 0.0
        %2427 = vmatpush2.xpose.msra.mxu0 0.0
        %2428 = vmatprep.subr.mxu0 0.0
        %2429 = vmatpush2.xpose.msra.mxu0 0.0
        %2430 = vmatprep.subr.mxu0 0.0
        %2431 = vmatpush2.xpose.msra.mxu0 0.0
        %2432 = vmatprep.subr.mxu0 0.0
        %2433 = vmatpush2.xpose.msra.mxu0 0.0
        %2434 = vmatprep.subr.mxu0 0.0
        %2435 = vmatpush2.xpose.msra.mxu0 0.0
        %2436 = vmatprep.subr.mxu0 0.0
        %2437 = vmatpush2.xpose.msra.mxu0 0.0
        %2438 = vmatprep.subr.mxu0 0.0
        %2439 = vmatpush2.xpose.msra.mxu0 0.0
        %2440 = vmatprep.subr.mxu0 0.0
        %2441 = vmatpush2.xpose.msra.mxu0 0.0
        %2442 = vmatprep.subr.mxu0 0.0
        %2443 = vmatpush2.xpose.msra.mxu0 0.0
        %2444 = vmatprep.subr.mxu0 0.0
        %2445 = vmatpush2.xpose.msra.mxu0 0.0
        %2446 = vmatprep.mubr.f32.mxu0 0.0
        %2447 = vmatmul.mubr.f32.gmra.mxu0 %v2370
        %v2448 = vpop.f32.mrf.mxu0
        %v2449 = vadd.f32 0.0, %v2448
        %v2450 = vpop.f32.mrf.mxu0
        %2451 = vmatprep.mubr.f32.mxu0 0.0
        %2452 = vmatmul.mubr.f32.gmra.mxu0 %v2372
        %v2453 = vpop.f32.mrf.mxu0
        %v2454 = vadd.f32 0.0, %v2453
        %v2455 = vpop.f32.mrf.mxu0
        %2456 = vmatprep.mubr.f32.mxu0 0.0
        %2457 = vmatmul.mubr.f32.gmra.mxu0 %v2374
        %v2458 = vpop.f32.mrf.mxu0
        %v2459 = vadd.f32 0.0, %v2458
        %v2460 = vpop.f32.mrf.mxu0
        %2461 = vdwg.mxu0
        %v2462 = vmul.f32 %v2449, 0.35355338
        %v2463 = vmul.f32 %v2454, 0.35355338
        %v2464 = vmul.f32 %v2459, 0.35355338
        %v2465 = vadd.f32 %v2462, %v645
        %v2466 = vadd.f32 %v2463, %v645
        %v2467 = vadd.f32 %v2464, %v645
        %v2468 = vsel %vm908, %v2465, -inf
        %2469 = vmax.xlane.f32.xlu0 %v2468
        %v2470 = vpop.xlane.xlu0 %2469
        %v2471 = vsel %vm908, %v2466, -inf
        %2472 = vmax.xlane.f32.xlu0 %v2471
        %v2473 = vpop.xlane.xlu0 %2472
        %v2474 = vsel %vm908, %v2467, -inf
        %2475 = vmax.xlane.f32.xlu0 %v2474
        %v2476 = vpop.xlane.xlu0 %2475
        %v2477 = vsub.f32 %v2465, %v2470
        %v2478 = vsub.f32 %v2466, %v2473
        %v2479 = vsub.f32 %v2467, %v2476
        %v2480 = vmul.f32 %v2477, 1.442695
        %v2481 = vpow.pop %v2480
        %v2482 = vmul.f32 %v2478, 1.442695
        %v2483 = vpow.pop %v2482
        %v2484 = vmul.f32 %v2479, 1.442695
        %v2485 = vpow.pop %v2484
        %v2486 = vsel %vm908, %v2481, 0.0
        %2487 = vadd.xlane.f32.xlu0 %v2486
        %v2488 = vpop.xlane.xlu0 %2487
        %v2489 = vsel %vm908, %v2483, 0.0
        %2490 = vadd.xlane.f32.xlu0 %v2489
        %v2491 = vpop.xlane.xlu0 %2490
        %v2492 = vsel %vm908, %v2485, 0.0
        %2493 = vadd.xlane.f32.xlu0 %v2492
        %v2494 = vpop.xlane.xlu0 %2493
        %v2495 = vrcp.pop %v2488
        %v2496 = vrcp.pop %v2491
        %v2497 = vrcp.pop %v2494
        %v2498 = vmul.f32 %v2481, %v2495
        %v2499 = vmul.f32 %v2483, %v2496
        %v2500 = vmul.f32 %v2485, %v2497
        %2501 = vrot.lane.b32.xlu0 %v2348, 64
        %v2502 = vpop.permute.xlu0 %2501
        %2503 = vrot.lane.b32.xlu0 %v2353, 64
        %v2504 = vpop.permute.xlu0 %2503
        %2505 = vrot.lane.b32.xlu0 %v2358, 64
        %v2506 = vpop.permute.xlu0 %2505
        %v2511 = vsel %vm908, %v2498, 0
        %v2514 = vsel %vm908, %v2499, 0
        %v2517 = vsel %vm908, %v2500, 0
        %2519 = vmatprep.subr.mxu0 0.0
        %2520 = vmatpush1.msra.mxu0 0.0
        %2521 = vmatprep.subr.mxu0 0.0
        %2522 = vmatpush1.msra.mxu0 0.0
        %2523 = vmatprep.subr.mxu0 0.0
        %2524 = vmatpush1.msra.mxu0 0.0
        %2525 = vmatprep.subr.mxu0 0.0
        %2526 = vmatpush1.msra.mxu0 0.0
        %2527 = vmatprep.subr.mxu0 0.0
        %2528 = vmatpush1.msra.mxu0 0.0
        %2529 = vmatprep.subr.mxu0 0.0
        %2530 = vmatpush1.msra.mxu0 0.0
        %2531 = vmatprep.subr.mxu0 0.0
        %2532 = vmatpush1.msra.mxu0 0.0
        %2533 = vmatprep.subr.mxu0 0.0
        %2534 = vmatpush1.msra.mxu0 0.0
        %2535 = vmatprep.subr.mxu0 0.0
        %2536 = vmatpush1.msra.mxu0 0.0
        %2537 = vmatprep.subr.mxu0 0.0
        %2538 = vmatpush1.msra.mxu0 0.0
        %2539 = vmatprep.subr.mxu0 0.0
        %2540 = vmatpush1.msra.mxu0 0.0
        %2541 = vmatprep.subr.mxu0 0.0
        %2542 = vmatpush1.msra.mxu0 0.0
        %2543 = vmatprep.subr.mxu0 0.0
        %2544 = vmatpush1.msra.mxu0 0.0
        %2545 = vmatprep.subr.mxu0 0.0
        %2546 = vmatpush1.msra.mxu0 %v2506
        %2547 = vmatprep.subr.mxu0 0.0
        %2548 = vmatpush1.msra.mxu0 %v2504
        %2549 = vmatprep.subr.mxu0 0.0
        %2550 = vmatpush1.msra.mxu0 %v2502
        %2551 = vmatprep.subr.mxu0 0.0
        %2552 = vmatpush2.msra.mxu0 0.0
        %2553 = vmatprep.subr.mxu0 0.0
        %2554 = vmatpush2.msra.mxu0 0.0
        %2555 = vmatprep.subr.mxu0 0.0
        %2556 = vmatpush2.msra.mxu0 0.0
        %2557 = vmatprep.subr.mxu0 0.0
        %2558 = vmatpush2.msra.mxu0 0.0
        %2559 = vmatprep.subr.mxu0 0.0
        %2560 = vmatpush2.msra.mxu0 0.0
        %2561 = vmatprep.subr.mxu0 0.0
        %2562 = vmatpush2.msra.mxu0 0.0
        %2563 = vmatprep.subr.mxu0 0.0
        %2564 = vmatpush2.msra.mxu0 0.0
        %2565 = vmatprep.subr.mxu0 0.0
        %2566 = vmatpush2.msra.mxu0 0.0
        %2567 = vmatprep.subr.mxu0 0.0
        %2568 = vmatpush2.msra.mxu0 0.0
        %2569 = vmatprep.subr.mxu0 0.0
        %2570 = vmatpush2.msra.mxu0 0.0
        %2571 = vmatprep.subr.mxu0 0.0
        %2572 = vmatpush2.msra.mxu0 0.0
        %2573 = vmatprep.subr.mxu0 0.0
        %2574 = vmatpush2.msra.mxu0 0.0
        %2575 = vmatprep.subr.mxu0 0.0
        %2576 = vmatpush2.msra.mxu0 0.0
        %2577 = vmatprep.subr.mxu0 0.0
        %2578 = vmatpush2.msra.mxu0 0.0
        %2579 = vmatprep.subr.mxu0 0.0
        %2580 = vmatpush2.msra.mxu0 0.0
        %2581 = vmatprep.subr.mxu0 0.0
        %2582 = vmatpush2.msra.mxu0 0.0
        %2583 = vmatprep.mubr.f32.mxu0 0.0
        %2584 = vmatmul.mubr.f32.gmra.mxu0 %v2511
        %v2585 = vpop.f32.mrf.mxu0
        %v2586 = vadd.f32 0.0, %v2585
        %v2587 = vpop.f32.mrf.mxu0
        %2588 = vmatprep.mubr.f32.mxu0 0.0
        %2589 = vmatmul.mubr.f32.gmra.mxu0 %v2514
        %v2590 = vpop.f32.mrf.mxu0
        %v2591 = vadd.f32 0.0, %v2590
        %v2592 = vpop.f32.mrf.mxu0
        %2593 = vmatprep.mubr.f32.mxu0 0.0
        %2594 = vmatmul.mubr.f32.gmra.mxu0 %v2517
        %v2595 = vpop.f32.mrf.mxu0
        %v2596 = vadd.f32 0.0, %v2595
        %v2597 = vpop.f32.mrf.mxu0
        %2598 = vdwg.mxu0
        %2599 = vst.msk [vmem:[#allocation2] sm:$0xff] %vm809, %v2586
        %2600 = vst.msk [vmem:[#allocation2 + $0x8] sm:$0xff] %vm809, %v2591
        %2601 = vst.msk [vmem:[#allocation2 + $0x10] sm:$0xff] %vm809, %v2596
        %2602 = vrot.lane.b32.xlu0 %v2348, 120
        %v2603 = vpop.permute.xlu0 %2602
        %2604 = vrot.lane.b32.xlu0 %v2353, 120
        %v2605 = vpop.permute.xlu0 %2604
        %2606 = vrot.lane.b32.xlu0 %v2358, 120
        %v2607 = vpop.permute.xlu0 %2606
        %2608 = vrot.lane.b32.xlu0 %v2348, 88
        %v2609 = vpop.permute.xlu0 %2608
        %2610 = vrot.lane.b32.xlu0 %v2353, 88
        %v2611 = vpop.permute.xlu0 %2610
        %2612 = vrot.lane.b32.xlu0 %v2358, 88
        %v2613 = vpop.permute.xlu0 %2612
        %v2614 = vsel %vm809, %v2603, 0
        %v2616 = vsel %vm809, %v2605, 0
        %v2618 = vsel %vm809, %v2607, 0
        %v2620 = vsel %vm809, %v2609, 0
        %v2622 = vsel %vm809, %v2611, 0
        %v2624 = vsel %vm809, %v2613, 0
        %2626 = vmatprep.subr.mxu0 0.0
        %2627 = vmatpush1.xpose.msra.mxu0 0.0
        %2628 = vmatprep.subr.mxu0 0.0
        %2629 = vmatpush1.xpose.msra.mxu0 0.0
        %2630 = vmatprep.subr.mxu0 0.0
        %2631 = vmatpush1.xpose.msra.mxu0 0.0
        %2632 = vmatprep.subr.mxu0 0.0
        %2633 = vmatpush1.xpose.msra.mxu0 0.0
        %2634 = vmatprep.subr.mxu0 0.0
        %2635 = vmatpush1.xpose.msra.mxu0 0.0
        %2636 = vmatprep.subr.mxu0 0.0
        %2637 = vmatpush1.xpose.msra.mxu0 0.0
        %2638 = vmatprep.subr.mxu0 0.0
        %2639 = vmatpush1.xpose.msra.mxu0 0.0
        %2640 = vmatprep.subr.mxu0 0.0
        %2641 = vmatpush1.xpose.msra.mxu0 0.0
        %2642 = vmatprep.subr.mxu0 0.0
        %2643 = vmatpush1.xpose.msra.mxu0 0.0
        %2644 = vmatprep.subr.mxu0 0.0
        %2645 = vmatpush1.xpose.msra.mxu0 0.0
        %2646 = vmatprep.subr.mxu0 0.0
        %2647 = vmatpush1.xpose.msra.mxu0 0.0
        %2648 = vmatprep.subr.mxu0 0.0
        %2649 = vmatpush1.xpose.msra.mxu0 0.0
        %2650 = vmatprep.subr.mxu0 0.0
        %2651 = vmatpush1.xpose.msra.mxu0 0.0
        %2652 = vmatprep.subr.mxu0 0.0
        %2653 = vmatpush1.xpose.msra.mxu0 %v2624
        %2654 = vmatprep.subr.mxu0 0.0
        %2655 = vmatpush1.xpose.msra.mxu0 %v2622
        %2656 = vmatprep.subr.mxu0 0.0
        %2657 = vmatpush1.xpose.msra.mxu0 %v2620
        %2658 = vmatprep.subr.mxu0 0.0
        %2659 = vmatpush2.xpose.msra.mxu0 0.0
        %2660 = vmatprep.subr.mxu0 0.0
        %2661 = vmatpush2.xpose.msra.mxu0 0.0
        %2662 = vmatprep.subr.mxu0 0.0
        %2663 = vmatpush2.xpose.msra.mxu0 0.0
        %2664 = vmatprep.subr.mxu0 0.0
        %2665 = vmatpush2.xpose.msra.mxu0 0.0
        %2666 = vmatprep.subr.mxu0 0.0
        %2667 = vmatpush2.xpose.msra.mxu0 0.0
        %2668 = vmatprep.subr.mxu0 0.0
        %2669 = vmatpush2.xpose.msra.mxu0 0.0
        %2670 = vmatprep.subr.mxu0 0.0
        %2671 = vmatpush2.xpose.msra.mxu0 0.0
        %2672 = vmatprep.subr.mxu0 0.0
        %2673 = vmatpush2.xpose.msra.mxu0 0.0
        %2674 = vmatprep.subr.mxu0 0.0
        %2675 = vmatpush2.xpose.msra.mxu0 0.0
        %2676 = vmatprep.subr.mxu0 0.0
        %2677 = vmatpush2.xpose.msra.mxu0 0.0
        %2678 = vmatprep.subr.mxu0 0.0
        %2679 = vmatpush2.xpose.msra.mxu0 0.0
        %2680 = vmatprep.subr.mxu0 0.0
        %2681 = vmatpush2.xpose.msra.mxu0 0.0
        %2682 = vmatprep.subr.mxu0 0.0
        %2683 = vmatpush2.xpose.msra.mxu0 0.0
        %2684 = vmatprep.subr.mxu0 0.0
        %2685 = vmatpush2.xpose.msra.mxu0 0.0
        %2686 = vmatprep.subr.mxu0 0.0
        %2687 = vmatpush2.xpose.msra.mxu0 0.0
        %2688 = vmatprep.subr.mxu0 0.0
        %2689 = vmatpush2.xpose.msra.mxu0 0.0
        %2690 = vmatprep.mubr.f32.mxu0 0.0
        %2691 = vmatmul.mubr.f32.gmra.mxu0 %v2614
        %v2692 = vpop.f32.mrf.mxu0
        %v2693 = vadd.f32 0.0, %v2692
        %v2694 = vpop.f32.mrf.mxu0
        %2695 = vmatprep.mubr.f32.mxu0 0.0
        %2696 = vmatmul.mubr.f32.gmra.mxu0 %v2616
        %v2697 = vpop.f32.mrf.mxu0
        %v2698 = vadd.f32 0.0, %v2697
        %v2699 = vpop.f32.mrf.mxu0
        %2700 = vmatprep.mubr.f32.mxu0 0.0
        %2701 = vmatmul.mubr.f32.gmra.mxu0 %v2618
        %v2702 = vpop.f32.mrf.mxu0
        %v2703 = vadd.f32 0.0, %v2702
        %v2704 = vpop.f32.mrf.mxu0
        %2705 = vdwg.mxu0
        %v2706 = vmul.f32 %v2693, 0.35355338
        %v2707 = vmul.f32 %v2698, 0.35355338
        %v2708 = vmul.f32 %v2703, 0.35355338
        %v2709 = vadd.f32 %v2706, %v645
        %v2710 = vadd.f32 %v2707, %v645
        %v2711 = vadd.f32 %v2708, %v645
        %v2712 = vsel %vm908, %v2709, -inf
        %2713 = vmax.xlane.f32.xlu0 %v2712
        %v2714 = vpop.xlane.xlu0 %2713
        %v2715 = vsel %vm908, %v2710, -inf
        %2716 = vmax.xlane.f32.xlu0 %v2715
        %v2717 = vpop.xlane.xlu0 %2716
        %v2718 = vsel %vm908, %v2711, -inf
        %2719 = vmax.xlane.f32.xlu0 %v2718
        %v2720 = vpop.xlane.xlu0 %2719
        %v2721 = vsub.f32 %v2709, %v2714
        %v2722 = vsub.f32 %v2710, %v2717
        %v2723 = vsub.f32 %v2711, %v2720
        %v2724 = vmul.f32 %v2721, 1.442695
        %v2725 = vpow.pop %v2724
        %v2726 = vmul.f32 %v2722, 1.442695
        %v2727 = vpow.pop %v2726
        %v2728 = vmul.f32 %v2723, 1.442695
        %v2729 = vpow.pop %v2728
        %v2730 = vsel %vm908, %v2725, 0.0
        %2731 = vadd.xlane.f32.xlu0 %v2730
        %v2732 = vpop.xlane.xlu0 %2731
        %v2733 = vsel %vm908, %v2727, 0.0
        %2734 = vadd.xlane.f32.xlu0 %v2733
        %v2735 = vpop.xlane.xlu0 %2734
        %v2736 = vsel %vm908, %v2729, 0.0
        %2737 = vadd.xlane.f32.xlu0 %v2736
        %v2738 = vpop.xlane.xlu0 %2737
        %v2739 = vrcp.pop %v2732
        %v2740 = vrcp.pop %v2735
        %v2741 = vrcp.pop %v2738
        %v2742 = vmul.f32 %v2725, %v2739
        %v2743 = vmul.f32 %v2727, %v2740
        %v2744 = vmul.f32 %v2729, %v2741
        %2745 = vrot.lane.b32.xlu0 %v2348, 56
        %v2746 = vpop.permute.xlu0 %2745
        %2747 = vrot.lane.b32.xlu0 %v2353, 56
        %v2748 = vpop.permute.xlu0 %2747
        %2749 = vrot.lane.b32.xlu0 %v2358, 56
        %v2750 = vpop.permute.xlu0 %2749
        %v2755 = vsel %vm908, %v2742, 0
        %v2758 = vsel %vm908, %v2743, 0
        %v2761 = vsel %vm908, %v2744, 0
        %2763 = vmatprep.subr.mxu0 0.0
        %2764 = vmatpush1.msra.mxu0 0.0
        %2765 = vmatprep.subr.mxu0 0.0
        %2766 = vmatpush1.msra.mxu0 0.0
        %2767 = vmatprep.subr.mxu0 0.0
        %2768 = vmatpush1.msra.mxu0 0.0
        %2769 = vmatprep.subr.mxu0 0.0
        %2770 = vmatpush1.msra.mxu0 0.0
        %2771 = vmatprep.subr.mxu0 0.0
        %2772 = vmatpush1.msra.mxu0 0.0
        %2773 = vmatprep.subr.mxu0 0.0
        %2774 = vmatpush1.msra.mxu0 0.0
        %2775 = vmatprep.subr.mxu0 0.0
        %2776 = vmatpush1.msra.mxu0 0.0
        %2777 = vmatprep.subr.mxu0 0.0
        %2778 = vmatpush1.msra.mxu0 0.0
        %2779 = vmatprep.subr.mxu0 0.0
        %2780 = vmatpush1.msra.mxu0 0.0
        %2781 = vmatprep.subr.mxu0 0.0
        %2782 = vmatpush1.msra.mxu0 0.0
        %2783 = vmatprep.subr.mxu0 0.0
        %2784 = vmatpush1.msra.mxu0 0.0
        %2785 = vmatprep.subr.mxu0 0.0
        %2786 = vmatpush1.msra.mxu0 0.0
        %2787 = vmatprep.subr.mxu0 0.0
        %2788 = vmatpush1.msra.mxu0 0.0
        %2789 = vmatprep.subr.mxu0 0.0
        %2790 = vmatpush1.msra.mxu0 %v2750
        %2791 = vmatprep.subr.mxu0 0.0
        %2792 = vmatpush1.msra.mxu0 %v2748
        %2793 = vmatprep.subr.mxu0 0.0
        %2794 = vmatpush1.msra.mxu0 %v2746
        %2795 = vmatprep.subr.mxu0 0.0
        %2796 = vmatpush2.msra.mxu0 0.0
        %2797 = vmatprep.subr.mxu0 0.0
        %2798 = vmatpush2.msra.mxu0 0.0
        %2799 = vmatprep.subr.mxu0 0.0
        %2800 = vmatpush2.msra.mxu0 0.0
        %2801 = vmatprep.subr.mxu0 0.0
        %2802 = vmatpush2.msra.mxu0 0.0
        %2803 = vmatprep.subr.mxu0 0.0
        %2804 = vmatpush2.msra.mxu0 0.0
        %2805 = vmatprep.subr.mxu0 0.0
        %2806 = vmatpush2.msra.mxu0 0.0
        %2807 = vmatprep.subr.mxu0 0.0
        %2808 = vmatpush2.msra.mxu0 0.0
        %2809 = vmatprep.subr.mxu0 0.0
        %2810 = vmatpush2.msra.mxu0 0.0
        %2811 = vmatprep.subr.mxu0 0.0
        %2812 = vmatpush2.msra.mxu0 0.0
        %2813 = vmatprep.subr.mxu0 0.0
        %2814 = vmatpush2.msra.mxu0 0.0
        %2815 = vmatprep.subr.mxu0 0.0
        %2816 = vmatpush2.msra.mxu0 0.0
        %2817 = vmatprep.subr.mxu0 0.0
        %2818 = vmatpush2.msra.mxu0 0.0
        %2819 = vmatprep.subr.mxu0 0.0
        %2820 = vmatpush2.msra.mxu0 0.0
        %2821 = vmatprep.subr.mxu0 0.0
        %2822 = vmatpush2.msra.mxu0 0.0
        %2823 = vmatprep.subr.mxu0 0.0
        %2824 = vmatpush2.msra.mxu0 0.0
        %2825 = vmatprep.subr.mxu0 0.0
        %2826 = vmatpush2.msra.mxu0 0.0
        %2827 = vmatprep.mubr.f32.mxu0 0.0
        %2828 = vmatmul.mubr.f32.gmra.mxu0 %v2755
        %v2829 = vpop.f32.mrf.mxu0
        %v2830 = vadd.f32 0.0, %v2829
        %v2831 = vpop.f32.mrf.mxu0
        %2832 = vmatprep.mubr.f32.mxu0 0.0
        %2833 = vmatmul.mubr.f32.gmra.mxu0 %v2758
        %v2834 = vpop.f32.mrf.mxu0
        %v2835 = vadd.f32 0.0, %v2834
        %v2836 = vpop.f32.mrf.mxu0
        %2837 = vmatprep.mubr.f32.mxu0 0.0
        %2838 = vmatmul.mubr.f32.gmra.mxu0 %v2761
        %v2839 = vpop.f32.mrf.mxu0
        %v2840 = vadd.f32 0.0, %v2839
        %v2841 = vpop.f32.mrf.mxu0
        %2842 = vdwg.mxu0
        %2846 = vrot.lane.b32.xlu0 %v2830, 8
        %v2847 = vpop.permute.xlu0 %2846
        %2848 = vrot.lane.b32.xlu0 %v2835, 8
        %v2849 = vpop.permute.xlu0 %2848
        %2850 = vrot.lane.b32.xlu0 %v2840, 8
        %v2851 = vpop.permute.xlu0 %2850
        %2855 = vst.msk [vmem:[#allocation2] sm:$0xff] %vm1296, %v2847
        %2856 = vst.msk [vmem:[#allocation2 + $0x8] sm:$0xff] %vm1296, %v2849
        %2857 = vst.msk [vmem:[#allocation2 + $0x10] sm:$0xff] %vm1296, %v2851
        %2858 = vrot.lane.b32.xlu0 %v2348, 112
        %v2859 = vpop.permute.xlu0 %2858
        %2860 = vrot.lane.b32.xlu0 %v2353, 112
        %v2861 = vpop.permute.xlu0 %2860
        %2862 = vrot.lane.b32.xlu0 %v2358, 112
        %v2863 = vpop.permute.xlu0 %2862
        %2864 = vrot.lane.b32.xlu0 %v2348, 80
        %v2865 = vpop.permute.xlu0 %2864
        %2866 = vrot.lane.b32.xlu0 %v2353, 80
        %v2867 = vpop.permute.xlu0 %2866
        %2868 = vrot.lane.b32.xlu0 %v2358, 80
        %v2869 = vpop.permute.xlu0 %2868
        %v2870 = vsel %vm809, %v2859, 0
        %v2872 = vsel %vm809, %v2861, 0
        %v2874 = vsel %vm809, %v2863, 0
        %v2876 = vsel %vm809, %v2865, 0
        %v2878 = vsel %vm809, %v2867, 0
        %v2880 = vsel %vm809, %v2869, 0
        %2882 = vmatprep.subr.mxu0 0.0
        %2883 = vmatpush1.xpose.msra.mxu0 0.0
        %2884 = vmatprep.subr.mxu0 0.0
        %2885 = vmatpush1.xpose.msra.mxu0 0.0
        %2886 = vmatprep.subr.mxu0 0.0
        %2887 = vmatpush1.xpose.msra.mxu0 0.0
        %2888 = vmatprep.subr.mxu0 0.0
        %2889 = vmatpush1.xpose.msra.mxu0 0.0
        %2890 = vmatprep.subr.mxu0 0.0
        %2891 = vmatpush1.xpose.msra.mxu0 0.0
        %2892 = vmatprep.subr.mxu0 0.0
        %2893 = vmatpush1.xpose.msra.mxu0 0.0
        %2894 = vmatprep.subr.mxu0 0.0
        %2895 = vmatpush1.xpose.msra.mxu0 0.0
        %2896 = vmatprep.subr.mxu0 0.0
        %2897 = vmatpush1.xpose.msra.mxu0 0.0
        %2898 = vmatprep.subr.mxu0 0.0
        %2899 = vmatpush1.xpose.msra.mxu0 0.0
        %2900 = vmatprep.subr.mxu0 0.0
        %2901 = vmatpush1.xpose.msra.mxu0 0.0
        %2902 = vmatprep.subr.mxu0 0.0
        %2903 = vmatpush1.xpose.msra.mxu0 0.0
        %2904 = vmatprep.subr.mxu0 0.0
        %2905 = vmatpush1.xpose.msra.mxu0 0.0
        %2906 = vmatprep.subr.mxu0 0.0
        %2907 = vmatpush1.xpose.msra.mxu0 0.0
        %2908 = vmatprep.subr.mxu0 0.0
        %2909 = vmatpush1.xpose.msra.mxu0 %v2880
        %2910 = vmatprep.subr.mxu0 0.0
        %2911 = vmatpush1.xpose.msra.mxu0 %v2878
        %2912 = vmatprep.subr.mxu0 0.0
        %2913 = vmatpush1.xpose.msra.mxu0 %v2876
        %2914 = vmatprep.subr.mxu0 0.0
        %2915 = vmatpush2.xpose.msra.mxu0 0.0
        %2916 = vmatprep.subr.mxu0 0.0
        %2917 = vmatpush2.xpose.msra.mxu0 0.0
        %2918 = vmatprep.subr.mxu0 0.0
        %2919 = vmatpush2.xpose.msra.mxu0 0.0
        %2920 = vmatprep.subr.mxu0 0.0
        %2921 = vmatpush2.xpose.msra.mxu0 0.0
        %2922 = vmatprep.subr.mxu0 0.0
        %2923 = vmatpush2.xpose.msra.mxu0 0.0
        %2924 = vmatprep.subr.mxu0 0.0
        %2925 = vmatpush2.xpose.msra.mxu0 0.0
        %2926 = vmatprep.subr.mxu0 0.0
        %2927 = vmatpush2.xpose.msra.mxu0 0.0
        %2928 = vmatprep.subr.mxu0 0.0
        %2929 = vmatpush2.xpose.msra.mxu0 0.0
        %2930 = vmatprep.subr.mxu0 0.0
        %2931 = vmatpush2.xpose.msra.mxu0 0.0
        %2932 = vmatprep.subr.mxu0 0.0
        %2933 = vmatpush2.xpose.msra.mxu0 0.0
        %2934 = vmatprep.subr.mxu0 0.0
        %2935 = vmatpush2.xpose.msra.mxu0 0.0
        %2936 = vmatprep.subr.mxu0 0.0
        %2937 = vmatpush2.xpose.msra.mxu0 0.0
        %2938 = vmatprep.subr.mxu0 0.0
        %2939 = vmatpush2.xpose.msra.mxu0 0.0
        %2940 = vmatprep.subr.mxu0 0.0
        %2941 = vmatpush2.xpose.msra.mxu0 0.0
        %2942 = vmatprep.subr.mxu0 0.0
        %2943 = vmatpush2.xpose.msra.mxu0 0.0
        %2944 = vmatprep.subr.mxu0 0.0
        %2945 = vmatpush2.xpose.msra.mxu0 0.0
        %2946 = vmatprep.mubr.f32.mxu0 0.0
        %2947 = vmatmul.mubr.f32.gmra.mxu0 %v2870
        %v2948 = vpop.f32.mrf.mxu0
        %v2949 = vadd.f32 0.0, %v2948
        %v2950 = vpop.f32.mrf.mxu0
        %2951 = vmatprep.mubr.f32.mxu0 0.0
        %2952 = vmatmul.mubr.f32.gmra.mxu0 %v2872
        %v2953 = vpop.f32.mrf.mxu0
        %v2954 = vadd.f32 0.0, %v2953
        %v2955 = vpop.f32.mrf.mxu0
        %2956 = vmatprep.mubr.f32.mxu0 0.0
        %2957 = vmatmul.mubr.f32.gmra.mxu0 %v2874
        %v2958 = vpop.f32.mrf.mxu0
        %v2959 = vadd.f32 0.0, %v2958
        %v2960 = vpop.f32.mrf.mxu0
        %2961 = vdwg.mxu0
        %v2962 = vmul.f32 %v2949, 0.35355338
        %v2963 = vmul.f32 %v2954, 0.35355338
        %v2964 = vmul.f32 %v2959, 0.35355338
        %v2965 = vadd.f32 %v2962, %v645
        %v2966 = vadd.f32 %v2963, %v645
        %v2967 = vadd.f32 %v2964, %v645
        %v2968 = vsel %vm908, %v2965, -inf
        %2969 = vmax.xlane.f32.xlu0 %v2968
        %v2970 = vpop.xlane.xlu0 %2969
        %v2971 = vsel %vm908, %v2966, -inf
        %2972 = vmax.xlane.f32.xlu0 %v2971
        %v2973 = vpop.xlane.xlu0 %2972
        %v2974 = vsel %vm908, %v2967, -inf
        %2975 = vmax.xlane.f32.xlu0 %v2974
        %v2976 = vpop.xlane.xlu0 %2975
        %v2977 = vsub.f32 %v2965, %v2970
        %v2978 = vsub.f32 %v2966, %v2973
        %v2979 = vsub.f32 %v2967, %v2976
        %v2980 = vmul.f32 %v2977, 1.442695
        %v2981 = vpow.pop %v2980
        %v2982 = vmul.f32 %v2978, 1.442695
        %v2983 = vpow.pop %v2982
        %v2984 = vmul.f32 %v2979, 1.442695
        %v2985 = vpow.pop %v2984
        %v2986 = vsel %vm908, %v2981, 0.0
        %2987 = vadd.xlane.f32.xlu0 %v2986
        %v2988 = vpop.xlane.xlu0 %2987
        %v2989 = vsel %vm908, %v2983, 0.0
        %2990 = vadd.xlane.f32.xlu0 %v2989
        %v2991 = vpop.xlane.xlu0 %2990
        %v2992 = vsel %vm908, %v2985, 0.0
        %2993 = vadd.xlane.f32.xlu0 %v2992
        %v2994 = vpop.xlane.xlu0 %2993
        %v2995 = vrcp.pop %v2988
        %v2996 = vrcp.pop %v2991
        %v2997 = vrcp.pop %v2994
        %v2998 = vmul.f32 %v2981, %v2995
        %v2999 = vmul.f32 %v2983, %v2996
        %v3000 = vmul.f32 %v2985, %v2997
        %3001 = vrot.lane.b32.xlu0 %v2348, 48
        %v3002 = vpop.permute.xlu0 %3001
        %3003 = vrot.lane.b32.xlu0 %v2353, 48
        %v3004 = vpop.permute.xlu0 %3003
        %3005 = vrot.lane.b32.xlu0 %v2358, 48
        %v3006 = vpop.permute.xlu0 %3005
        %v3011 = vsel %vm908, %v2998, 0
        %v3014 = vsel %vm908, %v2999, 0
        %v3017 = vsel %vm908, %v3000, 0
        %3019 = vmatprep.subr.mxu0 0.0
        %3020 = vmatpush1.msra.mxu0 0.0
        %3021 = vmatprep.subr.mxu0 0.0
        %3022 = vmatpush1.msra.mxu0 0.0
        %3023 = vmatprep.subr.mxu0 0.0
        %3024 = vmatpush1.msra.mxu0 0.0
        %3025 = vmatprep.subr.mxu0 0.0
        %3026 = vmatpush1.msra.mxu0 0.0
        %3027 = vmatprep.subr.mxu0 0.0
        %3028 = vmatpush1.msra.mxu0 0.0
        %3029 = vmatprep.subr.mxu0 0.0
        %3030 = vmatpush1.msra.mxu0 0.0
        %3031 = vmatprep.subr.mxu0 0.0
        %3032 = vmatpush1.msra.mxu0 0.0
        %3033 = vmatprep.subr.mxu0 0.0
        %3034 = vmatpush1.msra.mxu0 0.0
        %3035 = vmatprep.subr.mxu0 0.0
        %3036 = vmatpush1.msra.mxu0 0.0
        %3037 = vmatprep.subr.mxu0 0.0
        %3038 = vmatpush1.msra.mxu0 0.0
        %3039 = vmatprep.subr.mxu0 0.0
        %3040 = vmatpush1.msra.mxu0 0.0
        %3041 = vmatprep.subr.mxu0 0.0
        %3042 = vmatpush1.msra.mxu0 0.0
        %3043 = vmatprep.subr.mxu0 0.0
        %3044 = vmatpush1.msra.mxu0 0.0
        %3045 = vmatprep.subr.mxu0 0.0
        %3046 = vmatpush1.msra.mxu0 %v3006
        %3047 = vmatprep.subr.mxu0 0.0
        %3048 = vmatpush1.msra.mxu0 %v3004
        %3049 = vmatprep.subr.mxu0 0.0
        %3050 = vmatpush1.msra.mxu0 %v3002
        %3051 = vmatprep.subr.mxu0 0.0
        %3052 = vmatpush2.msra.mxu0 0.0
        %3053 = vmatprep.subr.mxu0 0.0
        %3054 = vmatpush2.msra.mxu0 0.0
        %3055 = vmatprep.subr.mxu0 0.0
        %3056 = vmatpush2.msra.mxu0 0.0
        %3057 = vmatprep.subr.mxu0 0.0
        %3058 = vmatpush2.msra.mxu0 0.0
        %3059 = vmatprep.subr.mxu0 0.0
        %3060 = vmatpush2.msra.mxu0 0.0
        %3061 = vmatprep.subr.mxu0 0.0
        %3062 = vmatpush2.msra.mxu0 0.0
        %3063 = vmatprep.subr.mxu0 0.0
        %3064 = vmatpush2.msra.mxu0 0.0
        %3065 = vmatprep.subr.mxu0 0.0
        %3066 = vmatpush2.msra.mxu0 0.0
        %3067 = vmatprep.subr.mxu0 0.0
        %3068 = vmatpush2.msra.mxu0 0.0
        %3069 = vmatprep.subr.mxu0 0.0
        %3070 = vmatpush2.msra.mxu0 0.0
        %3071 = vmatprep.subr.mxu0 0.0
        %3072 = vmatpush2.msra.mxu0 0.0
        %3073 = vmatprep.subr.mxu0 0.0
        %3074 = vmatpush2.msra.mxu0 0.0
        %3075 = vmatprep.subr.mxu0 0.0
        %3076 = vmatpush2.msra.mxu0 0.0
        %3077 = vmatprep.subr.mxu0 0.0
        %3078 = vmatpush2.msra.mxu0 0.0
        %3079 = vmatprep.subr.mxu0 0.0
        %3080 = vmatpush2.msra.mxu0 0.0
        %3081 = vmatprep.subr.mxu0 0.0
        %3082 = vmatpush2.msra.mxu0 0.0
        %3083 = vmatprep.mubr.f32.mxu0 0.0
        %3084 = vmatmul.mubr.f32.gmra.mxu0 %v3011
        %v3085 = vpop.f32.mrf.mxu0
        %v3086 = vadd.f32 0.0, %v3085
        %v3087 = vpop.f32.mrf.mxu0
        %3088 = vmatprep.mubr.f32.mxu0 0.0
        %3089 = vmatmul.mubr.f32.gmra.mxu0 %v3014
        %v3090 = vpop.f32.mrf.mxu0
        %v3091 = vadd.f32 0.0, %v3090
        %v3092 = vpop.f32.mrf.mxu0
        %3093 = vmatprep.mubr.f32.mxu0 0.0
        %3094 = vmatmul.mubr.f32.gmra.mxu0 %v3017
        %v3095 = vpop.f32.mrf.mxu0
        %v3096 = vadd.f32 0.0, %v3095
        %v3097 = vpop.f32.mrf.mxu0
        %3098 = vdwg.mxu0
        %3102 = vrot.lane.b32.xlu0 %v3086, 16
        %v3103 = vpop.permute.xlu0 %3102
        %3104 = vrot.lane.b32.xlu0 %v3091, 16
        %v3105 = vpop.permute.xlu0 %3104
        %3106 = vrot.lane.b32.xlu0 %v3096, 16
        %v3107 = vpop.permute.xlu0 %3106
        %3111 = vst.msk [vmem:[#allocation2] sm:$0xff] %vm1553, %v3103
        %3112 = vst.msk [vmem:[#allocation2 + $0x8] sm:$0xff] %vm1553, %v3105
        %3113 = vst.msk [vmem:[#allocation2 + $0x10] sm:$0xff] %vm1553, %v3107
        %3114 = vrot.lane.b32.xlu0 %v2348, 104
        %v3115 = vpop.permute.xlu0 %3114
        %3116 = vrot.lane.b32.xlu0 %v2353, 104
        %v3117 = vpop.permute.xlu0 %3116
        %3118 = vrot.lane.b32.xlu0 %v2358, 104
        %v3119 = vpop.permute.xlu0 %3118
        %3120 = vrot.lane.b32.xlu0 %v2348, 72
        %v3121 = vpop.permute.xlu0 %3120
        %3122 = vrot.lane.b32.xlu0 %v2353, 72
        %v3123 = vpop.permute.xlu0 %3122
        %3124 = vrot.lane.b32.xlu0 %v2358, 72
        %v3125 = vpop.permute.xlu0 %3124
        %v3126 = vsel %vm809, %v3115, 0
        %v3128 = vsel %vm809, %v3117, 0
        %v3130 = vsel %vm809, %v3119, 0
        %v3132 = vsel %vm809, %v3121, 0
        %v3134 = vsel %vm809, %v3123, 0
        %v3136 = vsel %vm809, %v3125, 0
        %3138 = vmatprep.subr.mxu0 0.0
        %3139 = vmatpush1.xpose.msra.mxu0 0.0
        %3140 = vmatprep.subr.mxu0 0.0
        %3141 = vmatpush1.xpose.msra.mxu0 0.0
        %3142 = vmatprep.subr.mxu0 0.0
        %3143 = vmatpush1.xpose.msra.mxu0 0.0
        %3144 = vmatprep.subr.mxu0 0.0
        %3145 = vmatpush1.xpose.msra.mxu0 0.0
        %3146 = vmatprep.subr.mxu0 0.0
        %3147 = vmatpush1.xpose.msra.mxu0 0.0
        %3148 = vmatprep.subr.mxu0 0.0
        %3149 = vmatpush1.xpose.msra.mxu0 0.0
        %3150 = vmatprep.subr.mxu0 0.0
        %3151 = vmatpush1.xpose.msra.mxu0 0.0
        %3152 = vmatprep.subr.mxu0 0.0
        %3153 = vmatpush1.xpose.msra.mxu0 0.0
        %3154 = vmatprep.subr.mxu0 0.0
        %3155 = vmatpush1.xpose.msra.mxu0 0.0
        %3156 = vmatprep.subr.mxu0 0.0
        %3157 = vmatpush1.xpose.msra.mxu0 0.0
        %3158 = vmatprep.subr.mxu0 0.0
        %3159 = vmatpush1.xpose.msra.mxu0 0.0
        %3160 = vmatprep.subr.mxu0 0.0
        %3161 = vmatpush1.xpose.msra.mxu0 0.0
        %3162 = vmatprep.subr.mxu0 0.0
        %3163 = vmatpush1.xpose.msra.mxu0 0.0
        %3164 = vmatprep.subr.mxu0 0.0
        %3165 = vmatpush1.xpose.msra.mxu0 %v3136
        %3166 = vmatprep.subr.mxu0 0.0
        %3167 = vmatpush1.xpose.msra.mxu0 %v3134
        %3168 = vmatprep.subr.mxu0 0.0
        %3169 = vmatpush1.xpose.msra.mxu0 %v3132
        %3170 = vmatprep.subr.mxu0 0.0
        %3171 = vmatpush2.xpose.msra.mxu0 0.0
        %3172 = vmatprep.subr.mxu0 0.0
        %3173 = vmatpush2.xpose.msra.mxu0 0.0
        %3174 = vmatprep.subr.mxu0 0.0
        %3175 = vmatpush2.xpose.msra.mxu0 0.0
        %3176 = vmatprep.subr.mxu0 0.0
        %3177 = vmatpush2.xpose.msra.mxu0 0.0
        %3178 = vmatprep.subr.mxu0 0.0
        %3179 = vmatpush2.xpose.msra.mxu0 0.0
        %3180 = vmatprep.subr.mxu0 0.0
        %3181 = vmatpush2.xpose.msra.mxu0 0.0
        %3182 = vmatprep.subr.mxu0 0.0
        %3183 = vmatpush2.xpose.msra.mxu0 0.0
        %3184 = vmatprep.subr.mxu0 0.0
        %3185 = vmatpush2.xpose.msra.mxu0 0.0
        %3186 = vmatprep.subr.mxu0 0.0
        %3187 = vmatpush2.xpose.msra.mxu0 0.0
        %3188 = vmatprep.subr.mxu0 0.0
        %3189 = vmatpush2.xpose.msra.mxu0 0.0
        %3190 = vmatprep.subr.mxu0 0.0
        %3191 = vmatpush2.xpose.msra.mxu0 0.0
        %3192 = vmatprep.subr.mxu0 0.0
        %3193 = vmatpush2.xpose.msra.mxu0 0.0
        %3194 = vmatprep.subr.mxu0 0.0
        %3195 = vmatpush2.xpose.msra.mxu0 0.0
        %3196 = vmatprep.subr.mxu0 0.0
        %3197 = vmatpush2.xpose.msra.mxu0 0.0
        %3198 = vmatprep.subr.mxu0 0.0
        %3199 = vmatpush2.xpose.msra.mxu0 0.0
        %3200 = vmatprep.subr.mxu0 0.0
        %3201 = vmatpush2.xpose.msra.mxu0 0.0
        %3202 = vmatprep.mubr.f32.mxu0 0.0
        %3203 = vmatmul.mubr.f32.gmra.mxu0 %v3126
        %v3204 = vpop.f32.mrf.mxu0
        %v3205 = vadd.f32 0.0, %v3204
        %v3206 = vpop.f32.mrf.mxu0
        %3207 = vmatprep.mubr.f32.mxu0 0.0
        %3208 = vmatmul.mubr.f32.gmra.mxu0 %v3128
        %v3209 = vpop.f32.mrf.mxu0
        %v3210 = vadd.f32 0.0, %v3209
        %v3211 = vpop.f32.mrf.mxu0
        %3212 = vmatprep.mubr.f32.mxu0 0.0
        %3213 = vmatmul.mubr.f32.gmra.mxu0 %v3130
        %v3214 = vpop.f32.mrf.mxu0
        %v3215 = vadd.f32 0.0, %v3214
        %v3216 = vpop.f32.mrf.mxu0
        %3217 = vdwg.mxu0
        %v3218 = vmul.f32 %v3205, 0.35355338
        %v3219 = vmul.f32 %v3210, 0.35355338
        %v3220 = vmul.f32 %v3215, 0.35355338
        %v3221 = vadd.f32 %v3218, %v645
        %v3222 = vadd.f32 %v3219, %v645
        %v3223 = vadd.f32 %v3220, %v645
        %v3224 = vsel %vm908, %v3221, -inf
        %3225 = vmax.xlane.f32.xlu0 %v3224
        %v3226 = vpop.xlane.xlu0 %3225
        %v3227 = vsel %vm908, %v3222, -inf
        %3228 = vmax.xlane.f32.xlu0 %v3227
        %v3229 = vpop.xlane.xlu0 %3228
        %v3230 = vsel %vm908, %v3223, -inf
        %3231 = vmax.xlane.f32.xlu0 %v3230
        %v3232 = vpop.xlane.xlu0 %3231
        %v3233 = vsub.f32 %v3221, %v3226
        %v3234 = vsub.f32 %v3222, %v3229
        %v3235 = vsub.f32 %v3223, %v3232
        %v3236 = vmul.f32 %v3233, 1.442695
        %v3237 = vpow.pop %v3236
        %v3238 = vmul.f32 %v3234, 1.442695
        %v3239 = vpow.pop %v3238
        %v3240 = vmul.f32 %v3235, 1.442695
        %v3241 = vpow.pop %v3240
        %v3242 = vsel %vm908, %v3237, 0.0
        %3243 = vadd.xlane.f32.xlu0 %v3242
        %v3244 = vpop.xlane.xlu0 %3243
        %v3245 = vsel %vm908, %v3239, 0.0
        %3246 = vadd.xlane.f32.xlu0 %v3245
        %v3247 = vpop.xlane.xlu0 %3246
        %v3248 = vsel %vm908, %v3241, 0.0
        %3249 = vadd.xlane.f32.xlu0 %v3248
        %v3250 = vpop.xlane.xlu0 %3249
        %v3251 = vrcp.pop %v3244
        %v3252 = vrcp.pop %v3247
        %v3253 = vrcp.pop %v3250
        %v3254 = vmul.f32 %v3237, %v3251
        %v3255 = vmul.f32 %v3239, %v3252
        %v3256 = vmul.f32 %v3241, %v3253
        %3257 = vrot.lane.b32.xlu0 %v2348, 40
        %v3258 = vpop.permute.xlu0 %3257
        %3259 = vrot.lane.b32.xlu0 %v2353, 40
        %v3260 = vpop.permute.xlu0 %3259
        %3261 = vrot.lane.b32.xlu0 %v2358, 40
        %v3262 = vpop.permute.xlu0 %3261
        %v3267 = vsel %vm908, %v3254, 0
        %v3270 = vsel %vm908, %v3255, 0
        %v3273 = vsel %vm908, %v3256, 0
        %3275 = vmatprep.subr.mxu0 0.0
        %3276 = vmatpush1.msra.mxu0 0.0
        %3277 = vmatprep.subr.mxu0 0.0
        %3278 = vmatpush1.msra.mxu0 0.0
        %3279 = vmatprep.subr.mxu0 0.0
        %3280 = vmatpush1.msra.mxu0 0.0
        %3281 = vmatprep.subr.mxu0 0.0
        %3282 = vmatpush1.msra.mxu0 0.0
        %3283 = vmatprep.subr.mxu0 0.0
        %3284 = vmatpush1.msra.mxu0 0.0
        %3285 = vmatprep.subr.mxu0 0.0
        %3286 = vmatpush1.msra.mxu0 0.0
        %3287 = vmatprep.subr.mxu0 0.0
        %3288 = vmatpush1.msra.mxu0 0.0
        %3289 = vmatprep.subr.mxu0 0.0
        %3290 = vmatpush1.msra.mxu0 0.0
        %3291 = vmatprep.subr.mxu0 0.0
        %3292 = vmatpush1.msra.mxu0 0.0
        %3293 = vmatprep.subr.mxu0 0.0
        %3294 = vmatpush1.msra.mxu0 0.0
        %3295 = vmatprep.subr.mxu0 0.0
        %3296 = vmatpush1.msra.mxu0 0.0
        %3297 = vmatprep.subr.mxu0 0.0
        %3298 = vmatpush1.msra.mxu0 0.0
        %3299 = vmatprep.subr.mxu0 0.0
        %3300 = vmatpush1.msra.mxu0 0.0
        %3301 = vmatprep.subr.mxu0 0.0
        %3302 = vmatpush1.msra.mxu0 %v3262
        %3303 = vmatprep.subr.mxu0 0.0
        %3304 = vmatpush1.msra.mxu0 %v3260
        %3305 = vmatprep.subr.mxu0 0.0
        %3306 = vmatpush1.msra.mxu0 %v3258
        %3307 = vmatprep.subr.mxu0 0.0
        %3308 = vmatpush2.msra.mxu0 0.0
        %3309 = vmatprep.subr.mxu0 0.0
        %3310 = vmatpush2.msra.mxu0 0.0
        %3311 = vmatprep.subr.mxu0 0.0
        %3312 = vmatpush2.msra.mxu0 0.0
        %3313 = vmatprep.subr.mxu0 0.0
        %3314 = vmatpush2.msra.mxu0 0.0
        %3315 = vmatprep.subr.mxu0 0.0
        %3316 = vmatpush2.msra.mxu0 0.0
        %3317 = vmatprep.subr.mxu0 0.0
        %3318 = vmatpush2.msra.mxu0 0.0
        %3319 = vmatprep.subr.mxu0 0.0
        %3320 = vmatpush2.msra.mxu0 0.0
        %3321 = vmatprep.subr.mxu0 0.0
        %3322 = vmatpush2.msra.mxu0 0.0
        %3323 = vmatprep.subr.mxu0 0.0
        %3324 = vmatpush2.msra.mxu0 0.0
        %3325 = vmatprep.subr.mxu0 0.0
        %3326 = vmatpush2.msra.mxu0 0.0
        %3327 = vmatprep.subr.mxu0 0.0
        %3328 = vmatpush2.msra.mxu0 0.0
        %3329 = vmatprep.subr.mxu0 0.0
        %3330 = vmatpush2.msra.mxu0 0.0
        %3331 = vmatprep.subr.mxu0 0.0
        %3332 = vmatpush2.msra.mxu0 0.0
        %3333 = vmatprep.subr.mxu0 0.0
        %3334 = vmatpush2.msra.mxu0 0.0
        %3335 = vmatprep.subr.mxu0 0.0
        %3336 = vmatpush2.msra.mxu0 0.0
        %3337 = vmatprep.subr.mxu0 0.0
        %3338 = vmatpush2.msra.mxu0 0.0
        %3339 = vmatprep.mubr.f32.mxu0 0.0
        %3340 = vmatmul.mubr.f32.gmra.mxu0 %v3267
        %v3341 = vpop.f32.mrf.mxu0
        %v3342 = vadd.f32 0.0, %v3341
        %v3343 = vpop.f32.mrf.mxu0
        %3344 = vmatprep.mubr.f32.mxu0 0.0
        %3345 = vmatmul.mubr.f32.gmra.mxu0 %v3270
        %v3346 = vpop.f32.mrf.mxu0
        %v3347 = vadd.f32 0.0, %v3346
        %v3348 = vpop.f32.mrf.mxu0
        %3349 = vmatprep.mubr.f32.mxu0 0.0
        %3350 = vmatmul.mubr.f32.gmra.mxu0 %v3273
        %v3351 = vpop.f32.mrf.mxu0
        %v3352 = vadd.f32 0.0, %v3351
        %v3353 = vpop.f32.mrf.mxu0
        %3354 = vdwg.mxu0
        %3358 = vrot.lane.b32.xlu0 %v3342, 24
        %v3359 = vpop.permute.xlu0 %3358
        %3360 = vrot.lane.b32.xlu0 %v3347, 24
        %v3361 = vpop.permute.xlu0 %3360
        %3362 = vrot.lane.b32.xlu0 %v3352, 24
        %v3363 = vpop.permute.xlu0 %3362
        %3367 = vst.msk [vmem:[#allocation2] sm:$0xff] %vm1810, %v3359
        %3368 = vst.msk [vmem:[#allocation2 + $0x8] sm:$0xff] %vm1810, %v3361
        %3369 = vst.msk [vmem:[#allocation2 + $0x10] sm:$0xff] %vm1810, %v3363
        %v3370 = vld [vmem:[#allocation2] sm:$0xff]
        %v3371 = vld [vmem:[#allocation2 + $0x8] sm:$0xff]
        %v3372 = vld [vmem:[#allocation2 + $0x10] sm:$0xff]
        %s3373 = scalar_lea.vmem %s8, 32
        %v3374 = vld [vmem:[%s3373] sm:$0xff]
        %v3375 = vld [vmem:[%s3373 + $0x8] sm:$0xff]
        %v3376 = vld [vmem:[%s3373 + $0x10] sm:$0xff]
        %v3377 = vld [vmem:[%s3373 + $0x18] sm:$0xff]
        %s3378 = scalar_lea.vmem %s9, 1
        %v3379 = vld [vmem:[%s3378] sm:$0x1]
        %v3381 = vlaneseq
        %v3382 = vshrl.u32 %v3381, 7
        %v3383 = vsub.s32 0, %v3382
        %v3384 = vrot.slane %v3379, %v3383
        %v3387 = vsel %vm579, %v3370, 0
        %v3390 = vsel %vm579, %v3371, 0
        %v3393 = vsel %vm579, %v3372, 0
        %3395 = vmatprep.subr.mxu0 0.0
        %3396 = vmatpush1.msra.mxu0 0.0
        %3397 = vmatprep.subr.mxu0 0.0
        %3398 = vmatpush1.msra.mxu0 0.0
        %3399 = vmatprep.subr.mxu0 0.0
        %3400 = vmatpush1.msra.mxu0 0.0
        %3401 = vmatprep.subr.mxu0 0.0
        %3402 = vmatpush1.msra.mxu0 0.0
        %3403 = vmatprep.subr.mxu0 0.0
        %3404 = vmatpush1.msra.mxu0 0.0
        %3405 = vmatprep.subr.mxu0 0.0
        %3406 = vmatpush1.msra.mxu0 0.0
        %3407 = vmatprep.subr.mxu0 0.0
        %3408 = vmatpush1.msra.mxu0 0.0
        %3409 = vmatprep.subr.mxu0 0.0
        %3410 = vmatpush1.msra.mxu0 0.0
        %3411 = vmatprep.subr.mxu0 0.0
        %3412 = vmatpush1.msra.mxu0 0.0
        %3413 = vmatprep.subr.mxu0 0.0
        %3414 = vmatpush1.msra.mxu0 0.0
        %3415 = vmatprep.subr.mxu0 0.0
        %3416 = vmatpush1.msra.mxu0 0.0
        %3417 = vmatprep.subr.mxu0 0.0
        %3418 = vmatpush1.msra.mxu0 0.0
        %3419 = vmatprep.subr.mxu0 0.0
        %3420 = vmatpush1.msra.mxu0 %v3377
        %3421 = vmatprep.subr.mxu0 0.0
        %3422 = vmatpush1.msra.mxu0 %v3376
        %3423 = vmatprep.subr.mxu0 0.0
        %3424 = vmatpush1.msra.mxu0 %v3375
        %3425 = vmatprep.subr.mxu0 0.0
        %3426 = vmatpush1.msra.mxu0 %v3374
        %3427 = vmatprep.subr.mxu0 0.0
        %3428 = vmatpush2.msra.mxu0 0.0
        %3429 = vmatprep.subr.mxu0 0.0
        %3430 = vmatpush2.msra.mxu0 0.0
        %3431 = vmatprep.subr.mxu0 0.0
        %3432 = vmatpush2.msra.mxu0 0.0
        %3433 = vmatprep.subr.mxu0 0.0
        %3434 = vmatpush2.msra.mxu0 0.0
        %3435 = vmatprep.subr.mxu0 0.0
        %3436 = vmatpush2.msra.mxu0 0.0
        %3437 = vmatprep.subr.mxu0 0.0
        %3438 = vmatpush2.msra.mxu0 0.0
        %3439 = vmatprep.subr.mxu0 0.0
        %3440 = vmatpush2.msra.mxu0 0.0
        %3441 = vmatprep.subr.mxu0 0.0
        %3442 = vmatpush2.msra.mxu0 0.0
        %3443 = vmatprep.subr.mxu0 0.0
        %3444 = vmatpush2.msra.mxu0 0.0
        %3445 = vmatprep.subr.mxu0 0.0
        %3446 = vmatpush2.msra.mxu0 0.0
        %3447 = vmatprep.subr.mxu0 0.0
        %3448 = vmatpush2.msra.mxu0 0.0
        %3449 = vmatprep.subr.mxu0 0.0
        %3450 = vmatpush2.msra.mxu0 0.0
        %3451 = vmatprep.subr.mxu0 0.0
        %3452 = vmatpush2.msra.mxu0 0.0
        %3453 = vmatprep.subr.mxu0 0.0
        %3454 = vmatpush2.msra.mxu0 0.0
        %3455 = vmatprep.subr.mxu0 0.0
        %3456 = vmatpush2.msra.mxu0 0.0
        %3457 = vmatprep.subr.mxu0 0.0
        %3458 = vmatpush2.msra.mxu0 0.0
        %3459 = vmatprep.mubr.f32.mxu0 0.0
        %3460 = vmatmul.mubr.f32.gmra.mxu0 %v3387
        %v3461 = vpop.f32.mrf.mxu0
        %v3462 = vadd.f32 %v3384, %v3461
        %v3463 = vpop.f32.mrf.mxu0
        %3464 = vmatprep.mubr.f32.mxu0 0.0
        %3465 = vmatmul.mubr.f32.gmra.mxu0 %v3390
        %v3466 = vpop.f32.mrf.mxu0
        %v3467 = vadd.f32 %v3384, %v3466
        %v3468 = vpop.f32.mrf.mxu0
        %3469 = vmatprep.mubr.f32.mxu0 0.0
        %3470 = vmatmul.mubr.f32.gmra.mxu0 %v3393
        %v3471 = vpop.f32.mrf.mxu0
        %v3472 = vadd.f32 %v3384, %v3471
        %v3473 = vpop.f32.mrf.mxu0
        %3474 = vdwg.mxu0
        %v3475 = vadd.f32 %v2201, %v3462
        %v3476 = vadd.f32 %v2202, %v3467
        %v3477 = vadd.f32 %v2203, %v3472
        %v3478 = vsel %vm579, %v3475, 0.0
        %3479 = vadd.xlane.f32.xlu0 %v3478
        %v3480 = vpop.xlane.xlu0 %3479
        %v3481 = vsel %vm579, %v3476, 0.0
        %3482 = vadd.xlane.f32.xlu0 %v3481
        %v3483 = vpop.xlane.xlu0 %3482
        %v3484 = vsel %vm579, %v3477, 0.0
        %3485 = vadd.xlane.f32.xlu0 %v3484
        %v3486 = vpop.xlane.xlu0 %3485
        %v3487 = vmul.f32 %v3480, %v597
        %v3488 = vmul.f32 %v3483, %v597
        %v3489 = vmul.f32 %v3486, %v597
        %v3490 = vsub.f32 %v3475, %v3487
        %v3491 = vsub.f32 %v3476, %v3488
        %v3492 = vsub.f32 %v3477, %v3489
        %v3493 = vmul.f32 %v3490, %v3490
        %v3494 = vmul.f32 %v3491, %v3491
        %v3495 = vmul.f32 %v3492, %v3492
        %v3496 = vsel %vm579, %v3493, 0.0
        %3497 = vadd.xlane.f32.xlu0 %v3496
        %v3498 = vpop.xlane.xlu0 %3497
        %v3499 = vsel %vm579, %v3494, 0.0
        %3500 = vadd.xlane.f32.xlu0 %v3499
        %v3501 = vpop.xlane.xlu0 %3500
        %v3502 = vsel %vm579, %v3495, 0.0
        %3503 = vadd.xlane.f32.xlu0 %v3502
        %v3504 = vpop.xlane.xlu0 %3503
        %v3505 = vmul.f32 %v3498, %v597
        %v3506 = vmul.f32 %v3501, %v597
        %v3507 = vmul.f32 %v3504, %v597
        %v3508 = vadd.f32 %v3505, 1e-05
        %v3509 = vadd.f32 %v3506, 1e-05
        %v3510 = vadd.f32 %v3507, 1e-05
        %v3511 = vrsqrt.pop %v3508
        %v3512 = vrsqrt.pop %v3509
        %v3513 = vrsqrt.pop %v3510
        %v3514 = vmul.f32 %v3490, %v3511
        %v3515 = vmul.f32 %v3491, %v3512
        %v3516 = vmul.f32 %v3492, %v3513
        %v3517 = vlaneseq
        %v3518 = vshrl.u32 %v3517, 7
        %v3519 = vsub.s32 2, %v3518
        %v3520 = vrot.slane %v2205, %v3519
        %v3521 = vmul.f32 %v3514, %v3520
        %v3522 = vmul.f32 %v3515, %v3520
        %v3523 = vmul.f32 %v3516, %v3520
        %v3524 = vlaneseq
        %v3525 = vshrl.u32 %v3524, 7
        %v3526 = vsub.s32 3, %v3525
        %v3527 = vrot.slane %v2205, %v3526
        %v3528 = vadd.f32 %v3521, %v3527
        %v3529 = vadd.f32 %v3522, %v3527
        %v3530 = vadd.f32 %v3523, %v3527
        %s3531 = scalar_lea.vmem %s10, 32
        %v3532 = vld [vmem:[%s3531] sm:$0xff]
        %v3533 = vld [vmem:[%s3531 + $0x8] sm:$0xff]
        %v3534 = vld [vmem:[%s3531 + $0x10] sm:$0xff]
        %v3535 = vld [vmem:[%s3531 + $0x18] sm:$0xff]
        %s3536 = scalar_lea.vmem %s11, 1
        %v3537 = vld [vmem:[%s3536] sm:$0x1]
        %v3539 = vlaneseq
        %v3540 = vshrl.u32 %v3539, 7
        %v3541 = vsub.s32 0, %v3540
        %v3542 = vrot.slane %v3537, %v3541
        %v3545 = vsel %vm579, %v3528, 0
        %v3548 = vsel %vm579, %v3529, 0
        %v3551 = vsel %vm579, %v3530, 0
        %3553 = vmatprep.subr.mxu0 0.0
        %3554 = vmatpush1.msra.mxu0 0.0
        %3555 = vmatprep.subr.mxu0 0.0
        %3556 = vmatpush1.msra.mxu0 0.0
        %3557 = vmatprep.subr.mxu0 0.0
        %3558 = vmatpush1.msra.mxu0 0.0
        %3559 = vmatprep.subr.mxu0 0.0
        %3560 = vmatpush1.msra.mxu0 0.0
        %3561 = vmatprep.subr.mxu0 0.0
        %3562 = vmatpush1.msra.mxu0 0.0
        %3563 = vmatprep.subr.mxu0 0.0
        %3564 = vmatpush1.msra.mxu0 0.0
        %3565 = vmatprep.subr.mxu0 0.0
        %3566 = vmatpush1.msra.mxu0 0.0
        %3567 = vmatprep.subr.mxu0 0.0
        %3568 = vmatpush1.msra.mxu0 0.0
        %3569 = vmatprep.subr.mxu0 0.0
        %3570 = vmatpush1.msra.mxu0 0.0
        %3571 = vmatprep.subr.mxu0 0.0
        %3572 = vmatpush1.msra.mxu0 0.0
        %3573 = vmatprep.subr.mxu0 0.0
        %3574 = vmatpush1.msra.mxu0 0.0
        %3575 = vmatprep.subr.mxu0 0.0
        %3576 = vmatpush1.msra.mxu0 0.0
        %3577 = vmatprep.subr.mxu0 0.0
        %3578 = vmatpush1.msra.mxu0 %v3535
        %3579 = vmatprep.subr.mxu0 0.0
        %3580 = vmatpush1.msra.mxu0 %v3534
        %3581 = vmatprep.subr.mxu0 0.0
        %3582 = vmatpush1.msra.mxu0 %v3533
        %3583 = vmatprep.subr.mxu0 0.0
        %3584 = vmatpush1.msra.mxu0 %v3532
        %3585 = vmatprep.subr.mxu0 0.0
        %3586 = vmatpush2.msra.mxu0 0.0
        %3587 = vmatprep.subr.mxu0 0.0
        %3588 = vmatpush2.msra.mxu0 0.0
        %3589 = vmatprep.subr.mxu0 0.0
        %3590 = vmatpush2.msra.mxu0 0.0
        %3591 = vmatprep.subr.mxu0 0.0
        %3592 = vmatpush2.msra.mxu0 0.0
        %3593 = vmatprep.subr.mxu0 0.0
        %3594 = vmatpush2.msra.mxu0 0.0
        %3595 = vmatprep.subr.mxu0 0.0
        %3596 = vmatpush2.msra.mxu0 0.0
        %3597 = vmatprep.subr.mxu0 0.0
        %3598 = vmatpush2.msra.mxu0 0.0
        %3599 = vmatprep.subr.mxu0 0.0
        %3600 = vmatpush2.msra.mxu0 0.0
        %3601 = vmatprep.subr.mxu0 0.0
        %3602 = vmatpush2.msra.mxu0 0.0
        %3603 = vmatprep.subr.mxu0 0.0
        %3604 = vmatpush2.msra.mxu0 0.0
        %3605 = vmatprep.subr.mxu0 0.0
        %3606 = vmatpush2.msra.mxu0 0.0
        %3607 = vmatprep.subr.mxu0 0.0
        %3608 = vmatpush2.msra.mxu0 0.0
        %3609 = vmatprep.subr.mxu0 0.0
        %3610 = vmatpush2.msra.mxu0 0.0
        %3611 = vmatprep.subr.mxu0 0.0
        %3612 = vmatpush2.msra.mxu0 0.0
        %3613 = vmatprep.subr.mxu0 0.0
        %3614 = vmatpush2.msra.mxu0 0.0
        %3615 = vmatprep.subr.mxu0 0.0
        %3616 = vmatpush2.msra.mxu0 0.0
        %3617 = vmatprep.mubr.f32.mxu0 0.0
        %3618 = vmatmul.mubr.f32.gmra.mxu0 %v3545
        %v3619 = vpop.f32.mrf.mxu0
        %v3620 = vadd.f32 %v3542, %v3619
        %v3621 = vpop.f32.mrf.mxu0
        %3622 = vmatprep.mubr.f32.mxu0 0.0
        %3623 = vmatmul.mubr.f32.gmra.mxu0 %v3548
        %v3624 = vpop.f32.mrf.mxu0
        %v3625 = vadd.f32 %v3542, %v3624
        %v3626 = vpop.f32.mrf.mxu0
        %3627 = vmatprep.mubr.f32.mxu0 0.0
        %3628 = vmatmul.mubr.f32.gmra.mxu0 %v3551
        %v3629 = vpop.f32.mrf.mxu0
        %v3630 = vadd.f32 %v3542, %v3629
        %v3631 = vpop.f32.mrf.mxu0
        %3632 = vdwg.mxu0
        %v3633 = vmul.f32 %v3620, 1.702
        %v3634 = vmul.f32 %v3625, 1.702
        %v3635 = vmul.f32 %v3630, 1.702
        %v3636 = vxor.u32 %v3633, 2147483648
        %v3637 = vxor.u32 %v3634, 2147483648
        %v3638 = vxor.u32 %v3635, 2147483648
        %v3639 = vmul.f32 %v3636, 1.442695
        %v3640 = vpow.pop %v3639
        %v3641 = vmul.f32 %v3637, 1.442695
        %v3642 = vpow.pop %v3641
        %v3643 = vmul.f32 %v3638, 1.442695
        %v3644 = vpow.pop %v3643
        %v3645 = vadd.f32 %v3640, 1.0
        %v3646 = vadd.f32 %v3642, 1.0
        %v3647 = vadd.f32 %v3644, 1.0
        %v3648 = vrcp.pop %v3645
        %v3649 = vmul.f32 1.0, %v3648
        %v3650 = vrcp.pop %v3646
        %v3651 = vmul.f32 1.0, %v3650
        %v3652 = vrcp.pop %v3647
        %v3653 = vmul.f32 1.0, %v3652
        %v3654 = vmul.f32 %v3620, %v3649
        %v3655 = vmul.f32 %v3625, %v3651
        %v3656 = vmul.f32 %v3630, %v3653
        %s3657 = scalar_lea.vmem %s12, 64
        %v3658 = vld [vmem:[%s3657] sm:$0xff]
        %v3659 = vld [vmem:[%s3657 + $0x8] sm:$0xff]
        %v3660 = vld [vmem:[%s3657 + $0x10] sm:$0xff]
        %v3661 = vld [vmem:[%s3657 + $0x18] sm:$0xff]
        %v3662 = vld [vmem:[%s3657 + $0x20] sm:$0xff]
        %v3663 = vld [vmem:[%s3657 + $0x28] sm:$0xff]
        %v3664 = vld [vmem:[%s3657 + $0x30] sm:$0xff]
        %v3665 = vld [vmem:[%s3657 + $0x38] sm:$0xff]
        %s3666 = scalar_lea.vmem %s13, 1
        %v3667 = vld [vmem:[%s3666] sm:$0x1]
        %v3669 = vlaneseq
        %v3670 = vshrl.u32 %v3669, 7
        %v3671 = vsub.s32 0, %v3670
        %v3672 = vrot.slane %v3667, %v3671
        %v3675 = vsel %vm493, %v3654, 0
        %v3678 = vsel %vm493, %v3655, 0
        %v3681 = vsel %vm493, %v3656, 0
        %3683 = vmatprep.subr.mxu0 0.0
        %3684 = vmatpush1.msra.mxu0 0.0
        %3685 = vmatprep.subr.mxu0 0.0
        %3686 = vmatpush1.msra.mxu0 0.0
        %3687 = vmatprep.subr.mxu0 0.0
        %3688 = vmatpush1.msra.mxu0 0.0
        %3689 = vmatprep.subr.mxu0 0.0
        %3690 = vmatpush1.msra.mxu0 0.0
        %3691 = vmatprep.subr.mxu0 0.0
        %3692 = vmatpush1.msra.mxu0 0.0
        %3693 = vmatprep.subr.mxu0 0.0
        %3694 = vmatpush1.msra.mxu0 0.0
        %3695 = vmatprep.subr.mxu0 0.0
        %3696 = vmatpush1.msra.mxu0 0.0
        %3697 = vmatprep.subr.mxu0 0.0
        %3698 = vmatpush1.msra.mxu0 0.0
        %3699 = vmatprep.subr.mxu0 0.0
        %3700 = vmatpush1.msra.mxu0 %v3665
        %3701 = vmatprep.subr.mxu0 0.0
        %3702 = vmatpush1.msra.mxu0 %v3664
        %3703 = vmatprep.subr.mxu0 0.0
        %3704 = vmatpush1.msra.mxu0 %v3663
        %3705 = vmatprep.subr.mxu0 0.0
        %3706 = vmatpush1.msra.mxu0 %v3662
        %3707 = vmatprep.subr.mxu0 0.0
        %3708 = vmatpush1.msra.mxu0 %v3661
        %3709 = vmatprep.subr.mxu0 0.0
        %3710 = vmatpush1.msra.mxu0 %v3660
        %3711 = vmatprep.subr.mxu0 0.0
        %3712 = vmatpush1.msra.mxu0 %v3659
        %3713 = vmatprep.subr.mxu0 0.0
        %3714 = vmatpush1.msra.mxu0 %v3658
        %3715 = vmatprep.subr.mxu0 0.0
        %3716 = vmatpush2.msra.mxu0 0.0
        %3717 = vmatprep.subr.mxu0 0.0
        %3718 = vmatpush2.msra.mxu0 0.0
        %3719 = vmatprep.subr.mxu0 0.0
        %3720 = vmatpush2.msra.mxu0 0.0
        %3721 = vmatprep.subr.mxu0 0.0
        %3722 = vmatpush2.msra.mxu0 0.0
        %3723 = vmatprep.subr.mxu0 0.0
        %3724 = vmatpush2.msra.mxu0 0.0
        %3725 = vmatprep.subr.mxu0 0.0
        %3726 = vmatpush2.msra.mxu0 0.0
        %3727 = vmatprep.subr.mxu0 0.0
        %3728 = vmatpush2.msra.mxu0 0.0
        %3729 = vmatprep.subr.mxu0 0.0
        %3730 = vmatpush2.msra.mxu0 0.0
        %3731 = vmatprep.subr.mxu0 0.0
        %3732 = vmatpush2.msra.mxu0 0.0
        %3733 = vmatprep.subr.mxu0 0.0
        %3734 = vmatpush2.msra.mxu0 0.0
        %3735 = vmatprep.subr.mxu0 0.0
        %3736 = vmatpush2.msra.mxu0 0.0
        %3737 = vmatprep.subr.mxu0 0.0
        %3738 = vmatpush2.msra.mxu0 0.0
        %3739 = vmatprep.subr.mxu0 0.0
        %3740 = vmatpush2.msra.mxu0 0.0
        %3741 = vmatprep.subr.mxu0 0.0
        %3742 = vmatpush2.msra.mxu0 0.0
        %3743 = vmatprep.subr.mxu0 0.0
        %3744 = vmatpush2.msra.mxu0 0.0
        %3745 = vmatprep.subr.mxu0 0.0
        %3746 = vmatpush2.msra.mxu0 0.0
        %3747 = vmatprep.mubr.f32.mxu0 0.0
        %3748 = vmatmul.mubr.f32.gmra.mxu0 %v3675
        %v3749 = vpop.f32.mrf.mxu0
        %v3750 = vpop.f32.mrf.mxu0
        %3751 = vmatprep.mubr.f32.mxu0 0.0
        %3752 = vmatmul.mubr.f32.gmra.mxu0 %v3678
        %v3753 = vpop.f32.mrf.mxu0
        %v3754 = vpop.f32.mrf.mxu0
        %3755 = vmatprep.mubr.f32.mxu0 0.0
        %3756 = vmatmul.mubr.f32.gmra.mxu0 %v3681
        %v3757 = vpop.f32.mrf.mxu0
        %v3758 = vadd.f32 %v3672, %v3757
        %v3759 = vpop.f32.mrf.mxu0
        %3760 = vdwg.mxu0
        %v3761 = vadd.f32 %v3477, %v3758
        %vm3762 = vcmask 253952
        %v3763 = vsel %vm3762, %v3761, 0.0
        %3764 = vadd.xlane.f32.xlu0 %v3763
        %v3765 = vpop.xlane.xlu0 %3764
        %v3766 = vmul.f32 %v3765, %v597
        %v3767 = vsub.f32 %v3761, %v3766
        %v3768 = vmul.f32 %v3767, %v3767
        %v3769 = vsel %vm3762, %v3768, 0.0
        %3770 = vadd.xlane.f32.xlu0 %v3769
        %v3771 = vpop.xlane.xlu0 %3770
        %v3772 = vmul.f32 %v3771, %v597
        %v3773 = vadd.f32 %v3772, 1e-05
        %v3774 = vrsqrt.pop %v3773
        %v3775 = vmul.f32 %v3767, %v3774
        %v3777 = vrot.slane %v587, 2
        %v3779 = vmul.f32 %v3775, %v3777
        %v3780 = vrot.slane %v587, 3
        %v3782 = vadd.f32 %v3779, %v3780
        %v3783 = vld [vmem:[%s4] sm:$0xff]
        %v3784 = vld [vmem:[%s4 + $0x8] sm:$0xff]
        %v3785 = vld [vmem:[%s4 + $0x10] sm:$0xff]
        %v3786 = vld [vmem:[%s4 + $0x18] sm:$0xff]
        %v3788 = vsel %vm579, %v3782, 0
        %3790 = vmatprep.subr.mxu0 0.0
        %3791 = vmatpush1.msra.mxu0 0.0
        %3792 = vmatprep.subr.mxu0 0.0
        %3793 = vmatpush1.msra.mxu0 0.0
        %3794 = vmatprep.subr.mxu0 0.0
        %3795 = vmatpush1.msra.mxu0 0.0
        %3796 = vmatprep.subr.mxu0 0.0
        %3797 = vmatpush1.msra.mxu0 0.0
        %3798 = vmatprep.subr.mxu0 0.0
        %3799 = vmatpush1.msra.mxu0 0.0
        %3800 = vmatprep.subr.mxu0 0.0
        %3801 = vmatpush1.msra.mxu0 0.0
        %3802 = vmatprep.subr.mxu0 0.0
        %3803 = vmatpush1.msra.mxu0 0.0
        %3804 = vmatprep.subr.mxu0 0.0
        %3805 = vmatpush1.msra.mxu0 0.0
        %3806 = vmatprep.subr.mxu0 0.0
        %3807 = vmatpush1.msra.mxu0 0.0
        %3808 = vmatprep.subr.mxu0 0.0
        %3809 = vmatpush1.msra.mxu0 0.0
        %3810 = vmatprep.subr.mxu0 0.0
        %3811 = vmatpush1.msra.mxu0 0.0
        %3812 = vmatprep.subr.mxu0 0.0
        %3813 = vmatpush1.msra.mxu0 0.0
        %3814 = vmatprep.subr.mxu0 0.0
        %3815 = vmatpush1.msra.mxu0 %v3786
        %3816 = vmatprep.subr.mxu0 0.0
        %3817 = vmatpush1.msra.mxu0 %v3785
        %3818 = vmatprep.subr.mxu0 0.0
        %3819 = vmatpush1.msra.mxu0 %v3784
        %3820 = vmatprep.subr.mxu0 0.0
        %3821 = vmatpush1.msra.mxu0 %v3783
        %3822 = vmatprep.subr.mxu0 0.0
        %3823 = vmatpush2.msra.mxu0 0.0
        %3824 = vmatprep.subr.mxu0 0.0
        %3825 = vmatpush2.msra.mxu0 0.0
        %3826 = vmatprep.subr.mxu0 0.0
        %3827 = vmatpush2.msra.mxu0 0.0
        %3828 = vmatprep.subr.mxu0 0.0
        %3829 = vmatpush2.msra.mxu0 0.0
        %3830 = vmatprep.subr.mxu0 0.0
        %3831 = vmatpush2.msra.mxu0 0.0
        %3832 = vmatprep.subr.mxu0 0.0
        %3833 = vmatpush2.msra.mxu0 0.0
        %3834 = vmatprep.subr.mxu0 0.0
        %3835 = vmatpush2.msra.mxu0 0.0
        %3836 = vmatprep.subr.mxu0 0.0
        %3837 = vmatpush2.msra.mxu0 0.0
        %3838 = vmatprep.subr.mxu0 0.0
        %3839 = vmatpush2.msra.mxu0 0.0
        %3840 = vmatprep.subr.mxu0 0.0
        %3841 = vmatpush2.msra.mxu0 0.0
        %3842 = vmatprep.subr.mxu0 0.0
        %3843 = vmatpush2.msra.mxu0 0.0
        %3844 = vmatprep.subr.mxu0 0.0
        %3845 = vmatpush2.msra.mxu0 0.0
        %3846 = vmatprep.subr.mxu0 0.0
        %3847 = vmatpush2.msra.mxu0 0.0
        %3848 = vmatprep.subr.mxu0 0.0
        %3849 = vmatpush2.msra.mxu0 0.0
        %3850 = vmatprep.subr.mxu0 0.0
        %3851 = vmatpush2.msra.mxu0 0.0
        %3852 = vmatprep.subr.mxu0 0.0
        %3853 = vmatpush2.msra.mxu0 0.0
        %3854 = vmatprep.mubr.f32.mxu0 0.0
        %3855 = vmatmul.mubr.f32.gmra.mxu0 %v3788
        %v3856 = vpop.f32.mrf.mxu0
        %v3857 = vadd.f32 0.0, %v3856
        %v3858 = vpop.f32.mrf.mxu0
        %3859 = vdwg.mxu0
        %vm3860 = vcmask 122880
        %3861 = vst.msk [vmem:[%s459] sm:$0x1] %vm3860, %v3857
        %s3862 = sand.u32 %s335, 1
        %s3863 = scalar_lea.sflag [#allocation4], %s3862
        %s3864 = sand.u32 %s335, 1
        %s3865 = scalar_lea.vmem [#allocation3], %s3864
        // Predicated region
        $region77: #{clip_image_features.1} parent=75 // pred_check
          %p3866 = pneg %p345
        $region78: #{clip_image_features.1} parent=75 // pred_check_branch
          %3868 = sbr.rel (%p3866) target = $region80
        $region79: #{clip_image_features.1} parent=75 // pred_region
          %s3870 = ssub.s32 16, 16
          %3871 = vsyncadd %s3863, %s3870
          %s3872 = smul.addr %s28, 16
          %s3873 = scalar_lea.hbm %s14, %s3872
          %s3875 = sshll.u32 %s3865, 4
          %s3876 = int_to_ptr.vmem [resolvable:$true] %s3875
          %3878 = dma.vmem_to_hbm [thread:$0]  %s3876, 16, %s3873, %s3863
        $region80: #{clip_image_features.1} parent=75 // pred_fallthru
          _
      $region76: #{clip_image_features.1} parent=5 // pred_fallthru
        _
      %p3879 = scmp.le.s32.totalorder 2, %s23
      // Predicated region
      $region81: #{clip_image_features.1} parent=5 // pred_check
        %p3880 = pneg %p3879
      $region82: #{clip_image_features.1} parent=5 // pred_check_branch
        %3882 = sbr.rel (%p3880) target = $region84
      $region83: #{clip_image_features.1} parent=5 // pred_region
        %s3883 = ssub.s32 %s23, 2
        // Predicated region
        $region85: #{clip_image_features.1} parent=83 // pred_check
          %p3884 = pneg %p351
        $region86: #{clip_image_features.1} parent=83 // pred_check_branch
          %3886 = sbr.rel (%p3884) target = $region88
        $region87: #{clip_image_features.1} parent=83 // pred_region
          %s3887 = sand.u32 %s336, 1
          %s3888 = scalar_lea.sflag [#allocation4], %s3887
          %s3889 = sand.u32 %s336, 1
          %s3890 = scalar_lea.vmem [#allocation3], %s3889
          %3891 = dma.done %s3888, 16
        $region88: #{clip_image_features.1} parent=83 // pred_fallthru
          _
      $region84: #{clip_image_features.1} parent=5 // pred_fallthru
        _
    $region6: #{clip_image_features.1} parent=1 // loop_footer
      %s27 = sadd.s32 1, %s23
    $region7: #{clip_image_features.1} parent=1 // loop_footer_branch
      %22 = sbr.rel target = $region3
    $region8: #{clip_image_features.1} parent=1 // loop_exit
      _
    %3892 = vsyncpa [#allocation4], 1
    %s3893 = scalar_lea.sflag [#allocation4], 1
    %3894 = vsyncpa %s3893, 1

</llo_original>
